<compile_context>
chip_gen: v7x
topology: tpu7x:2x2x1
jax: 0.10.0
libtpu: 0.0.40
codegen_flags: <defaults>
</compile_context>

<pallas_src>
import jax
import jax.numpy as jnp
from jax.experimental import pallas as pl
from jax.experimental.pallas import tpu as pltpu


# --------------------------------------------------------------------------
# In-kernel building blocks (operate on values; everything stays in vregs/VMEM)
# --------------------------------------------------------------------------
def _lstm_stack(x2d, layer_params, T, B):
    """Multi-layer LSTM over a time-major flattened sequence.

    x2d          : (T*B, I) value, row t*B + b == (time t, batch b)
    layer_params : list of (wih_t (I,4H), whh_t (H,4H), bias (1,4H))
    Returns the final hidden state of the last layer only: (B, H_last).
    Gate ordering follows PyTorch: i, f, g, o.
    """
    n_layers = len(layer_params)
    xs = None          # per-step inputs for layers >= 1 (list of (B, H) values)
    h = None
    for li, (wih_t, whh_t, bias) in enumerate(layer_params):
        H = whh_t.shape[0]
        last = (li == n_layers - 1)
        h = jnp.zeros((B, H), jnp.float32)
        c = jnp.zeros((B, H), jnp.float32)
        if li == 0:
            # Hoisted input projection: one batched MXU matmul for the whole sequence.
            pre = jnp.dot(x2d, wih_t, preferred_element_type=jnp.float32) + bias
        new_xs = []
        for t in range(T):          # static unroll: full LLO scheduling visibility
            if li == 0:
                x_proj = pre[t * B:(t + 1) * B, :]
            else:
                # Depends only on layer li-1 outputs, so it is off the recurrent
                # critical path and overlaps with the h @ W_hh chain.
                x_proj = jnp.dot(xs[t], wih_t,
                                 preferred_element_type=jnp.float32) + bias
            gates = x_proj + jnp.dot(h, whh_t,
                                     preferred_element_type=jnp.float32)
            i_g = jax.nn.sigmoid(gates[:, 0 * H:1 * H])
            f_g = jax.nn.sigmoid(gates[:, 1 * H:2 * H])
            g_g = jnp.tanh(gates[:, 2 * H:3 * H])
            o_g = jax.nn.sigmoid(gates[:, 3 * H:4 * H])
            c = f_g * c + i_g * g_g
            h = o_g * jnp.tanh(c)
            if not last:
                new_xs.append(h)
        xs = new_xs
    return h


def _build_model_kernel(n_rnn1, n_rnn2, n_net3, n_head, T1, T2, B):
    """Single fused kernel for the whole model."""

    def kernel(*refs):
        it = iter(refs)
        x1 = next(it)[...]          # (T1*B, C1) time-major rows
        x2 = next(it)[...]          # (T2*B, C2)
        x3 = next(it)[...]          # (B, F3)

        rnn1_p = [(next(it)[...], next(it)[...], next(it)[...])
                  for _ in range(n_rnn1)]
        rnn2_p = [(next(it)[...], next(it)[...], next(it)[...])
                  for _ in range(n_rnn2)]
        net3_p = [(next(it)[...], next(it)[...]) for _ in range(n_net3)]
        w0a = next(it)[...]
        w0b = next(it)[...]
        w0c = next(it)[...]
        b0 = next(it)[...]
        head_rest_p = [(next(it)[...], next(it)[...])
                       for _ in range(n_head - 1)]
        out_ref = next(it)

        # TODO(synk): on v7x the two independent LSTM stacks could run on the two
        # TensorCores (pl.core_map over a tensorcore mesh); here they run
        # sequentially on a single TC.
        # TODO(synk): on v6e/v7x the matmul weights could be cast to bf16 (keeping
        # f32 accumulation / gate math); kept f32 here since v5e's VPU/EUP lack bf16.
        y1 = _lstm_stack(x1, rnn1_p, T1, B)     # (B, H1) — only the last hidden
        y2 = _lstm_stack(x2, rnn2_p, T2, B)     # (B, H2)

        y3 = x3
        for w_t, b in net3_p:                   # net3: Linear + ReLU every layer
            y3 = jnp.maximum(
                jnp.dot(y3, w_t, preferred_element_type=jnp.float32) + b, 0.0)

        # Head layer 0 with its weight pre-split by input source: replaces
        # concat([y1, y2, y3], axis=1) with three small matmuls (no lane relayout).
        out = (jnp.dot(y1, w0a, preferred_element_type=jnp.float32)
               + jnp.dot(y2, w0b, preferred_element_type=jnp.float32)
               + jnp.dot(y3, w0c, preferred_element_type=jnp.float32)
               + b0)
        if n_head > 1:                          # ReLU on all but the last head layer
            out = jnp.maximum(out, 0.0)
        for j, (w_t, b) in enumerate(head_rest_p):
            out = jnp.dot(out, w_t, preferred_element_type=jnp.float32) + b
            if j < n_head - 2:
                out = jnp.maximum(out, 0.0)

        out_ref[...] = out.astype(out_ref.dtype)

    return kernel


# --------------------------------------------------------------------------
# One-time parameter preparation (pre-transpose weights, fuse LSTM biases,
# split head layer-0 weight by input source) — done at init, not per forward.
# --------------------------------------------------------------------------
def prepare_kernel_params(params):
    prep = {"rnn1": [], "rnn2": [], "net3": []}
    for name in ("rnn1", "rnn2"):
        for (w_ih, w_hh, b_ih, b_hh) in params[name]:
            prep[name].append((
                jnp.transpose(w_ih),               # (I, 4H)
                jnp.transpose(w_hh),               # (H, 4H)
                (b_ih + b_hh).reshape(1, -1),      # (1, 4H)
            ))
    for (w, b) in params["net3"]:
        prep["net3"].append((jnp.transpose(w), b.reshape(1, -1)))

    H1 = params["rnn1"][-1][1].shape[1]            # w_hh: (4H, H)
    H2 = params["rnn2"][-1][1].shape[1]
    w0, b0 = params["head"][0]
    w0_t = jnp.transpose(w0)                       # (H1+H2+F3', F_out)
    prep["head0"] = (w0_t[:H1], w0_t[H1:H1 + H2], w0_t[H1 + H2:],
                     b0.reshape(1, -1))
    prep["head_rest"] = [(jnp.transpose(w), b.reshape(1, -1))
                         for (w, b) in params["head"][1:]]
    return prep


# --------------------------------------------------------------------------
# Model forward: ONE pallas_call for the whole model
# --------------------------------------------------------------------------
@jax.jit
def lstm_model_forward(prep, x1, x2, x3):
    B, C1, T1 = x1.shape
    _, C2, T2 = x2.shape
    # (B, C, T) -> time-major rows (T*B, C): per-layer input projection becomes one
    # batched MXU matmul; the kernel then only needs static row slices.
    x1_2d = jnp.transpose(x1, (2, 0, 1)).reshape(T1 * B, C1)
    x2_2d = jnp.transpose(x2, (2, 0, 1)).reshape(T2 * B, C2)

    n1, n2, n3 = len(prep["rnn1"]), len(prep["rnn2"]), len(prep["net3"])
    n_head = 1 + len(prep["head_rest"])
    if prep["head_rest"]:
        out_dim = prep["head_rest"][-1][0].shape[1]
    else:
        out_dim = prep["head0"][0].shape[1]

    flat = [x1_2d, x2_2d, x3]
    for name in ("rnn1", "rnn2", "net3"):
        for layer in prep[name]:
            flat.extend(layer)
    flat.extend(prep["head0"])
    for layer in prep["head_rest"]:
        flat.extend(layer)

    kernel = _build_model_kernel(n1, n2, n3, n_head, T1, T2, B)
    return pl.pallas_call(
        kernel,
        out_shape=jax.ShapeDtypeStruct((B, out_dim), jnp.float32),
        # Inputs + all weights + activations are a few hundred KB — trivially
        # VMEM-resident on v5e/v6e (128 MiB) and v7x (64 MiB).
        compiler_params=pltpu.CompilerParams(vmem_limit_bytes=32 * 1024 * 1024),
    )(*flat)


# --------------------------------------------------------------------------
# Parameter init (deterministic, PyTorch-style uniform ranges)
# --------------------------------------------------------------------------
def init_lstm_params(key, input_size, hidden_size, num_layers):
    params = []
    k = 1.0 / jnp.sqrt(hidden_size)
    in_sz = input_size
    for _ in range(num_layers):
        key, k1, k2, k3, k4 = jax.random.split(key, 5)
        params.append((
            jax.random.uniform(k1, (4 * hidden_size, in_sz), jnp.float32, -k, k),
            jax.random.uniform(k2, (4 * hidden_size, hidden_size), jnp.float32, -k, k),
            jax.random.uniform(k3, (4 * hidden_size,), jnp.float32, -k, k),
            jax.random.uniform(k4, (4 * hidden_size,), jnp.float32, -k, k),
        ))
        in_sz = hidden_size
    return params, key


def init_fc_params(key, in_features, layer_sizes):
    params = []
    fan_in = in_features
    for out_features in layer_sizes:
        key, k1, k2 = jax.random.split(key, 3)
        bound = 1.0 / jnp.sqrt(fan_in)
        params.append((
            jax.random.uniform(k1, (out_features, fan_in), jnp.float32, -bound, bound),
            jax.random.uniform(k2, (out_features,), jnp.float32, -bound, bound),
        ))
        fan_in = out_features
    return params, key


# --------------------------------------------------------------------------
# Pure-JAX reference (for correctness check)
# --------------------------------------------------------------------------
def lstm_layer_ref(x_tbi, w_ih, w_hh, b_ih, b_hh):
    H = w_hh.shape[1]
    B = x_tbi.shape[1]

    def step(carry, x_t):
        h, c = carry
        gates = x_t @ w_ih.T + b_ih + h @ w_hh.T + b_hh
        i, f, g, o = jnp.split(gates, 4, axis=-1)
        i = jax.nn.sigmoid(i)
        f = jax.nn.sigmoid(f)
        g = jnp.tanh(g)
        o = jax.nn.sigmoid(o)
        c = f * c + i * g
        h = o * jnp.tanh(c)
        return (h, c), h

    init = (jnp.zeros((B, H), jnp.float32), jnp.zeros((B, H), jnp.float32))
    _, ys = jax.lax.scan(step, init, x_tbi)
    return ys


def lstm_model_ref(params, x1, x2, x3):
    h = jnp.transpose(x1, (2, 0, 1))
    for layer_p in params["rnn1"]:
        h = lstm_layer_ref(h, *layer_p)
    y1_last = h[-1]
    h = jnp.transpose(x2, (2, 0, 1))
    for layer_p in params["rnn2"]:
        h = lstm_layer_ref(h, *layer_p)
    y2_last = h[-1]
    y3 = x3
    for (w, b) in params["net3"]:
        y3 = jnp.maximum(y3 @ w.T + b, 0.0)
    out = jnp.concatenate([y1_last, y2_last, y3], axis=1)
    n_head = len(params["head"])
    for i, (w, b) in enumerate(params["head"]):
        out = out @ w.T + b
        if i < n_head - 1:
            out = jnp.maximum(out, 0.0)
    return out


# --------------------------------------------------------------------------
if __name__ == "__main__":
    # Module hyper-parameters (small, consistent with the PyTorch __init__)
    B = 2
    input_shape1, seq1, hidden1, num_layers1 = (4,), 8, 32, 1
    input_shape2, seq2, hidden2, num_layers2 = (6,), 10, 16, 2
    input_shape3 = (12,)
    layers = [32, 16]
    layers_head = [64, 1]
    # TODO(synk): bidirectional=True variant not implemented (module default False used).

    key = jax.random.PRNGKey(0)
    rnn1_p, key = init_lstm_params(key, input_shape1[0], hidden1, num_layers1)
    rnn2_p, key = init_lstm_params(key, input_shape2[0], hidden2, num_layers2)
    net3_p, key = init_fc_params(key, input_shape3[0], layers)
    fc_in = hidden1 + hidden2 + layers[-1]
    head_p, key = init_fc_params(key, fc_in, layers_head)
    params = {"rnn1": rnn1_p, "rnn2": rnn2_p, "net3": net3_p, "head": head_p}
    prep = prepare_kernel_params(params)   # one-time weight layout conversion

    key, kx1, kx2, kx3 = jax.random.split(key, 4)
    x1 = jax.random.normal(kx1, (B, input_shape1[0], seq1), jnp.float32)
    x2 = jax.random.normal(kx2, (B, input_shape2[0], seq2), jnp.float32)
    x3 = jax.random.normal(kx3, (B, input_shape3[0]), jnp.float32)

    out = jax.block_until_ready(lstm_model_forward(prep, x1, x2, x3))
    ref = jax.block_until_ready(lstm_model_ref(params, x1, x2, x3))
    assert out.shape == (B, layers_head[-1]), out.shape
    assert jnp.allclose(out, ref, atol=1e-3, rtol=1e-3), (out, ref)

    print("KERNEL_OK")
</pallas_src>

<mosaic_0001>
module attributes {stable_mosaic.version = 11 : i64} {
  func.func @kernel(%arg0: memref<16x4xf32, #tpu.memory_space<vmem>>, %arg1: memref<20x6xf32, #tpu.memory_space<vmem>>, %arg2: memref<2x12xf32, #tpu.memory_space<vmem>>, %arg3: memref<4x128xf32, #tpu.memory_space<vmem>>, %arg4: memref<32x128xf32, #tpu.memory_space<vmem>>, %arg5: memref<1x128xf32, #tpu.memory_space<vmem>>, %arg6: memref<6x64xf32, #tpu.memory_space<vmem>>, %arg7: memref<16x64xf32, #tpu.memory_space<vmem>>, %arg8: memref<1x64xf32, #tpu.memory_space<vmem>>, %arg9: memref<16x64xf32, #tpu.memory_space<vmem>>, %arg10: memref<16x64xf32, #tpu.memory_space<vmem>>, %arg11: memref<1x64xf32, #tpu.memory_space<vmem>>, %arg12: memref<12x32xf32, #tpu.memory_space<vmem>>, %arg13: memref<1x32xf32, #tpu.memory_space<vmem>>, %arg14: memref<32x16xf32, #tpu.memory_space<vmem>>, %arg15: memref<1x16xf32, #tpu.memory_space<vmem>>, %arg16: memref<32x64xf32, #tpu.memory_space<vmem>>, %arg17: memref<16x64xf32, #tpu.memory_space<vmem>>, %arg18: memref<16x64xf32, #tpu.memory_space<vmem>>, %arg19: memref<1x64xf32, #tpu.memory_space<vmem>>, %arg20: memref<64x1xf32, #tpu.memory_space<vmem>>, %arg21: memref<1x1xf32, #tpu.memory_space<vmem>>, %arg22: memref<2x1xf32, #tpu.memory_space<vmem>>) attributes {dimension_semantics = [], scalar_prefetch = 0 : i64, scratch_operands = 0 : i64, tpu.core_type = #tpu.core_type<tc>} {
    %c0 = arith.constant 0 : index
    %c0_0 = arith.constant 0 : index
    %0 = vector.load %arg0[%c0, %c0_0] : memref<16x4xf32, #tpu.memory_space<vmem>>, vector<16x4xf32>
    %c0_1 = arith.constant 0 : index
    %c0_2 = arith.constant 0 : index
    %1 = vector.load %arg1[%c0_1, %c0_2] : memref<20x6xf32, #tpu.memory_space<vmem>>, vector<20x6xf32>
    %c0_3 = arith.constant 0 : index
    %c0_4 = arith.constant 0 : index
    %2 = vector.load %arg2[%c0_3, %c0_4] : memref<2x12xf32, #tpu.memory_space<vmem>>, vector<2x12xf32>
    %c0_5 = arith.constant 0 : index
    %c0_6 = arith.constant 0 : index
    %3 = vector.load %arg3[%c0_5, %c0_6] : memref<4x128xf32, #tpu.memory_space<vmem>>, vector<4x128xf32>
    %c0_7 = arith.constant 0 : index
    %c0_8 = arith.constant 0 : index
    %4 = vector.load %arg4[%c0_7, %c0_8] : memref<32x128xf32, #tpu.memory_space<vmem>>, vector<32x128xf32>
    %c0_9 = arith.constant 0 : index
    %c0_10 = arith.constant 0 : index
    %5 = vector.load %arg5[%c0_9, %c0_10] : memref<1x128xf32, #tpu.memory_space<vmem>>, vector<1x128xf32>
    %c0_11 = arith.constant 0 : index
    %c0_12 = arith.constant 0 : index
    %6 = vector.load %arg6[%c0_11, %c0_12] : memref<6x64xf32, #tpu.memory_space<vmem>>, vector<6x64xf32>
    %c0_13 = arith.constant 0 : index
    %c0_14 = arith.constant 0 : index
    %7 = vector.load %arg7[%c0_13, %c0_14] : memref<16x64xf32, #tpu.memory_space<vmem>>, vector<16x64xf32>
    %c0_15 = arith.constant 0 : index
    %c0_16 = arith.constant 0 : index
    %8 = vector.load %arg8[%c0_15, %c0_16] : memref<1x64xf32, #tpu.memory_space<vmem>>, vector<1x64xf32>
    %c0_17 = arith.constant 0 : index
    %c0_18 = arith.constant 0 : index
    %9 = vector.load %arg9[%c0_17, %c0_18] : memref<16x64xf32, #tpu.memory_space<vmem>>, vector<16x64xf32>
    %c0_19 = arith.constant 0 : index
    %c0_20 = arith.constant 0 : index
    %10 = vector.load %arg10[%c0_19, %c0_20] : memref<16x64xf32, #tpu.memory_space<vmem>>, vector<16x64xf32>
    %c0_21 = arith.constant 0 : index
    %c0_22 = arith.constant 0 : index
    %11 = vector.load %arg11[%c0_21, %c0_22] : memref<1x64xf32, #tpu.memory_space<vmem>>, vector<1x64xf32>
    %c0_23 = arith.constant 0 : index
    %c0_24 = arith.constant 0 : index
    %12 = vector.load %arg12[%c0_23, %c0_24] : memref<12x32xf32, #tpu.memory_space<vmem>>, vector<12x32xf32>
    %c0_25 = arith.constant 0 : index
    %c0_26 = arith.constant 0 : index
    %13 = vector.load %arg13[%c0_25, %c0_26] : memref<1x32xf32, #tpu.memory_space<vmem>>, vector<1x32xf32>
    %c0_27 = arith.constant 0 : index
    %c0_28 = arith.constant 0 : index
    %14 = vector.load %arg14[%c0_27, %c0_28] : memref<32x16xf32, #tpu.memory_space<vmem>>, vector<32x16xf32>
    %c0_29 = arith.constant 0 : index
    %c0_30 = arith.constant 0 : index
    %15 = vector.load %arg15[%c0_29, %c0_30] : memref<1x16xf32, #tpu.memory_space<vmem>>, vector<1x16xf32>
    %c0_31 = arith.constant 0 : index
    %c0_32 = arith.constant 0 : index
    %16 = vector.load %arg16[%c0_31, %c0_32] : memref<32x64xf32, #tpu.memory_space<vmem>>, vector<32x64xf32>
    %c0_33 = arith.constant 0 : index
    %c0_34 = arith.constant 0 : index
    %17 = vector.load %arg17[%c0_33, %c0_34] : memref<16x64xf32, #tpu.memory_space<vmem>>, vector<16x64xf32>
    %c0_35 = arith.constant 0 : index
    %c0_36 = arith.constant 0 : index
    %18 = vector.load %arg18[%c0_35, %c0_36] : memref<16x64xf32, #tpu.memory_space<vmem>>, vector<16x64xf32>
    %c0_37 = arith.constant 0 : index
    %c0_38 = arith.constant 0 : index
    %19 = vector.load %arg19[%c0_37, %c0_38] : memref<1x64xf32, #tpu.memory_space<vmem>>, vector<1x64xf32>
    %c0_39 = arith.constant 0 : index
    %c0_40 = arith.constant 0 : index
    %20 = vector.load %arg20[%c0_39, %c0_40] : memref<64x1xf32, #tpu.memory_space<vmem>>, vector<64x1xf32>
    %c0_41 = arith.constant 0 : index
    %c0_42 = arith.constant 0 : index
    %21 = vector.load %arg21[%c0_41, %c0_42] : memref<1x1xf32, #tpu.memory_space<vmem>>, vector<1x1xf32>
    %cst = arith.constant 0.000000e+00 : f32
    %22 = vector.broadcast %cst : f32 to vector<2x32xf32>
    %cst_43 = arith.constant 0.000000e+00 : f32
    %23 = vector.broadcast %cst_43 : f32 to vector<2x32xf32>
    %cst_44 = arith.constant dense<0.000000e+00> : vector<16x128xf32>
    %24 = tpu.matmul %0, %3, %cst_44 {dimension_numbers = #tpu.dot_dimension_numbers<[1], [0], [0], [1], [0, 0, 1, 1], [], []>} : vector<16x4xf32>, vector<4x128xf32>, vector<16x128xf32> -> vector<16x128xf32>
    %25 = vector.broadcast %5 : vector<1x128xf32> to vector<16x128xf32>
    %26 = arith.addf %24, %25 : vector<16x128xf32>
    %27 = vector.extract_strided_slice %26 {offsets = [0, 0], sizes = [2, 128], strides = [1, 1]} : vector<16x128xf32> to vector<2x128xf32>
    %cst_45 = arith.constant dense<0.000000e+00> : vector<2x128xf32>
    %28 = tpu.matmul %22, %4, %cst_45 {dimension_numbers = #tpu.dot_dimension_numbers<[1], [0], [0], [1], [0, 0, 1, 1], [], []>} : vector<2x32xf32>, vector<32x128xf32>, vector<2x128xf32> -> vector<2x128xf32>
    %29 = arith.addf %27, %28 : vector<2x128xf32>
    %30 = vector.extract_strided_slice %29 {offsets = [0, 0], sizes = [2, 32], strides = [1, 1]} : vector<2x128xf32> to vector<2x32xf32>
    %31 = arith.negf %30 : vector<2x32xf32>
    %32 = math.exp %31 : vector<2x32xf32>
    %cst_46 = arith.constant 1.000000e+00 : f32
    %33 = vector.broadcast %cst_46 : f32 to vector<2x32xf32>
    %34 = arith.addf %33, %32 : vector<2x32xf32>
    %35 = arith.divf %33, %34 : vector<2x32xf32>
    %36 = vector.extract_strided_slice %29 {offsets = [0, 32], sizes = [2, 32], strides = [1, 1]} : vector<2x128xf32> to vector<2x32xf32>
    %37 = arith.negf %36 : vector<2x32xf32>
    %38 = math.exp %37 : vector<2x32xf32>
    %cst_47 = arith.constant 1.000000e+00 : f32
    %39 = vector.broadcast %cst_47 : f32 to vector<2x32xf32>
    %40 = arith.addf %39, %38 : vector<2x32xf32>
    %41 = arith.divf %39, %40 : vector<2x32xf32>
    %42 = vector.extract_strided_slice %29 {offsets = [0, 64], sizes = [2, 32], strides = [1, 1]} : vector<2x128xf32> to vector<2x32xf32>
    %43 = math.tanh %42 : vector<2x32xf32>
    %44 = vector.extract_strided_slice %29 {offsets = [0, 96], sizes = [2, 32], strides = [1, 1]} : vector<2x128xf32> to vector<2x32xf32>
    %45 = arith.negf %44 : vector<2x32xf32>
    %46 = math.exp %45 : vector<2x32xf32>
    %cst_48 = arith.constant 1.000000e+00 : f32
    %47 = vector.broadcast %cst_48 : f32 to vector<2x32xf32>
    %48 = arith.addf %47, %46 : vector<2x32xf32>
    %49 = arith.divf %47, %48 : vector<2x32xf32>
    %50 = arith.mulf %41, %23 : vector<2x32xf32>
    %51 = arith.mulf %35, %43 : vector<2x32xf32>
    %52 = arith.addf %50, %51 : vector<2x32xf32>
    %53 = math.tanh %52 : vector<2x32xf32>
    %54 = arith.mulf %49, %53 : vector<2x32xf32>
    %55 = vector.extract_strided_slice %26 {offsets = [2, 0], sizes = [2, 128], strides = [1, 1]} : vector<16x128xf32> to vector<2x128xf32>
    %cst_49 = arith.constant dense<0.000000e+00> : vector<2x128xf32>
    %56 = tpu.matmul %54, %4, %cst_49 {dimension_numbers = #tpu.dot_dimension_numbers<[1], [0], [0], [1], [0, 0, 1, 1], [], []>} : vector<2x32xf32>, vector<32x128xf32>, vector<2x128xf32> -> vector<2x128xf32>
    %57 = arith.addf %55, %56 : vector<2x128xf32>
    %58 = vector.extract_strided_slice %57 {offsets = [0, 0], sizes = [2, 32], strides = [1, 1]} : vector<2x128xf32> to vector<2x32xf32>
    %59 = arith.negf %58 : vector<2x32xf32>
    %60 = math.exp %59 : vector<2x32xf32>
    %cst_50 = arith.constant 1.000000e+00 : f32
    %61 = vector.broadcast %cst_50 : f32 to vector<2x32xf32>
    %62 = arith.addf %61, %60 : vector<2x32xf32>
    %63 = arith.divf %61, %62 : vector<2x32xf32>
    %64 = vector.extract_strided_slice %57 {offsets = [0, 32], sizes = [2, 32], strides = [1, 1]} : vector<2x128xf32> to vector<2x32xf32>
    %65 = arith.negf %64 : vector<2x32xf32>
    %66 = math.exp %65 : vector<2x32xf32>
    %cst_51 = arith.constant 1.000000e+00 : f32
    %67 = vector.broadcast %cst_51 : f32 to vector<2x32xf32>
    %68 = arith.addf %67, %66 : vector<2x32xf32>
    %69 = arith.divf %67, %68 : vector<2x32xf32>
    %70 = vector.extract_strided_slice %57 {offsets = [0, 64], sizes = [2, 32], strides = [1, 1]} : vector<2x128xf32> to vector<2x32xf32>
    %71 = math.tanh %70 : vector<2x32xf32>
    %72 = vector.extract_strided_slice %57 {offsets = [0, 96], sizes = [2, 32], strides = [1, 1]} : vector<2x128xf32> to vector<2x32xf32>
    %73 = arith.negf %72 : vector<2x32xf32>
    %74 = math.exp %73 : vector<2x32xf32>
    %cst_52 = arith.constant 1.000000e+00 : f32
    %75 = vector.broadcast %cst_52 : f32 to vector<2x32xf32>
    %76 = arith.addf %75, %74 : vector<2x32xf32>
    %77 = arith.divf %75, %76 : vector<2x32xf32>
    %78 = arith.mulf %69, %52 : vector<2x32xf32>
    %79 = arith.mulf %63, %71 : vector<2x32xf32>
    %80 = arith.addf %78, %79 : vector<2x32xf32>
    %81 = math.tanh %80 : vector<2x32xf32>
    %82 = arith.mulf %77, %81 : vector<2x32xf32>
    %83 = vector.extract_strided_slice %26 {offsets = [4, 0], sizes = [2, 128], strides = [1, 1]} : vector<16x128xf32> to vector<2x128xf32>
    %cst_53 = arith.constant dense<0.000000e+00> : vector<2x128xf32>
    %84 = tpu.matmul %82, %4, %cst_53 {dimension_numbers = #tpu.dot_dimension_numbers<[1], [0], [0], [1], [0, 0, 1, 1], [], []>} : vector<2x32xf32>, vector<32x128xf32>, vector<2x128xf32> -> vector<2x128xf32>
    %85 = arith.addf %83, %84 : vector<2x128xf32>
    %86 = vector.extract_strided_slice %85 {offsets = [0, 0], sizes = [2, 32], strides = [1, 1]} : vector<2x128xf32> to vector<2x32xf32>
    %87 = arith.negf %86 : vector<2x32xf32>
    %88 = math.exp %87 : vector<2x32xf32>
    %cst_54 = arith.constant 1.000000e+00 : f32
    %89 = vector.broadcast %cst_54 : f32 to vector<2x32xf32>
    %90 = arith.addf %89, %88 : vector<2x32xf32>
    %91 = arith.divf %89, %90 : vector<2x32xf32>
    %92 = vector.extract_strided_slice %85 {offsets = [0, 32], sizes = [2, 32], strides = [1, 1]} : vector<2x128xf32> to vector<2x32xf32>
    %93 = arith.negf %92 : vector<2x32xf32>
    %94 = math.exp %93 : vector<2x32xf32>
    %cst_55 = arith.constant 1.000000e+00 : f32
    %95 = vector.broadcast %cst_55 : f32 to vector<2x32xf32>
    %96 = arith.addf %95, %94 : vector<2x32xf32>
    %97 = arith.divf %95, %96 : vector<2x32xf32>
    %98 = vector.extract_strided_slice %85 {offsets = [0, 64], sizes = [2, 32], strides = [1, 1]} : vector<2x128xf32> to vector<2x32xf32>
    %99 = math.tanh %98 : vector<2x32xf32>
    %100 = vector.extract_strided_slice %85 {offsets = [0, 96], sizes = [2, 32], strides = [1, 1]} : vector<2x128xf32> to vector<2x32xf32>
    %101 = arith.negf %100 : vector<2x32xf32>
    %102 = math.exp %101 : vector<2x32xf32>
    %cst_56 = arith.constant 1.000000e+00 : f32
    %103 = vector.broadcast %cst_56 : f32 to vector<2x32xf32>
    %104 = arith.addf %103, %102 : vector<2x32xf32>
    %105 = arith.divf %103, %104 : vector<2x32xf32>
    %106 = arith.mulf %97, %80 : vector<2x32xf32>
    %107 = arith.mulf %91, %99 : vector<2x32xf32>
    %108 = arith.addf %106, %107 : vector<2x32xf32>
    %109 = math.tanh %108 : vector<2x32xf32>
    %110 = arith.mulf %105, %109 : vector<2x32xf32>
    %111 = vector.extract_strided_slice %26 {offsets = [6, 0], sizes = [2, 128], strides = [1, 1]} : vector<16x128xf32> to vector<2x128xf32>
    %cst_57 = arith.constant dense<0.000000e+00> : vector<2x128xf32>
    %112 = tpu.matmul %110, %4, %cst_57 {dimension_numbers = #tpu.dot_dimension_numbers<[1], [0], [0], [1], [0, 0, 1, 1], [], []>} : vector<2x32xf32>, vector<32x128xf32>, vector<2x128xf32> -> vector<2x128xf32>
    %113 = arith.addf %111, %112 : vector<2x128xf32>
    %114 = vector.extract_strided_slice %113 {offsets = [0, 0], sizes = [2, 32], strides = [1, 1]} : vector<2x128xf32> to vector<2x32xf32>
    %115 = arith.negf %114 : vector<2x32xf32>
    %116 = math.exp %115 : vector<2x32xf32>
    %cst_58 = arith.constant 1.000000e+00 : f32
    %117 = vector.broadcast %cst_58 : f32 to vector<2x32xf32>
    %118 = arith.addf %117, %116 : vector<2x32xf32>
    %119 = arith.divf %117, %118 : vector<2x32xf32>
    %120 = vector.extract_strided_slice %113 {offsets = [0, 32], sizes = [2, 32], strides = [1, 1]} : vector<2x128xf32> to vector<2x32xf32>
    %121 = arith.negf %120 : vector<2x32xf32>
    %122 = math.exp %121 : vector<2x32xf32>
    %cst_59 = arith.constant 1.000000e+00 : f32
    %123 = vector.broadcast %cst_59 : f32 to vector<2x32xf32>
    %124 = arith.addf %123, %122 : vector<2x32xf32>
    %125 = arith.divf %123, %124 : vector<2x32xf32>
    %126 = vector.extract_strided_slice %113 {offsets = [0, 64], sizes = [2, 32], strides = [1, 1]} : vector<2x128xf32> to vector<2x32xf32>
    %127 = math.tanh %126 : vector<2x32xf32>
    %128 = vector.extract_strided_slice %113 {offsets = [0, 96], sizes = [2, 32], strides = [1, 1]} : vector<2x128xf32> to vector<2x32xf32>
    %129 = arith.negf %128 : vector<2x32xf32>
    %130 = math.exp %129 : vector<2x32xf32>
    %cst_60 = arith.constant 1.000000e+00 : f32
    %131 = vector.broadcast %cst_60 : f32 to vector<2x32xf32>
    %132 = arith.addf %131, %130 : vector<2x32xf32>
    %133 = arith.divf %131, %132 : vector<2x32xf32>
    %134 = arith.mulf %125, %108 : vector<2x32xf32>
    %135 = arith.mulf %119, %127 : vector<2x32xf32>
    %136 = arith.addf %134, %135 : vector<2x32xf32>
    %137 = math.tanh %136 : vector<2x32xf32>
    %138 = arith.mulf %133, %137 : vector<2x32xf32>
    %139 = vector.extract_strided_slice %26 {offsets = [8, 0], sizes = [2, 128], strides = [1, 1]} : vector<16x128xf32> to vector<2x128xf32>
    %cst_61 = arith.constant dense<0.000000e+00> : vector<2x128xf32>
    %140 = tpu.matmul %138, %4, %cst_61 {dimension_numbers = #tpu.dot_dimension_numbers<[1], [0], [0], [1], [0, 0, 1, 1], [], []>} : vector<2x32xf32>, vector<32x128xf32>, vector<2x128xf32> -> vector<2x128xf32>
    %141 = arith.addf %139, %140 : vector<2x128xf32>
    %142 = vector.extract_strided_slice %141 {offsets = [0, 0], sizes = [2, 32], strides = [1, 1]} : vector<2x128xf32> to vector<2x32xf32>
    %143 = arith.negf %142 : vector<2x32xf32>
    %144 = math.exp %143 : vector<2x32xf32>
    %cst_62 = arith.constant 1.000000e+00 : f32
    %145 = vector.broadcast %cst_62 : f32 to vector<2x32xf32>
    %146 = arith.addf %145, %144 : vector<2x32xf32>
    %147 = arith.divf %145, %146 : vector<2x32xf32>
    %148 = vector.extract_strided_slice %141 {offsets = [0, 32], sizes = [2, 32], strides = [1, 1]} : vector<2x128xf32> to vector<2x32xf32>
    %149 = arith.negf %148 : vector<2x32xf32>
    %150 = math.exp %149 : vector<2x32xf32>
    %cst_63 = arith.constant 1.000000e+00 : f32
    %151 = vector.broadcast %cst_63 : f32 to vector<2x32xf32>
    %152 = arith.addf %151, %150 : vector<2x32xf32>
    %153 = arith.divf %151, %152 : vector<2x32xf32>
    %154 = vector.extract_strided_slice %141 {offsets = [0, 64], sizes = [2, 32], strides = [1, 1]} : vector<2x128xf32> to vector<2x32xf32>
    %155 = math.tanh %154 : vector<2x32xf32>
    %156 = vector.extract_strided_slice %141 {offsets = [0, 96], sizes = [2, 32], strides = [1, 1]} : vector<2x128xf32> to vector<2x32xf32>
    %157 = arith.negf %156 : vector<2x32xf32>
    %158 = math.exp %157 : vector<2x32xf32>
    %cst_64 = arith.constant 1.000000e+00 : f32
    %159 = vector.broadcast %cst_64 : f32 to vector<2x32xf32>
    %160 = arith.addf %159, %158 : vector<2x32xf32>
    %161 = arith.divf %159, %160 : vector<2x32xf32>
    %162 = arith.mulf %153, %136 : vector<2x32xf32>
    %163 = arith.mulf %147, %155 : vector<2x32xf32>
    %164 = arith.addf %162, %163 : vector<2x32xf32>
    %165 = math.tanh %164 : vector<2x32xf32>
    %166 = arith.mulf %161, %165 : vector<2x32xf32>
    %167 = vector.extract_strided_slice %26 {offsets = [10, 0], sizes = [2, 128], strides = [1, 1]} : vector<16x128xf32> to vector<2x128xf32>
    %cst_65 = arith.constant dense<0.000000e+00> : vector<2x128xf32>
    %168 = tpu.matmul %166, %4, %cst_65 {dimension_numbers = #tpu.dot_dimension_numbers<[1], [0], [0], [1], [0, 0, 1, 1], [], []>} : vector<2x32xf32>, vector<32x128xf32>, vector<2x128xf32> -> vector<2x128xf32>
    %169 = arith.addf %167, %168 : vector<2x128xf32>
    %170 = vector.extract_strided_slice %169 {offsets = [0, 0], sizes = [2, 32], strides = [1, 1]} : vector<2x128xf32> to vector<2x32xf32>
    %171 = arith.negf %170 : vector<2x32xf32>
    %172 = math.exp %171 : vector<2x32xf32>
    %cst_66 = arith.constant 1.000000e+00 : f32
    %173 = vector.broadcast %cst_66 : f32 to vector<2x32xf32>
    %174 = arith.addf %173, %172 : vector<2x32xf32>
    %175 = arith.divf %173, %174 : vector<2x32xf32>
    %176 = vector.extract_strided_slice %169 {offsets = [0, 32], sizes = [2, 32], strides = [1, 1]} : vector<2x128xf32> to vector<2x32xf32>
    %177 = arith.negf %176 : vector<2x32xf32>
    %178 = math.exp %177 : vector<2x32xf32>
    %cst_67 = arith.constant 1.000000e+00 : f32
    %179 = vector.broadcast %cst_67 : f32 to vector<2x32xf32>
    %180 = arith.addf %179, %178 : vector<2x32xf32>
    %181 = arith.divf %179, %180 : vector<2x32xf32>
    %182 = vector.extract_strided_slice %169 {offsets = [0, 64], sizes = [2, 32], strides = [1, 1]} : vector<2x128xf32> to vector<2x32xf32>
    %183 = math.tanh %182 : vector<2x32xf32>
    %184 = vector.extract_strided_slice %169 {offsets = [0, 96], sizes = [2, 32], strides = [1, 1]} : vector<2x128xf32> to vector<2x32xf32>
    %185 = arith.negf %184 : vector<2x32xf32>
    %186 = math.exp %185 : vector<2x32xf32>
    %cst_68 = arith.constant 1.000000e+00 : f32
    %187 = vector.broadcast %cst_68 : f32 to vector<2x32xf32>
    %188 = arith.addf %187, %186 : vector<2x32xf32>
    %189 = arith.divf %187, %188 : vector<2x32xf32>
    %190 = arith.mulf %181, %164 : vector<2x32xf32>
    %191 = arith.mulf %175, %183 : vector<2x32xf32>
    %192 = arith.addf %190, %191 : vector<2x32xf32>
    %193 = math.tanh %192 : vector<2x32xf32>
    %194 = arith.mulf %189, %193 : vector<2x32xf32>
    %195 = vector.extract_strided_slice %26 {offsets = [12, 0], sizes = [2, 128], strides = [1, 1]} : vector<16x128xf32> to vector<2x128xf32>
    %cst_69 = arith.constant dense<0.000000e+00> : vector<2x128xf32>
    %196 = tpu.matmul %194, %4, %cst_69 {dimension_numbers = #tpu.dot_dimension_numbers<[1], [0], [0], [1], [0, 0, 1, 1], [], []>} : vector<2x32xf32>, vector<32x128xf32>, vector<2x128xf32> -> vector<2x128xf32>
    %197 = arith.addf %195, %196 : vector<2x128xf32>
    %198 = vector.extract_strided_slice %197 {offsets = [0, 0], sizes = [2, 32], strides = [1, 1]} : vector<2x128xf32> to vector<2x32xf32>
    %199 = arith.negf %198 : vector<2x32xf32>
    %200 = math.exp %199 : vector<2x32xf32>
    %cst_70 = arith.constant 1.000000e+00 : f32
    %201 = vector.broadcast %cst_70 : f32 to vector<2x32xf32>
    %202 = arith.addf %201, %200 : vector<2x32xf32>
    %203 = arith.divf %201, %202 : vector<2x32xf32>
    %204 = vector.extract_strided_slice %197 {offsets = [0, 32], sizes = [2, 32], strides = [1, 1]} : vector<2x128xf32> to vector<2x32xf32>
    %205 = arith.negf %204 : vector<2x32xf32>
    %206 = math.exp %205 : vector<2x32xf32>
    %cst_71 = arith.constant 1.000000e+00 : f32
    %207 = vector.broadcast %cst_71 : f32 to vector<2x32xf32>
    %208 = arith.addf %207, %206 : vector<2x32xf32>
    %209 = arith.divf %207, %208 : vector<2x32xf32>
    %210 = vector.extract_strided_slice %197 {offsets = [0, 64], sizes = [2, 32], strides = [1, 1]} : vector<2x128xf32> to vector<2x32xf32>
    %211 = math.tanh %210 : vector<2x32xf32>
    %212 = vector.extract_strided_slice %197 {offsets = [0, 96], sizes = [2, 32], strides = [1, 1]} : vector<2x128xf32> to vector<2x32xf32>
    %213 = arith.negf %212 : vector<2x32xf32>
    %214 = math.exp %213 : vector<2x32xf32>
    %cst_72 = arith.constant 1.000000e+00 : f32
    %215 = vector.broadcast %cst_72 : f32 to vector<2x32xf32>
    %216 = arith.addf %215, %214 : vector<2x32xf32>
    %217 = arith.divf %215, %216 : vector<2x32xf32>
    %218 = arith.mulf %209, %192 : vector<2x32xf32>
    %219 = arith.mulf %203, %211 : vector<2x32xf32>
    %220 = arith.addf %218, %219 : vector<2x32xf32>
    %221 = math.tanh %220 : vector<2x32xf32>
    %222 = arith.mulf %217, %221 : vector<2x32xf32>
    %223 = vector.extract_strided_slice %26 {offsets = [14, 0], sizes = [2, 128], strides = [1, 1]} : vector<16x128xf32> to vector<2x128xf32>
    %cst_73 = arith.constant dense<0.000000e+00> : vector<2x128xf32>
    %224 = tpu.matmul %222, %4, %cst_73 {dimension_numbers = #tpu.dot_dimension_numbers<[1], [0], [0], [1], [0, 0, 1, 1], [], []>} : vector<2x32xf32>, vector<32x128xf32>, vector<2x128xf32> -> vector<2x128xf32>
    %225 = arith.addf %223, %224 : vector<2x128xf32>
    %226 = vector.extract_strided_slice %225 {offsets = [0, 0], sizes = [2, 32], strides = [1, 1]} : vector<2x128xf32> to vector<2x32xf32>
    %227 = arith.negf %226 : vector<2x32xf32>
    %228 = math.exp %227 : vector<2x32xf32>
    %cst_74 = arith.constant 1.000000e+00 : f32
    %229 = vector.broadcast %cst_74 : f32 to vector<2x32xf32>
    %230 = arith.addf %229, %228 : vector<2x32xf32>
    %231 = arith.divf %229, %230 : vector<2x32xf32>
    %232 = vector.extract_strided_slice %225 {offsets = [0, 32], sizes = [2, 32], strides = [1, 1]} : vector<2x128xf32> to vector<2x32xf32>
    %233 = arith.negf %232 : vector<2x32xf32>
    %234 = math.exp %233 : vector<2x32xf32>
    %cst_75 = arith.constant 1.000000e+00 : f32
    %235 = vector.broadcast %cst_75 : f32 to vector<2x32xf32>
    %236 = arith.addf %235, %234 : vector<2x32xf32>
    %237 = arith.divf %235, %236 : vector<2x32xf32>
    %238 = vector.extract_strided_slice %225 {offsets = [0, 64], sizes = [2, 32], strides = [1, 1]} : vector<2x128xf32> to vector<2x32xf32>
    %239 = math.tanh %238 : vector<2x32xf32>
    %240 = vector.extract_strided_slice %225 {offsets = [0, 96], sizes = [2, 32], strides = [1, 1]} : vector<2x128xf32> to vector<2x32xf32>
    %241 = arith.negf %240 : vector<2x32xf32>
    %242 = math.exp %241 : vector<2x32xf32>
    %cst_76 = arith.constant 1.000000e+00 : f32
    %243 = vector.broadcast %cst_76 : f32 to vector<2x32xf32>
    %244 = arith.addf %243, %242 : vector<2x32xf32>
    %245 = arith.divf %243, %244 : vector<2x32xf32>
    %246 = arith.mulf %237, %220 : vector<2x32xf32>
    %247 = arith.mulf %231, %239 : vector<2x32xf32>
    %248 = arith.addf %246, %247 : vector<2x32xf32>
    %249 = math.tanh %248 : vector<2x32xf32>
    %250 = arith.mulf %245, %249 : vector<2x32xf32>
    %cst_77 = arith.constant 0.000000e+00 : f32
    %251 = vector.broadcast %cst_77 : f32 to vector<2x16xf32>
    %cst_78 = arith.constant 0.000000e+00 : f32
    %252 = vector.broadcast %cst_78 : f32 to vector<2x16xf32>
    %cst_79 = arith.constant dense<0.000000e+00> : vector<20x64xf32>
    %253 = tpu.matmul %1, %6, %cst_79 {dimension_numbers = #tpu.dot_dimension_numbers<[1], [0], [0], [1], [0, 0, 1, 1], [], []>} : vector<20x6xf32>, vector<6x64xf32>, vector<20x64xf32> -> vector<20x64xf32>
    %254 = vector.broadcast %8 : vector<1x64xf32> to vector<20x64xf32>
    %255 = arith.addf %253, %254 : vector<20x64xf32>
    %256 = vector.extract_strided_slice %255 {offsets = [0, 0], sizes = [2, 64], strides = [1, 1]} : vector<20x64xf32> to vector<2x64xf32>
    %cst_80 = arith.constant dense<0.000000e+00> : vector<2x64xf32>
    %257 = tpu.matmul %251, %7, %cst_80 {dimension_numbers = #tpu.dot_dimension_numbers<[1], [0], [0], [1], [0, 0, 1, 1], [], []>} : vector<2x16xf32>, vector<16x64xf32>, vector<2x64xf32> -> vector<2x64xf32>
    %258 = arith.addf %256, %257 : vector<2x64xf32>
    %259 = vector.extract_strided_slice %258 {offsets = [0, 0], sizes = [2, 16], strides = [1, 1]} : vector<2x64xf32> to vector<2x16xf32>
    %260 = arith.negf %259 : vector<2x16xf32>
    %261 = math.exp %260 : vector<2x16xf32>
    %cst_81 = arith.constant 1.000000e+00 : f32
    %262 = vector.broadcast %cst_81 : f32 to vector<2x16xf32>
    %263 = arith.addf %262, %261 : vector<2x16xf32>
    %264 = arith.divf %262, %263 : vector<2x16xf32>
    %265 = vector.extract_strided_slice %258 {offsets = [0, 16], sizes = [2, 16], strides = [1, 1]} : vector<2x64xf32> to vector<2x16xf32>
    %266 = arith.negf %265 : vector<2x16xf32>
    %267 = math.exp %266 : vector<2x16xf32>
    %cst_82 = arith.constant 1.000000e+00 : f32
    %268 = vector.broadcast %cst_82 : f32 to vector<2x16xf32>
    %269 = arith.addf %268, %267 : vector<2x16xf32>
    %270 = arith.divf %268, %269 : vector<2x16xf32>
    %271 = vector.extract_strided_slice %258 {offsets = [0, 32], sizes = [2, 16], strides = [1, 1]} : vector<2x64xf32> to vector<2x16xf32>
    %272 = math.tanh %271 : vector<2x16xf32>
    %273 = vector.extract_strided_slice %258 {offsets = [0, 48], sizes = [2, 16], strides = [1, 1]} : vector<2x64xf32> to vector<2x16xf32>
    %274 = arith.negf %273 : vector<2x16xf32>
    %275 = math.exp %274 : vector<2x16xf32>
    %cst_83 = arith.constant 1.000000e+00 : f32
    %276 = vector.broadcast %cst_83 : f32 to vector<2x16xf32>
    %277 = arith.addf %276, %275 : vector<2x16xf32>
    %278 = arith.divf %276, %277 : vector<2x16xf32>
    %279 = arith.mulf %270, %252 : vector<2x16xf32>
    %280 = arith.mulf %264, %272 : vector<2x16xf32>
    %281 = arith.addf %279, %280 : vector<2x16xf32>
    %282 = math.tanh %281 : vector<2x16xf32>
    %283 = arith.mulf %278, %282 : vector<2x16xf32>
    %284 = vector.extract_strided_slice %255 {offsets = [2, 0], sizes = [2, 64], strides = [1, 1]} : vector<20x64xf32> to vector<2x64xf32>
    %cst_84 = arith.constant dense<0.000000e+00> : vector<2x64xf32>
    %285 = tpu.matmul %283, %7, %cst_84 {dimension_numbers = #tpu.dot_dimension_numbers<[1], [0], [0], [1], [0, 0, 1, 1], [], []>} : vector<2x16xf32>, vector<16x64xf32>, vector<2x64xf32> -> vector<2x64xf32>
    %286 = arith.addf %284, %285 : vector<2x64xf32>
    %287 = vector.extract_strided_slice %286 {offsets = [0, 0], sizes = [2, 16], strides = [1, 1]} : vector<2x64xf32> to vector<2x16xf32>
    %288 = arith.negf %287 : vector<2x16xf32>
    %289 = math.exp %288 : vector<2x16xf32>
    %cst_85 = arith.constant 1.000000e+00 : f32
    %290 = vector.broadcast %cst_85 : f32 to vector<2x16xf32>
    %291 = arith.addf %290, %289 : vector<2x16xf32>
    %292 = arith.divf %290, %291 : vector<2x16xf32>
    %293 = vector.extract_strided_slice %286 {offsets = [0, 16], sizes = [2, 16], strides = [1, 1]} : vector<2x64xf32> to vector<2x16xf32>
    %294 = arith.negf %293 : vector<2x16xf32>
    %295 = math.exp %294 : vector<2x16xf32>
    %cst_86 = arith.constant 1.000000e+00 : f32
    %296 = vector.broadcast %cst_86 : f32 to vector<2x16xf32>
    %297 = arith.addf %296, %295 : vector<2x16xf32>
    %298 = arith.divf %296, %297 : vector<2x16xf32>
    %299 = vector.extract_strided_slice %286 {offsets = [0, 32], sizes = [2, 16], strides = [1, 1]} : vector<2x64xf32> to vector<2x16xf32>
    %300 = math.tanh %299 : vector<2x16xf32>
    %301 = vector.extract_strided_slice %286 {offsets = [0, 48], sizes = [2, 16], strides = [1, 1]} : vector<2x64xf32> to vector<2x16xf32>
    %302 = arith.negf %301 : vector<2x16xf32>
    %303 = math.exp %302 : vector<2x16xf32>
    %cst_87 = arith.constant 1.000000e+00 : f32
    %304 = vector.broadcast %cst_87 : f32 to vector<2x16xf32>
    %305 = arith.addf %304, %303 : vector<2x16xf32>
    %306 = arith.divf %304, %305 : vector<2x16xf32>
    %307 = arith.mulf %298, %281 : vector<2x16xf32>
    %308 = arith.mulf %292, %300 : vector<2x16xf32>
    %309 = arith.addf %307, %308 : vector<2x16xf32>
    %310 = math.tanh %309 : vector<2x16xf32>
    %311 = arith.mulf %306, %310 : vector<2x16xf32>
    %312 = vector.extract_strided_slice %255 {offsets = [4, 0], sizes = [2, 64], strides = [1, 1]} : vector<20x64xf32> to vector<2x64xf32>
    %cst_88 = arith.constant dense<0.000000e+00> : vector<2x64xf32>
    %313 = tpu.matmul %311, %7, %cst_88 {dimension_numbers = #tpu.dot_dimension_numbers<[1], [0], [0], [1], [0, 0, 1, 1], [], []>} : vector<2x16xf32>, vector<16x64xf32>, vector<2x64xf32> -> vector<2x64xf32>
    %314 = arith.addf %312, %313 : vector<2x64xf32>
    %315 = vector.extract_strided_slice %314 {offsets = [0, 0], sizes = [2, 16], strides = [1, 1]} : vector<2x64xf32> to vector<2x16xf32>
    %316 = arith.negf %315 : vector<2x16xf32>
    %317 = math.exp %316 : vector<2x16xf32>
    %cst_89 = arith.constant 1.000000e+00 : f32
    %318 = vector.broadcast %cst_89 : f32 to vector<2x16xf32>
    %319 = arith.addf %318, %317 : vector<2x16xf32>
    %320 = arith.divf %318, %319 : vector<2x16xf32>
    %321 = vector.extract_strided_slice %314 {offsets = [0, 16], sizes = [2, 16], strides = [1, 1]} : vector<2x64xf32> to vector<2x16xf32>
    %322 = arith.negf %321 : vector<2x16xf32>
    %323 = math.exp %322 : vector<2x16xf32>
    %cst_90 = arith.constant 1.000000e+00 : f32
    %324 = vector.broadcast %cst_90 : f32 to vector<2x16xf32>
    %325 = arith.addf %324, %323 : vector<2x16xf32>
    %326 = arith.divf %324, %325 : vector<2x16xf32>
    %327 = vector.extract_strided_slice %314 {offsets = [0, 32], sizes = [2, 16], strides = [1, 1]} : vector<2x64xf32> to vector<2x16xf32>
    %328 = math.tanh %327 : vector<2x16xf32>
    %329 = vector.extract_strided_slice %314 {offsets = [0, 48], sizes = [2, 16], strides = [1, 1]} : vector<2x64xf32> to vector<2x16xf32>
    %330 = arith.negf %329 : vector<2x16xf32>
    %331 = math.exp %330 : vector<2x16xf32>
    %cst_91 = arith.constant 1.000000e+00 : f32
    %332 = vector.broadcast %cst_91 : f32 to vector<2x16xf32>
    %333 = arith.addf %332, %331 : vector<2x16xf32>
    %334 = arith.divf %332, %333 : vector<2x16xf32>
    %335 = arith.mulf %326, %309 : vector<2x16xf32>
    %336 = arith.mulf %320, %328 : vector<2x16xf32>
    %337 = arith.addf %335, %336 : vector<2x16xf32>
    %338 = math.tanh %337 : vector<2x16xf32>
    %339 = arith.mulf %334, %338 : vector<2x16xf32>
    %340 = vector.extract_strided_slice %255 {offsets = [6, 0], sizes = [2, 64], strides = [1, 1]} : vector<20x64xf32> to vector<2x64xf32>
    %cst_92 = arith.constant dense<0.000000e+00> : vector<2x64xf32>
    %341 = tpu.matmul %339, %7, %cst_92 {dimension_numbers = #tpu.dot_dimension_numbers<[1], [0], [0], [1], [0, 0, 1, 1], [], []>} : vector<2x16xf32>, vector<16x64xf32>, vector<2x64xf32> -> vector<2x64xf32>
    %342 = arith.addf %340, %341 : vector<2x64xf32>
    %343 = vector.extract_strided_slice %342 {offsets = [0, 0], sizes = [2, 16], strides = [1, 1]} : vector<2x64xf32> to vector<2x16xf32>
    %344 = arith.negf %343 : vector<2x16xf32>
    %345 = math.exp %344 : vector<2x16xf32>
    %cst_93 = arith.constant 1.000000e+00 : f32
    %346 = vector.broadcast %cst_93 : f32 to vector<2x16xf32>
    %347 = arith.addf %346, %345 : vector<2x16xf32>
    %348 = arith.divf %346, %347 : vector<2x16xf32>
    %349 = vector.extract_strided_slice %342 {offsets = [0, 16], sizes = [2, 16], strides = [1, 1]} : vector<2x64xf32> to vector<2x16xf32>
    %350 = arith.negf %349 : vector<2x16xf32>
    %351 = math.exp %350 : vector<2x16xf32>
    %cst_94 = arith.constant 1.000000e+00 : f32
    %352 = vector.broadcast %cst_94 : f32 to vector<2x16xf32>
    %353 = arith.addf %352, %351 : vector<2x16xf32>
    %354 = arith.divf %352, %353 : vector<2x16xf32>
    %355 = vector.extract_strided_slice %342 {offsets = [0, 32], sizes = [2, 16], strides = [1, 1]} : vector<2x64xf32> to vector<2x16xf32>
    %356 = math.tanh %355 : vector<2x16xf32>
    %357 = vector.extract_strided_slice %342 {offsets = [0, 48], sizes = [2, 16], strides = [1, 1]} : vector<2x64xf32> to vector<2x16xf32>
    %358 = arith.negf %357 : vector<2x16xf32>
    %359 = math.exp %358 : vector<2x16xf32>
    %cst_95 = arith.constant 1.000000e+00 : f32
    %360 = vector.broadcast %cst_95 : f32 to vector<2x16xf32>
    %361 = arith.addf %360, %359 : vector<2x16xf32>
    %362 = arith.divf %360, %361 : vector<2x16xf32>
    %363 = arith.mulf %354, %337 : vector<2x16xf32>
    %364 = arith.mulf %348, %356 : vector<2x16xf32>
    %365 = arith.addf %363, %364 : vector<2x16xf32>
    %366 = math.tanh %365 : vector<2x16xf32>
    %367 = arith.mulf %362, %366 : vector<2x16xf32>
    %368 = vector.extract_strided_slice %255 {offsets = [8, 0], sizes = [2, 64], strides = [1, 1]} : vector<20x64xf32> to vector<2x64xf32>
    %cst_96 = arith.constant dense<0.000000e+00> : vector<2x64xf32>
    %369 = tpu.matmul %367, %7, %cst_96 {dimension_numbers = #tpu.dot_dimension_numbers<[1], [0], [0], [1], [0, 0, 1, 1], [], []>} : vector<2x16xf32>, vector<16x64xf32>, vector<2x64xf32> -> vector<2x64xf32>
    %370 = arith.addf %368, %369 : vector<2x64xf32>
    %371 = vector.extract_strided_slice %370 {offsets = [0, 0], sizes = [2, 16], strides = [1, 1]} : vector<2x64xf32> to vector<2x16xf32>
    %372 = arith.negf %371 : vector<2x16xf32>
    %373 = math.exp %372 : vector<2x16xf32>
    %cst_97 = arith.constant 1.000000e+00 : f32
    %374 = vector.broadcast %cst_97 : f32 to vector<2x16xf32>
    %375 = arith.addf %374, %373 : vector<2x16xf32>
    %376 = arith.divf %374, %375 : vector<2x16xf32>
    %377 = vector.extract_strided_slice %370 {offsets = [0, 16], sizes = [2, 16], strides = [1, 1]} : vector<2x64xf32> to vector<2x16xf32>
    %378 = arith.negf %377 : vector<2x16xf32>
    %379 = math.exp %378 : vector<2x16xf32>
    %cst_98 = arith.constant 1.000000e+00 : f32
    %380 = vector.broadcast %cst_98 : f32 to vector<2x16xf32>
    %381 = arith.addf %380, %379 : vector<2x16xf32>
    %382 = arith.divf %380, %381 : vector<2x16xf32>
    %383 = vector.extract_strided_slice %370 {offsets = [0, 32], sizes = [2, 16], strides = [1, 1]} : vector<2x64xf32> to vector<2x16xf32>
    %384 = math.tanh %383 : vector<2x16xf32>
    %385 = vector.extract_strided_slice %370 {offsets = [0, 48], sizes = [2, 16], strides = [1, 1]} : vector<2x64xf32> to vector<2x16xf32>
    %386 = arith.negf %385 : vector<2x16xf32>
    %387 = math.exp %386 : vector<2x16xf32>
    %cst_99 = arith.constant 1.000000e+00 : f32
    %388 = vector.broadcast %cst_99 : f32 to vector<2x16xf32>
    %389 = arith.addf %388, %387 : vector<2x16xf32>
    %390 = arith.divf %388, %389 : vector<2x16xf32>
    %391 = arith.mulf %382, %365 : vector<2x16xf32>
    %392 = arith.mulf %376, %384 : vector<2x16xf32>
    %393 = arith.addf %391, %392 : vector<2x16xf32>
    %394 = math.tanh %393 : vector<2x16xf32>
    %395 = arith.mulf %390, %394 : vector<2x16xf32>
    %396 = vector.extract_strided_slice %255 {offsets = [10, 0], sizes = [2, 64], strides = [1, 1]} : vector<20x64xf32> to vector<2x64xf32>
    %cst_100 = arith.constant dense<0.000000e+00> : vector<2x64xf32>
    %397 = tpu.matmul %395, %7, %cst_100 {dimension_numbers = #tpu.dot_dimension_numbers<[1], [0], [0], [1], [0, 0, 1, 1], [], []>} : vector<2x16xf32>, vector<16x64xf32>, vector<2x64xf32> -> vector<2x64xf32>
    %398 = arith.addf %396, %397 : vector<2x64xf32>
    %399 = vector.extract_strided_slice %398 {offsets = [0, 0], sizes = [2, 16], strides = [1, 1]} : vector<2x64xf32> to vector<2x16xf32>
    %400 = arith.negf %399 : vector<2x16xf32>
    %401 = math.exp %400 : vector<2x16xf32>
    %cst_101 = arith.constant 1.000000e+00 : f32
    %402 = vector.broadcast %cst_101 : f32 to vector<2x16xf32>
    %403 = arith.addf %402, %401 : vector<2x16xf32>
    %404 = arith.divf %402, %403 : vector<2x16xf32>
    %405 = vector.extract_strided_slice %398 {offsets = [0, 16], sizes = [2, 16], strides = [1, 1]} : vector<2x64xf32> to vector<2x16xf32>
    %406 = arith.negf %405 : vector<2x16xf32>
    %407 = math.exp %406 : vector<2x16xf32>
    %cst_102 = arith.constant 1.000000e+00 : f32
    %408 = vector.broadcast %cst_102 : f32 to vector<2x16xf32>
    %409 = arith.addf %408, %407 : vector<2x16xf32>
    %410 = arith.divf %408, %409 : vector<2x16xf32>
    %411 = vector.extract_strided_slice %398 {offsets = [0, 32], sizes = [2, 16], strides = [1, 1]} : vector<2x64xf32> to vector<2x16xf32>
    %412 = math.tanh %411 : vector<2x16xf32>
    %413 = vector.extract_strided_slice %398 {offsets = [0, 48], sizes = [2, 16], strides = [1, 1]} : vector<2x64xf32> to vector<2x16xf32>
    %414 = arith.negf %413 : vector<2x16xf32>
    %415 = math.exp %414 : vector<2x16xf32>
    %cst_103 = arith.constant 1.000000e+00 : f32
    %416 = vector.broadcast %cst_103 : f32 to vector<2x16xf32>
    %417 = arith.addf %416, %415 : vector<2x16xf32>
    %418 = arith.divf %416, %417 : vector<2x16xf32>
    %419 = arith.mulf %410, %393 : vector<2x16xf32>
    %420 = arith.mulf %404, %412 : vector<2x16xf32>
    %421 = arith.addf %419, %420 : vector<2x16xf32>
    %422 = math.tanh %421 : vector<2x16xf32>
    %423 = arith.mulf %418, %422 : vector<2x16xf32>
    %424 = vector.extract_strided_slice %255 {offsets = [12, 0], sizes = [2, 64], strides = [1, 1]} : vector<20x64xf32> to vector<2x64xf32>
    %cst_104 = arith.constant dense<0.000000e+00> : vector<2x64xf32>
    %425 = tpu.matmul %423, %7, %cst_104 {dimension_numbers = #tpu.dot_dimension_numbers<[1], [0], [0], [1], [0, 0, 1, 1], [], []>} : vector<2x16xf32>, vector<16x64xf32>, vector<2x64xf32> -> vector<2x64xf32>
    %426 = arith.addf %424, %425 : vector<2x64xf32>
    %427 = vector.extract_strided_slice %426 {offsets = [0, 0], sizes = [2, 16], strides = [1, 1]} : vector<2x64xf32> to vector<2x16xf32>
    %428 = arith.negf %427 : vector<2x16xf32>
    %429 = math.exp %428 : vector<2x16xf32>
    %cst_105 = arith.constant 1.000000e+00 : f32
    %430 = vector.broadcast %cst_105 : f32 to vector<2x16xf32>
    %431 = arith.addf %430, %429 : vector<2x16xf32>
    %432 = arith.divf %430, %431 : vector<2x16xf32>
    %433 = vector.extract_strided_slice %426 {offsets = [0, 16], sizes = [2, 16], strides = [1, 1]} : vector<2x64xf32> to vector<2x16xf32>
    %434 = arith.negf %433 : vector<2x16xf32>
    %435 = math.exp %434 : vector<2x16xf32>
    %cst_106 = arith.constant 1.000000e+00 : f32
    %436 = vector.broadcast %cst_106 : f32 to vector<2x16xf32>
    %437 = arith.addf %436, %435 : vector<2x16xf32>
    %438 = arith.divf %436, %437 : vector<2x16xf32>
    %439 = vector.extract_strided_slice %426 {offsets = [0, 32], sizes = [2, 16], strides = [1, 1]} : vector<2x64xf32> to vector<2x16xf32>
    %440 = math.tanh %439 : vector<2x16xf32>
    %441 = vector.extract_strided_slice %426 {offsets = [0, 48], sizes = [2, 16], strides = [1, 1]} : vector<2x64xf32> to vector<2x16xf32>
    %442 = arith.negf %441 : vector<2x16xf32>
    %443 = math.exp %442 : vector<2x16xf32>
    %cst_107 = arith.constant 1.000000e+00 : f32
    %444 = vector.broadcast %cst_107 : f32 to vector<2x16xf32>
    %445 = arith.addf %444, %443 : vector<2x16xf32>
    %446 = arith.divf %444, %445 : vector<2x16xf32>
    %447 = arith.mulf %438, %421 : vector<2x16xf32>
    %448 = arith.mulf %432, %440 : vector<2x16xf32>
    %449 = arith.addf %447, %448 : vector<2x16xf32>
    %450 = math.tanh %449 : vector<2x16xf32>
    %451 = arith.mulf %446, %450 : vector<2x16xf32>
    %452 = vector.extract_strided_slice %255 {offsets = [14, 0], sizes = [2, 64], strides = [1, 1]} : vector<20x64xf32> to vector<2x64xf32>
    %cst_108 = arith.constant dense<0.000000e+00> : vector<2x64xf32>
    %453 = tpu.matmul %451, %7, %cst_108 {dimension_numbers = #tpu.dot_dimension_numbers<[1], [0], [0], [1], [0, 0, 1, 1], [], []>} : vector<2x16xf32>, vector<16x64xf32>, vector<2x64xf32> -> vector<2x64xf32>
    %454 = arith.addf %452, %453 : vector<2x64xf32>
    %455 = vector.extract_strided_slice %454 {offsets = [0, 0], sizes = [2, 16], strides = [1, 1]} : vector<2x64xf32> to vector<2x16xf32>
    %456 = arith.negf %455 : vector<2x16xf32>
    %457 = math.exp %456 : vector<2x16xf32>
    %cst_109 = arith.constant 1.000000e+00 : f32
    %458 = vector.broadcast %cst_109 : f32 to vector<2x16xf32>
    %459 = arith.addf %458, %457 : vector<2x16xf32>
    %460 = arith.divf %458, %459 : vector<2x16xf32>
    %461 = vector.extract_strided_slice %454 {offsets = [0, 16], sizes = [2, 16], strides = [1, 1]} : vector<2x64xf32> to vector<2x16xf32>
    %462 = arith.negf %461 : vector<2x16xf32>
    %463 = math.exp %462 : vector<2x16xf32>
    %cst_110 = arith.constant 1.000000e+00 : f32
    %464 = vector.broadcast %cst_110 : f32 to vector<2x16xf32>
    %465 = arith.addf %464, %463 : vector<2x16xf32>
    %466 = arith.divf %464, %465 : vector<2x16xf32>
    %467 = vector.extract_strided_slice %454 {offsets = [0, 32], sizes = [2, 16], strides = [1, 1]} : vector<2x64xf32> to vector<2x16xf32>
    %468 = math.tanh %467 : vector<2x16xf32>
    %469 = vector.extract_strided_slice %454 {offsets = [0, 48], sizes = [2, 16], strides = [1, 1]} : vector<2x64xf32> to vector<2x16xf32>
    %470 = arith.negf %469 : vector<2x16xf32>
    %471 = math.exp %470 : vector<2x16xf32>
    %cst_111 = arith.constant 1.000000e+00 : f32
    %472 = vector.broadcast %cst_111 : f32 to vector<2x16xf32>
    %473 = arith.addf %472, %471 : vector<2x16xf32>
    %474 = arith.divf %472, %473 : vector<2x16xf32>
    %475 = arith.mulf %466, %449 : vector<2x16xf32>
    %476 = arith.mulf %460, %468 : vector<2x16xf32>
    %477 = arith.addf %475, %476 : vector<2x16xf32>
    %478 = math.tanh %477 : vector<2x16xf32>
    %479 = arith.mulf %474, %478 : vector<2x16xf32>
    %480 = vector.extract_strided_slice %255 {offsets = [16, 0], sizes = [2, 64], strides = [1, 1]} : vector<20x64xf32> to vector<2x64xf32>
    %cst_112 = arith.constant dense<0.000000e+00> : vector<2x64xf32>
    %481 = tpu.matmul %479, %7, %cst_112 {dimension_numbers = #tpu.dot_dimension_numbers<[1], [0], [0], [1], [0, 0, 1, 1], [], []>} : vector<2x16xf32>, vector<16x64xf32>, vector<2x64xf32> -> vector<2x64xf32>
    %482 = arith.addf %480, %481 : vector<2x64xf32>
    %483 = vector.extract_strided_slice %482 {offsets = [0, 0], sizes = [2, 16], strides = [1, 1]} : vector<2x64xf32> to vector<2x16xf32>
    %484 = arith.negf %483 : vector<2x16xf32>
    %485 = math.exp %484 : vector<2x16xf32>
    %cst_113 = arith.constant 1.000000e+00 : f32
    %486 = vector.broadcast %cst_113 : f32 to vector<2x16xf32>
    %487 = arith.addf %486, %485 : vector<2x16xf32>
    %488 = arith.divf %486, %487 : vector<2x16xf32>
    %489 = vector.extract_strided_slice %482 {offsets = [0, 16], sizes = [2, 16], strides = [1, 1]} : vector<2x64xf32> to vector<2x16xf32>
    %490 = arith.negf %489 : vector<2x16xf32>
    %491 = math.exp %490 : vector<2x16xf32>
    %cst_114 = arith.constant 1.000000e+00 : f32
    %492 = vector.broadcast %cst_114 : f32 to vector<2x16xf32>
    %493 = arith.addf %492, %491 : vector<2x16xf32>
    %494 = arith.divf %492, %493 : vector<2x16xf32>
    %495 = vector.extract_strided_slice %482 {offsets = [0, 32], sizes = [2, 16], strides = [1, 1]} : vector<2x64xf32> to vector<2x16xf32>
    %496 = math.tanh %495 : vector<2x16xf32>
    %497 = vector.extract_strided_slice %482 {offsets = [0, 48], sizes = [2, 16], strides = [1, 1]} : vector<2x64xf32> to vector<2x16xf32>
    %498 = arith.negf %497 : vector<2x16xf32>
    %499 = math.exp %498 : vector<2x16xf32>
    %cst_115 = arith.constant 1.000000e+00 : f32
    %500 = vector.broadcast %cst_115 : f32 to vector<2x16xf32>
    %501 = arith.addf %500, %499 : vector<2x16xf32>
    %502 = arith.divf %500, %501 : vector<2x16xf32>
    %503 = arith.mulf %494, %477 : vector<2x16xf32>
    %504 = arith.mulf %488, %496 : vector<2x16xf32>
    %505 = arith.addf %503, %504 : vector<2x16xf32>
    %506 = math.tanh %505 : vector<2x16xf32>
    %507 = arith.mulf %502, %506 : vector<2x16xf32>
    %508 = vector.extract_strided_slice %255 {offsets = [18, 0], sizes = [2, 64], strides = [1, 1]} : vector<20x64xf32> to vector<2x64xf32>
    %cst_116 = arith.constant dense<0.000000e+00> : vector<2x64xf32>
    %509 = tpu.matmul %507, %7, %cst_116 {dimension_numbers = #tpu.dot_dimension_numbers<[1], [0], [0], [1], [0, 0, 1, 1], [], []>} : vector<2x16xf32>, vector<16x64xf32>, vector<2x64xf32> -> vector<2x64xf32>
    %510 = arith.addf %508, %509 : vector<2x64xf32>
    %511 = vector.extract_strided_slice %510 {offsets = [0, 0], sizes = [2, 16], strides = [1, 1]} : vector<2x64xf32> to vector<2x16xf32>
    %512 = arith.negf %511 : vector<2x16xf32>
    %513 = math.exp %512 : vector<2x16xf32>
    %cst_117 = arith.constant 1.000000e+00 : f32
    %514 = vector.broadcast %cst_117 : f32 to vector<2x16xf32>
    %515 = arith.addf %514, %513 : vector<2x16xf32>
    %516 = arith.divf %514, %515 : vector<2x16xf32>
    %517 = vector.extract_strided_slice %510 {offsets = [0, 16], sizes = [2, 16], strides = [1, 1]} : vector<2x64xf32> to vector<2x16xf32>
    %518 = arith.negf %517 : vector<2x16xf32>
    %519 = math.exp %518 : vector<2x16xf32>
    %cst_118 = arith.constant 1.000000e+00 : f32
    %520 = vector.broadcast %cst_118 : f32 to vector<2x16xf32>
    %521 = arith.addf %520, %519 : vector<2x16xf32>
    %522 = arith.divf %520, %521 : vector<2x16xf32>
    %523 = vector.extract_strided_slice %510 {offsets = [0, 32], sizes = [2, 16], strides = [1, 1]} : vector<2x64xf32> to vector<2x16xf32>
    %524 = math.tanh %523 : vector<2x16xf32>
    %525 = vector.extract_strided_slice %510 {offsets = [0, 48], sizes = [2, 16], strides = [1, 1]} : vector<2x64xf32> to vector<2x16xf32>
    %526 = arith.negf %525 : vector<2x16xf32>
    %527 = math.exp %526 : vector<2x16xf32>
    %cst_119 = arith.constant 1.000000e+00 : f32
    %528 = vector.broadcast %cst_119 : f32 to vector<2x16xf32>
    %529 = arith.addf %528, %527 : vector<2x16xf32>
    %530 = arith.divf %528, %529 : vector<2x16xf32>
    %531 = arith.mulf %522, %505 : vector<2x16xf32>
    %532 = arith.mulf %516, %524 : vector<2x16xf32>
    %533 = arith.addf %531, %532 : vector<2x16xf32>
    %534 = math.tanh %533 : vector<2x16xf32>
    %535 = arith.mulf %530, %534 : vector<2x16xf32>
    %cst_120 = arith.constant 0.000000e+00 : f32
    %536 = vector.broadcast %cst_120 : f32 to vector<2x16xf32>
    %cst_121 = arith.constant 0.000000e+00 : f32
    %537 = vector.broadcast %cst_121 : f32 to vector<2x16xf32>
    %cst_122 = arith.constant dense<0.000000e+00> : vector<2x64xf32>
    %538 = tpu.matmul %283, %9, %cst_122 {dimension_numbers = #tpu.dot_dimension_numbers<[1], [0], [0], [1], [0, 0, 1, 1], [], []>} : vector<2x16xf32>, vector<16x64xf32>, vector<2x64xf32> -> vector<2x64xf32>
    %539 = vector.broadcast %11 : vector<1x64xf32> to vector<2x64xf32>
    %540 = arith.addf %538, %539 : vector<2x64xf32>
    %cst_123 = arith.constant dense<0.000000e+00> : vector<2x64xf32>
    %541 = tpu.matmul %536, %10, %cst_123 {dimension_numbers = #tpu.dot_dimension_numbers<[1], [0], [0], [1], [0, 0, 1, 1], [], []>} : vector<2x16xf32>, vector<16x64xf32>, vector<2x64xf32> -> vector<2x64xf32>
    %542 = arith.addf %540, %541 : vector<2x64xf32>
    %543 = vector.extract_strided_slice %542 {offsets = [0, 0], sizes = [2, 16], strides = [1, 1]} : vector<2x64xf32> to vector<2x16xf32>
    %544 = arith.negf %543 : vector<2x16xf32>
    %545 = math.exp %544 : vector<2x16xf32>
    %cst_124 = arith.constant 1.000000e+00 : f32
    %546 = vector.broadcast %cst_124 : f32 to vector<2x16xf32>
    %547 = arith.addf %546, %545 : vector<2x16xf32>
    %548 = arith.divf %546, %547 : vector<2x16xf32>
    %549 = vector.extract_strided_slice %542 {offsets = [0, 16], sizes = [2, 16], strides = [1, 1]} : vector<2x64xf32> to vector<2x16xf32>
    %550 = arith.negf %549 : vector<2x16xf32>
    %551 = math.exp %550 : vector<2x16xf32>
    %cst_125 = arith.constant 1.000000e+00 : f32
    %552 = vector.broadcast %cst_125 : f32 to vector<2x16xf32>
    %553 = arith.addf %552, %551 : vector<2x16xf32>
    %554 = arith.divf %552, %553 : vector<2x16xf32>
    %555 = vector.extract_strided_slice %542 {offsets = [0, 32], sizes = [2, 16], strides = [1, 1]} : vector<2x64xf32> to vector<2x16xf32>
    %556 = math.tanh %555 : vector<2x16xf32>
    %557 = vector.extract_strided_slice %542 {offsets = [0, 48], sizes = [2, 16], strides = [1, 1]} : vector<2x64xf32> to vector<2x16xf32>
    %558 = arith.negf %557 : vector<2x16xf32>
    %559 = math.exp %558 : vector<2x16xf32>
    %cst_126 = arith.constant 1.000000e+00 : f32
    %560 = vector.broadcast %cst_126 : f32 to vector<2x16xf32>
    %561 = arith.addf %560, %559 : vector<2x16xf32>
    %562 = arith.divf %560, %561 : vector<2x16xf32>
    %563 = arith.mulf %554, %537 : vector<2x16xf32>
    %564 = arith.mulf %548, %556 : vector<2x16xf32>
    %565 = arith.addf %563, %564 : vector<2x16xf32>
    %566 = math.tanh %565 : vector<2x16xf32>
    %567 = arith.mulf %562, %566 : vector<2x16xf32>
    %cst_127 = arith.constant dense<0.000000e+00> : vector<2x64xf32>
    %568 = tpu.matmul %311, %9, %cst_127 {dimension_numbers = #tpu.dot_dimension_numbers<[1], [0], [0], [1], [0, 0, 1, 1], [], []>} : vector<2x16xf32>, vector<16x64xf32>, vector<2x64xf32> -> vector<2x64xf32>
    %569 = vector.broadcast %11 : vector<1x64xf32> to vector<2x64xf32>
    %570 = arith.addf %568, %569 : vector<2x64xf32>
    %cst_128 = arith.constant dense<0.000000e+00> : vector<2x64xf32>
    %571 = tpu.matmul %567, %10, %cst_128 {dimension_numbers = #tpu.dot_dimension_numbers<[1], [0], [0], [1], [0, 0, 1, 1], [], []>} : vector<2x16xf32>, vector<16x64xf32>, vector<2x64xf32> -> vector<2x64xf32>
    %572 = arith.addf %570, %571 : vector<2x64xf32>
    %573 = vector.extract_strided_slice %572 {offsets = [0, 0], sizes = [2, 16], strides = [1, 1]} : vector<2x64xf32> to vector<2x16xf32>
    %574 = arith.negf %573 : vector<2x16xf32>
    %575 = math.exp %574 : vector<2x16xf32>
    %cst_129 = arith.constant 1.000000e+00 : f32
    %576 = vector.broadcast %cst_129 : f32 to vector<2x16xf32>
    %577 = arith.addf %576, %575 : vector<2x16xf32>
    %578 = arith.divf %576, %577 : vector<2x16xf32>
    %579 = vector.extract_strided_slice %572 {offsets = [0, 16], sizes = [2, 16], strides = [1, 1]} : vector<2x64xf32> to vector<2x16xf32>
    %580 = arith.negf %579 : vector<2x16xf32>
    %581 = math.exp %580 : vector<2x16xf32>
    %cst_130 = arith.constant 1.000000e+00 : f32
    %582 = vector.broadcast %cst_130 : f32 to vector<2x16xf32>
    %583 = arith.addf %582, %581 : vector<2x16xf32>
    %584 = arith.divf %582, %583 : vector<2x16xf32>
    %585 = vector.extract_strided_slice %572 {offsets = [0, 32], sizes = [2, 16], strides = [1, 1]} : vector<2x64xf32> to vector<2x16xf32>
    %586 = math.tanh %585 : vector<2x16xf32>
    %587 = vector.extract_strided_slice %572 {offsets = [0, 48], sizes = [2, 16], strides = [1, 1]} : vector<2x64xf32> to vector<2x16xf32>
    %588 = arith.negf %587 : vector<2x16xf32>
    %589 = math.exp %588 : vector<2x16xf32>
    %cst_131 = arith.constant 1.000000e+00 : f32
    %590 = vector.broadcast %cst_131 : f32 to vector<2x16xf32>
    %591 = arith.addf %590, %589 : vector<2x16xf32>
    %592 = arith.divf %590, %591 : vector<2x16xf32>
    %593 = arith.mulf %584, %565 : vector<2x16xf32>
    %594 = arith.mulf %578, %586 : vector<2x16xf32>
    %595 = arith.addf %593, %594 : vector<2x16xf32>
    %596 = math.tanh %595 : vector<2x16xf32>
    %597 = arith.mulf %592, %596 : vector<2x16xf32>
    %cst_132 = arith.constant dense<0.000000e+00> : vector<2x64xf32>
    %598 = tpu.matmul %339, %9, %cst_132 {dimension_numbers = #tpu.dot_dimension_numbers<[1], [0], [0], [1], [0, 0, 1, 1], [], []>} : vector<2x16xf32>, vector<16x64xf32>, vector<2x64xf32> -> vector<2x64xf32>
    %599 = vector.broadcast %11 : vector<1x64xf32> to vector<2x64xf32>
    %600 = arith.addf %598, %599 : vector<2x64xf32>
    %cst_133 = arith.constant dense<0.000000e+00> : vector<2x64xf32>
    %601 = tpu.matmul %597, %10, %cst_133 {dimension_numbers = #tpu.dot_dimension_numbers<[1], [0], [0], [1], [0, 0, 1, 1], [], []>} : vector<2x16xf32>, vector<16x64xf32>, vector<2x64xf32> -> vector<2x64xf32>
    %602 = arith.addf %600, %601 : vector<2x64xf32>
    %603 = vector.extract_strided_slice %602 {offsets = [0, 0], sizes = [2, 16], strides = [1, 1]} : vector<2x64xf32> to vector<2x16xf32>
    %604 = arith.negf %603 : vector<2x16xf32>
    %605 = math.exp %604 : vector<2x16xf32>
    %cst_134 = arith.constant 1.000000e+00 : f32
    %606 = vector.broadcast %cst_134 : f32 to vector<2x16xf32>
    %607 = arith.addf %606, %605 : vector<2x16xf32>
    %608 = arith.divf %606, %607 : vector<2x16xf32>
    %609 = vector.extract_strided_slice %602 {offsets = [0, 16], sizes = [2, 16], strides = [1, 1]} : vector<2x64xf32> to vector<2x16xf32>
    %610 = arith.negf %609 : vector<2x16xf32>
    %611 = math.exp %610 : vector<2x16xf32>
    %cst_135 = arith.constant 1.000000e+00 : f32
    %612 = vector.broadcast %cst_135 : f32 to vector<2x16xf32>
    %613 = arith.addf %612, %611 : vector<2x16xf32>
    %614 = arith.divf %612, %613 : vector<2x16xf32>
    %615 = vector.extract_strided_slice %602 {offsets = [0, 32], sizes = [2, 16], strides = [1, 1]} : vector<2x64xf32> to vector<2x16xf32>
    %616 = math.tanh %615 : vector<2x16xf32>
    %617 = vector.extract_strided_slice %602 {offsets = [0, 48], sizes = [2, 16], strides = [1, 1]} : vector<2x64xf32> to vector<2x16xf32>
    %618 = arith.negf %617 : vector<2x16xf32>
    %619 = math.exp %618 : vector<2x16xf32>
    %cst_136 = arith.constant 1.000000e+00 : f32
    %620 = vector.broadcast %cst_136 : f32 to vector<2x16xf32>
    %621 = arith.addf %620, %619 : vector<2x16xf32>
    %622 = arith.divf %620, %621 : vector<2x16xf32>
    %623 = arith.mulf %614, %595 : vector<2x16xf32>
    %624 = arith.mulf %608, %616 : vector<2x16xf32>
    %625 = arith.addf %623, %624 : vector<2x16xf32>
    %626 = math.tanh %625 : vector<2x16xf32>
    %627 = arith.mulf %622, %626 : vector<2x16xf32>
    %cst_137 = arith.constant dense<0.000000e+00> : vector<2x64xf32>
    %628 = tpu.matmul %367, %9, %cst_137 {dimension_numbers = #tpu.dot_dimension_numbers<[1], [0], [0], [1], [0, 0, 1, 1], [], []>} : vector<2x16xf32>, vector<16x64xf32>, vector<2x64xf32> -> vector<2x64xf32>
    %629 = vector.broadcast %11 : vector<1x64xf32> to vector<2x64xf32>
    %630 = arith.addf %628, %629 : vector<2x64xf32>
    %cst_138 = arith.constant dense<0.000000e+00> : vector<2x64xf32>
    %631 = tpu.matmul %627, %10, %cst_138 {dimension_numbers = #tpu.dot_dimension_numbers<[1], [0], [0], [1], [0, 0, 1, 1], [], []>} : vector<2x16xf32>, vector<16x64xf32>, vector<2x64xf32> -> vector<2x64xf32>
    %632 = arith.addf %630, %631 : vector<2x64xf32>
    %633 = vector.extract_strided_slice %632 {offsets = [0, 0], sizes = [2, 16], strides = [1, 1]} : vector<2x64xf32> to vector<2x16xf32>
    %634 = arith.negf %633 : vector<2x16xf32>
    %635 = math.exp %634 : vector<2x16xf32>
    %cst_139 = arith.constant 1.000000e+00 : f32
    %636 = vector.broadcast %cst_139 : f32 to vector<2x16xf32>
    %637 = arith.addf %636, %635 : vector<2x16xf32>
    %638 = arith.divf %636, %637 : vector<2x16xf32>
    %639 = vector.extract_strided_slice %632 {offsets = [0, 16], sizes = [2, 16], strides = [1, 1]} : vector<2x64xf32> to vector<2x16xf32>
    %640 = arith.negf %639 : vector<2x16xf32>
    %641 = math.exp %640 : vector<2x16xf32>
    %cst_140 = arith.constant 1.000000e+00 : f32
    %642 = vector.broadcast %cst_140 : f32 to vector<2x16xf32>
    %643 = arith.addf %642, %641 : vector<2x16xf32>
    %644 = arith.divf %642, %643 : vector<2x16xf32>
    %645 = vector.extract_strided_slice %632 {offsets = [0, 32], sizes = [2, 16], strides = [1, 1]} : vector<2x64xf32> to vector<2x16xf32>
    %646 = math.tanh %645 : vector<2x16xf32>
    %647 = vector.extract_strided_slice %632 {offsets = [0, 48], sizes = [2, 16], strides = [1, 1]} : vector<2x64xf32> to vector<2x16xf32>
    %648 = arith.negf %647 : vector<2x16xf32>
    %649 = math.exp %648 : vector<2x16xf32>
    %cst_141 = arith.constant 1.000000e+00 : f32
    %650 = vector.broadcast %cst_141 : f32 to vector<2x16xf32>
    %651 = arith.addf %650, %649 : vector<2x16xf32>
    %652 = arith.divf %650, %651 : vector<2x16xf32>
    %653 = arith.mulf %644, %625 : vector<2x16xf32>
    %654 = arith.mulf %638, %646 : vector<2x16xf32>
    %655 = arith.addf %653, %654 : vector<2x16xf32>
    %656 = math.tanh %655 : vector<2x16xf32>
    %657 = arith.mulf %652, %656 : vector<2x16xf32>
    %cst_142 = arith.constant dense<0.000000e+00> : vector<2x64xf32>
    %658 = tpu.matmul %395, %9, %cst_142 {dimension_numbers = #tpu.dot_dimension_numbers<[1], [0], [0], [1], [0, 0, 1, 1], [], []>} : vector<2x16xf32>, vector<16x64xf32>, vector<2x64xf32> -> vector<2x64xf32>
    %659 = vector.broadcast %11 : vector<1x64xf32> to vector<2x64xf32>
    %660 = arith.addf %658, %659 : vector<2x64xf32>
    %cst_143 = arith.constant dense<0.000000e+00> : vector<2x64xf32>
    %661 = tpu.matmul %657, %10, %cst_143 {dimension_numbers = #tpu.dot_dimension_numbers<[1], [0], [0], [1], [0, 0, 1, 1], [], []>} : vector<2x16xf32>, vector<16x64xf32>, vector<2x64xf32> -> vector<2x64xf32>
    %662 = arith.addf %660, %661 : vector<2x64xf32>
    %663 = vector.extract_strided_slice %662 {offsets = [0, 0], sizes = [2, 16], strides = [1, 1]} : vector<2x64xf32> to vector<2x16xf32>
    %664 = arith.negf %663 : vector<2x16xf32>
    %665 = math.exp %664 : vector<2x16xf32>
    %cst_144 = arith.constant 1.000000e+00 : f32
    %666 = vector.broadcast %cst_144 : f32 to vector<2x16xf32>
    %667 = arith.addf %666, %665 : vector<2x16xf32>
    %668 = arith.divf %666, %667 : vector<2x16xf32>
    %669 = vector.extract_strided_slice %662 {offsets = [0, 16], sizes = [2, 16], strides = [1, 1]} : vector<2x64xf32> to vector<2x16xf32>
    %670 = arith.negf %669 : vector<2x16xf32>
    %671 = math.exp %670 : vector<2x16xf32>
    %cst_145 = arith.constant 1.000000e+00 : f32
    %672 = vector.broadcast %cst_145 : f32 to vector<2x16xf32>
    %673 = arith.addf %672, %671 : vector<2x16xf32>
    %674 = arith.divf %672, %673 : vector<2x16xf32>
    %675 = vector.extract_strided_slice %662 {offsets = [0, 32], sizes = [2, 16], strides = [1, 1]} : vector<2x64xf32> to vector<2x16xf32>
    %676 = math.tanh %675 : vector<2x16xf32>
    %677 = vector.extract_strided_slice %662 {offsets = [0, 48], sizes = [2, 16], strides = [1, 1]} : vector<2x64xf32> to vector<2x16xf32>
    %678 = arith.negf %677 : vector<2x16xf32>
    %679 = math.exp %678 : vector<2x16xf32>
    %cst_146 = arith.constant 1.000000e+00 : f32
    %680 = vector.broadcast %cst_146 : f32 to vector<2x16xf32>
    %681 = arith.addf %680, %679 : vector<2x16xf32>
    %682 = arith.divf %680, %681 : vector<2x16xf32>
    %683 = arith.mulf %674, %655 : vector<2x16xf32>
    %684 = arith.mulf %668, %676 : vector<2x16xf32>
    %685 = arith.addf %683, %684 : vector<2x16xf32>
    %686 = math.tanh %685 : vector<2x16xf32>
    %687 = arith.mulf %682, %686 : vector<2x16xf32>
    %cst_147 = arith.constant dense<0.000000e+00> : vector<2x64xf32>
    %688 = tpu.matmul %423, %9, %cst_147 {dimension_numbers = #tpu.dot_dimension_numbers<[1], [0], [0], [1], [0, 0, 1, 1], [], []>} : vector<2x16xf32>, vector<16x64xf32>, vector<2x64xf32> -> vector<2x64xf32>
    %689 = vector.broadcast %11 : vector<1x64xf32> to vector<2x64xf32>
    %690 = arith.addf %688, %689 : vector<2x64xf32>
    %cst_148 = arith.constant dense<0.000000e+00> : vector<2x64xf32>
    %691 = tpu.matmul %687, %10, %cst_148 {dimension_numbers = #tpu.dot_dimension_numbers<[1], [0], [0], [1], [0, 0, 1, 1], [], []>} : vector<2x16xf32>, vector<16x64xf32>, vector<2x64xf32> -> vector<2x64xf32>
    %692 = arith.addf %690, %691 : vector<2x64xf32>
    %693 = vector.extract_strided_slice %692 {offsets = [0, 0], sizes = [2, 16], strides = [1, 1]} : vector<2x64xf32> to vector<2x16xf32>
    %694 = arith.negf %693 : vector<2x16xf32>
    %695 = math.exp %694 : vector<2x16xf32>
    %cst_149 = arith.constant 1.000000e+00 : f32
    %696 = vector.broadcast %cst_149 : f32 to vector<2x16xf32>
    %697 = arith.addf %696, %695 : vector<2x16xf32>
    %698 = arith.divf %696, %697 : vector<2x16xf32>
    %699 = vector.extract_strided_slice %692 {offsets = [0, 16], sizes = [2, 16], strides = [1, 1]} : vector<2x64xf32> to vector<2x16xf32>
    %700 = arith.negf %699 : vector<2x16xf32>
    %701 = math.exp %700 : vector<2x16xf32>
    %cst_150 = arith.constant 1.000000e+00 : f32
    %702 = vector.broadcast %cst_150 : f32 to vector<2x16xf32>
    %703 = arith.addf %702, %701 : vector<2x16xf32>
    %704 = arith.divf %702, %703 : vector<2x16xf32>
    %705 = vector.extract_strided_slice %692 {offsets = [0, 32], sizes = [2, 16], strides = [1, 1]} : vector<2x64xf32> to vector<2x16xf32>
    %706 = math.tanh %705 : vector<2x16xf32>
    %707 = vector.extract_strided_slice %692 {offsets = [0, 48], sizes = [2, 16], strides = [1, 1]} : vector<2x64xf32> to vector<2x16xf32>
    %708 = arith.negf %707 : vector<2x16xf32>
    %709 = math.exp %708 : vector<2x16xf32>
    %cst_151 = arith.constant 1.000000e+00 : f32
    %710 = vector.broadcast %cst_151 : f32 to vector<2x16xf32>
    %711 = arith.addf %710, %709 : vector<2x16xf32>
    %712 = arith.divf %710, %711 : vector<2x16xf32>
    %713 = arith.mulf %704, %685 : vector<2x16xf32>
    %714 = arith.mulf %698, %706 : vector<2x16xf32>
    %715 = arith.addf %713, %714 : vector<2x16xf32>
    %716 = math.tanh %715 : vector<2x16xf32>
    %717 = arith.mulf %712, %716 : vector<2x16xf32>
    %cst_152 = arith.constant dense<0.000000e+00> : vector<2x64xf32>
    %718 = tpu.matmul %451, %9, %cst_152 {dimension_numbers = #tpu.dot_dimension_numbers<[1], [0], [0], [1], [0, 0, 1, 1], [], []>} : vector<2x16xf32>, vector<16x64xf32>, vector<2x64xf32> -> vector<2x64xf32>
    %719 = vector.broadcast %11 : vector<1x64xf32> to vector<2x64xf32>
    %720 = arith.addf %718, %719 : vector<2x64xf32>
    %cst_153 = arith.constant dense<0.000000e+00> : vector<2x64xf32>
    %721 = tpu.matmul %717, %10, %cst_153 {dimension_numbers = #tpu.dot_dimension_numbers<[1], [0], [0], [1], [0, 0, 1, 1], [], []>} : vector<2x16xf32>, vector<16x64xf32>, vector<2x64xf32> -> vector<2x64xf32>
    %722 = arith.addf %720, %721 : vector<2x64xf32>
    %723 = vector.extract_strided_slice %722 {offsets = [0, 0], sizes = [2, 16], strides = [1, 1]} : vector<2x64xf32> to vector<2x16xf32>
    %724 = arith.negf %723 : vector<2x16xf32>
    %725 = math.exp %724 : vector<2x16xf32>
    %cst_154 = arith.constant 1.000000e+00 : f32
    %726 = vector.broadcast %cst_154 : f32 to vector<2x16xf32>
    %727 = arith.addf %726, %725 : vector<2x16xf32>
    %728 = arith.divf %726, %727 : vector<2x16xf32>
    %729 = vector.extract_strided_slice %722 {offsets = [0, 16], sizes = [2, 16], strides = [1, 1]} : vector<2x64xf32> to vector<2x16xf32>
    %730 = arith.negf %729 : vector<2x16xf32>
    %731 = math.exp %730 : vector<2x16xf32>
    %cst_155 = arith.constant 1.000000e+00 : f32
    %732 = vector.broadcast %cst_155 : f32 to vector<2x16xf32>
    %733 = arith.addf %732, %731 : vector<2x16xf32>
    %734 = arith.divf %732, %733 : vector<2x16xf32>
    %735 = vector.extract_strided_slice %722 {offsets = [0, 32], sizes = [2, 16], strides = [1, 1]} : vector<2x64xf32> to vector<2x16xf32>
    %736 = math.tanh %735 : vector<2x16xf32>
    %737 = vector.extract_strided_slice %722 {offsets = [0, 48], sizes = [2, 16], strides = [1, 1]} : vector<2x64xf32> to vector<2x16xf32>
    %738 = arith.negf %737 : vector<2x16xf32>
    %739 = math.exp %738 : vector<2x16xf32>
    %cst_156 = arith.constant 1.000000e+00 : f32
    %740 = vector.broadcast %cst_156 : f32 to vector<2x16xf32>
    %741 = arith.addf %740, %739 : vector<2x16xf32>
    %742 = arith.divf %740, %741 : vector<2x16xf32>
    %743 = arith.mulf %734, %715 : vector<2x16xf32>
    %744 = arith.mulf %728, %736 : vector<2x16xf32>
    %745 = arith.addf %743, %744 : vector<2x16xf32>
    %746 = math.tanh %745 : vector<2x16xf32>
    %747 = arith.mulf %742, %746 : vector<2x16xf32>
    %cst_157 = arith.constant dense<0.000000e+00> : vector<2x64xf32>
    %748 = tpu.matmul %479, %9, %cst_157 {dimension_numbers = #tpu.dot_dimension_numbers<[1], [0], [0], [1], [0, 0, 1, 1], [], []>} : vector<2x16xf32>, vector<16x64xf32>, vector<2x64xf32> -> vector<2x64xf32>
    %749 = vector.broadcast %11 : vector<1x64xf32> to vector<2x64xf32>
    %750 = arith.addf %748, %749 : vector<2x64xf32>
    %cst_158 = arith.constant dense<0.000000e+00> : vector<2x64xf32>
    %751 = tpu.matmul %747, %10, %cst_158 {dimension_numbers = #tpu.dot_dimension_numbers<[1], [0], [0], [1], [0, 0, 1, 1], [], []>} : vector<2x16xf32>, vector<16x64xf32>, vector<2x64xf32> -> vector<2x64xf32>
    %752 = arith.addf %750, %751 : vector<2x64xf32>
    %753 = vector.extract_strided_slice %752 {offsets = [0, 0], sizes = [2, 16], strides = [1, 1]} : vector<2x64xf32> to vector<2x16xf32>
    %754 = arith.negf %753 : vector<2x16xf32>
    %755 = math.exp %754 : vector<2x16xf32>
    %cst_159 = arith.constant 1.000000e+00 : f32
    %756 = vector.broadcast %cst_159 : f32 to vector<2x16xf32>
    %757 = arith.addf %756, %755 : vector<2x16xf32>
    %758 = arith.divf %756, %757 : vector<2x16xf32>
    %759 = vector.extract_strided_slice %752 {offsets = [0, 16], sizes = [2, 16], strides = [1, 1]} : vector<2x64xf32> to vector<2x16xf32>
    %760 = arith.negf %759 : vector<2x16xf32>
    %761 = math.exp %760 : vector<2x16xf32>
    %cst_160 = arith.constant 1.000000e+00 : f32
    %762 = vector.broadcast %cst_160 : f32 to vector<2x16xf32>
    %763 = arith.addf %762, %761 : vector<2x16xf32>
    %764 = arith.divf %762, %763 : vector<2x16xf32>
    %765 = vector.extract_strided_slice %752 {offsets = [0, 32], sizes = [2, 16], strides = [1, 1]} : vector<2x64xf32> to vector<2x16xf32>
    %766 = math.tanh %765 : vector<2x16xf32>
    %767 = vector.extract_strided_slice %752 {offsets = [0, 48], sizes = [2, 16], strides = [1, 1]} : vector<2x64xf32> to vector<2x16xf32>
    %768 = arith.negf %767 : vector<2x16xf32>
    %769 = math.exp %768 : vector<2x16xf32>
    %cst_161 = arith.constant 1.000000e+00 : f32
    %770 = vector.broadcast %cst_161 : f32 to vector<2x16xf32>
    %771 = arith.addf %770, %769 : vector<2x16xf32>
    %772 = arith.divf %770, %771 : vector<2x16xf32>
    %773 = arith.mulf %764, %745 : vector<2x16xf32>
    %774 = arith.mulf %758, %766 : vector<2x16xf32>
    %775 = arith.addf %773, %774 : vector<2x16xf32>
    %776 = math.tanh %775 : vector<2x16xf32>
    %777 = arith.mulf %772, %776 : vector<2x16xf32>
    %cst_162 = arith.constant dense<0.000000e+00> : vector<2x64xf32>
    %778 = tpu.matmul %507, %9, %cst_162 {dimension_numbers = #tpu.dot_dimension_numbers<[1], [0], [0], [1], [0, 0, 1, 1], [], []>} : vector<2x16xf32>, vector<16x64xf32>, vector<2x64xf32> -> vector<2x64xf32>
    %779 = vector.broadcast %11 : vector<1x64xf32> to vector<2x64xf32>
    %780 = arith.addf %778, %779 : vector<2x64xf32>
    %cst_163 = arith.constant dense<0.000000e+00> : vector<2x64xf32>
    %781 = tpu.matmul %777, %10, %cst_163 {dimension_numbers = #tpu.dot_dimension_numbers<[1], [0], [0], [1], [0, 0, 1, 1], [], []>} : vector<2x16xf32>, vector<16x64xf32>, vector<2x64xf32> -> vector<2x64xf32>
    %782 = arith.addf %780, %781 : vector<2x64xf32>
    %783 = vector.extract_strided_slice %782 {offsets = [0, 0], sizes = [2, 16], strides = [1, 1]} : vector<2x64xf32> to vector<2x16xf32>
    %784 = arith.negf %783 : vector<2x16xf32>
    %785 = math.exp %784 : vector<2x16xf32>
    %cst_164 = arith.constant 1.000000e+00 : f32
    %786 = vector.broadcast %cst_164 : f32 to vector<2x16xf32>
    %787 = arith.addf %786, %785 : vector<2x16xf32>
    %788 = arith.divf %786, %787 : vector<2x16xf32>
    %789 = vector.extract_strided_slice %782 {offsets = [0, 16], sizes = [2, 16], strides = [1, 1]} : vector<2x64xf32> to vector<2x16xf32>
    %790 = arith.negf %789 : vector<2x16xf32>
    %791 = math.exp %790 : vector<2x16xf32>
    %cst_165 = arith.constant 1.000000e+00 : f32
    %792 = vector.broadcast %cst_165 : f32 to vector<2x16xf32>
    %793 = arith.addf %792, %791 : vector<2x16xf32>
    %794 = arith.divf %792, %793 : vector<2x16xf32>
    %795 = vector.extract_strided_slice %782 {offsets = [0, 32], sizes = [2, 16], strides = [1, 1]} : vector<2x64xf32> to vector<2x16xf32>
    %796 = math.tanh %795 : vector<2x16xf32>
    %797 = vector.extract_strided_slice %782 {offsets = [0, 48], sizes = [2, 16], strides = [1, 1]} : vector<2x64xf32> to vector<2x16xf32>
    %798 = arith.negf %797 : vector<2x16xf32>
    %799 = math.exp %798 : vector<2x16xf32>
    %cst_166 = arith.constant 1.000000e+00 : f32
    %800 = vector.broadcast %cst_166 : f32 to vector<2x16xf32>
    %801 = arith.addf %800, %799 : vector<2x16xf32>
    %802 = arith.divf %800, %801 : vector<2x16xf32>
    %803 = arith.mulf %794, %775 : vector<2x16xf32>
    %804 = arith.mulf %788, %796 : vector<2x16xf32>
    %805 = arith.addf %803, %804 : vector<2x16xf32>
    %806 = math.tanh %805 : vector<2x16xf32>
    %807 = arith.mulf %802, %806 : vector<2x16xf32>
    %cst_167 = arith.constant dense<0.000000e+00> : vector<2x64xf32>
    %808 = tpu.matmul %535, %9, %cst_167 {dimension_numbers = #tpu.dot_dimension_numbers<[1], [0], [0], [1], [0, 0, 1, 1], [], []>} : vector<2x16xf32>, vector<16x64xf32>, vector<2x64xf32> -> vector<2x64xf32>
    %809 = vector.broadcast %11 : vector<1x64xf32> to vector<2x64xf32>
    %810 = arith.addf %808, %809 : vector<2x64xf32>
    %cst_168 = arith.constant dense<0.000000e+00> : vector<2x64xf32>
    %811 = tpu.matmul %807, %10, %cst_168 {dimension_numbers = #tpu.dot_dimension_numbers<[1], [0], [0], [1], [0, 0, 1, 1], [], []>} : vector<2x16xf32>, vector<16x64xf32>, vector<2x64xf32> -> vector<2x64xf32>
    %812 = arith.addf %810, %811 : vector<2x64xf32>
    %813 = vector.extract_strided_slice %812 {offsets = [0, 0], sizes = [2, 16], strides = [1, 1]} : vector<2x64xf32> to vector<2x16xf32>
    %814 = arith.negf %813 : vector<2x16xf32>
    %815 = math.exp %814 : vector<2x16xf32>
    %cst_169 = arith.constant 1.000000e+00 : f32
    %816 = vector.broadcast %cst_169 : f32 to vector<2x16xf32>
    %817 = arith.addf %816, %815 : vector<2x16xf32>
    %818 = arith.divf %816, %817 : vector<2x16xf32>
    %819 = vector.extract_strided_slice %812 {offsets = [0, 16], sizes = [2, 16], strides = [1, 1]} : vector<2x64xf32> to vector<2x16xf32>
    %820 = arith.negf %819 : vector<2x16xf32>
    %821 = math.exp %820 : vector<2x16xf32>
    %cst_170 = arith.constant 1.000000e+00 : f32
    %822 = vector.broadcast %cst_170 : f32 to vector<2x16xf32>
    %823 = arith.addf %822, %821 : vector<2x16xf32>
    %824 = arith.divf %822, %823 : vector<2x16xf32>
    %825 = vector.extract_strided_slice %812 {offsets = [0, 32], sizes = [2, 16], strides = [1, 1]} : vector<2x64xf32> to vector<2x16xf32>
    %826 = math.tanh %825 : vector<2x16xf32>
    %827 = vector.extract_strided_slice %812 {offsets = [0, 48], sizes = [2, 16], strides = [1, 1]} : vector<2x64xf32> to vector<2x16xf32>
    %828 = arith.negf %827 : vector<2x16xf32>
    %829 = math.exp %828 : vector<2x16xf32>
    %cst_171 = arith.constant 1.000000e+00 : f32
    %830 = vector.broadcast %cst_171 : f32 to vector<2x16xf32>
    %831 = arith.addf %830, %829 : vector<2x16xf32>
    %832 = arith.divf %830, %831 : vector<2x16xf32>
    %833 = arith.mulf %824, %805 : vector<2x16xf32>
    %834 = arith.mulf %818, %826 : vector<2x16xf32>
    %835 = arith.addf %833, %834 : vector<2x16xf32>
    %836 = math.tanh %835 : vector<2x16xf32>
    %837 = arith.mulf %832, %836 : vector<2x16xf32>
    %cst_172 = arith.constant dense<0.000000e+00> : vector<2x32xf32>
    %838 = tpu.matmul %2, %12, %cst_172 {dimension_numbers = #tpu.dot_dimension_numbers<[1], [0], [0], [1], [0, 0, 1, 1], [], []>} : vector<2x12xf32>, vector<12x32xf32>, vector<2x32xf32> -> vector<2x32xf32>
    %839 = vector.broadcast %13 : vector<1x32xf32> to vector<2x32xf32>
    %840 = arith.addf %838, %839 : vector<2x32xf32>
    %cst_173 = arith.constant 0.000000e+00 : f32
    %841 = vector.broadcast %cst_173 : f32 to vector<2x32xf32>
    %842 = arith.maximumf %840, %841 : vector<2x32xf32>
    %cst_174 = arith.constant dense<0.000000e+00> : vector<2x16xf32>
    %843 = tpu.matmul %842, %14, %cst_174 {dimension_numbers = #tpu.dot_dimension_numbers<[1], [0], [0], [1], [0, 0, 1, 1], [], []>} : vector<2x32xf32>, vector<32x16xf32>, vector<2x16xf32> -> vector<2x16xf32>
    %844 = vector.broadcast %15 : vector<1x16xf32> to vector<2x16xf32>
    %845 = arith.addf %843, %844 : vector<2x16xf32>
    %cst_175 = arith.constant 0.000000e+00 : f32
    %846 = vector.broadcast %cst_175 : f32 to vector<2x16xf32>
    %847 = arith.maximumf %845, %846 : vector<2x16xf32>
    %cst_176 = arith.constant dense<0.000000e+00> : vector<2x64xf32>
    %848 = tpu.matmul %250, %16, %cst_176 {dimension_numbers = #tpu.dot_dimension_numbers<[1], [0], [0], [1], [0, 0, 1, 1], [], []>} : vector<2x32xf32>, vector<32x64xf32>, vector<2x64xf32> -> vector<2x64xf32>
    %cst_177 = arith.constant dense<0.000000e+00> : vector<2x64xf32>
    %849 = tpu.matmul %837, %17, %cst_177 {dimension_numbers = #tpu.dot_dimension_numbers<[1], [0], [0], [1], [0, 0, 1, 1], [], []>} : vector<2x16xf32>, vector<16x64xf32>, vector<2x64xf32> -> vector<2x64xf32>
    %850 = arith.addf %848, %849 : vector<2x64xf32>
    %cst_178 = arith.constant dense<0.000000e+00> : vector<2x64xf32>
    %851 = tpu.matmul %847, %18, %cst_178 {dimension_numbers = #tpu.dot_dimension_numbers<[1], [0], [0], [1], [0, 0, 1, 1], [], []>} : vector<2x16xf32>, vector<16x64xf32>, vector<2x64xf32> -> vector<2x64xf32>
    %852 = arith.addf %850, %851 : vector<2x64xf32>
    %853 = vector.broadcast %19 : vector<1x64xf32> to vector<2x64xf32>
    %854 = arith.addf %852, %853 : vector<2x64xf32>
    %cst_179 = arith.constant 0.000000e+00 : f32
    %855 = vector.broadcast %cst_179 : f32 to vector<2x64xf32>
    %856 = arith.maximumf %854, %855 : vector<2x64xf32>
    %cst_180 = arith.constant dense<0.000000e+00> : vector<2x1xf32>
    %857 = tpu.matmul %856, %20, %cst_180 {dimension_numbers = #tpu.dot_dimension_numbers<[1], [0], [0], [1], [0, 0, 1, 1], [], []>} : vector<2x64xf32>, vector<64x1xf32>, vector<2x1xf32> -> vector<2x1xf32>
    %858 = vector.broadcast %21 : vector<1x1xf32> to vector<2x1xf32>
    %859 = arith.addf %857, %858 : vector<2x1xf32>
    %c0_181 = arith.constant 0 : index
    %c0_182 = arith.constant 0 : index
    %860 = vector.load %arg22[%c0_181, %c0_182] : memref<2x1xf32, #tpu.memory_space<vmem>>, vector<2x1xf32>
    tpu.vector_store %arg22[%c0_181, %c0_182], %859 {strides = array<i32>} : memref<2x1xf32, #tpu.memory_space<vmem>>, vector<2x1xf32>,
    return
  }
}

</mosaic_0001>

<llo_original>
// kernel: lstm_model_forward.1
$region0: #{lstm_model_forward.1}
  #allocation0 [shape = 'u32[]', space=smem, size = 0x4, offset = 0x4, fixed_abs, tag = 'smem constant byte address 0x4 - core index']
  #allocation1 [shape = 'u32[144,128]{1,0:T(1,128)}', space=vmem, size = 0x12000, scoped, tag = 'internal scratch']
  #allocation2 [shape = 'f32[1,1]{1,0:T(1,128)S(1)}', space=vmem, size = 0x200, scoped, tag = 'scoped memory for lstm_model_forward.1']
  %s0 = inlined_call_operand.vmem [shape: f32[16,4], index: 0, kind: input, shape index: {}]
  %s1 = inlined_call_operand.vmem [shape: f32[20,6], index: 1, kind: input, shape index: {}]
  %s2 = inlined_call_operand.vmem [shape: f32[2,12], index: 2, kind: input, shape index: {}]
  %s3 = inlined_call_operand.vmem [shape: f32[4,128], index: 3, kind: input, shape index: {}]
  %s4 = inlined_call_operand.vmem [shape: f32[32,128], index: 4, kind: input, shape index: {}]
  %s5 = inlined_call_operand.vmem [shape: f32[1,128], index: 5, kind: input, shape index: {}]
  %s6 = inlined_call_operand.vmem [shape: f32[6,64], index: 6, kind: input, shape index: {}]
  %s7 = inlined_call_operand.vmem [shape: f32[16,64], index: 7, kind: input, shape index: {}]
  %s8 = inlined_call_operand.vmem [shape: f32[1,64], index: 8, kind: input, shape index: {}]
  %s9 = inlined_call_operand.vmem [shape: f32[16,64], index: 9, kind: input, shape index: {}]
  %s10 = inlined_call_operand.vmem [shape: f32[16,64], index: 10, kind: input, shape index: {}]
  %s11 = inlined_call_operand.vmem [shape: f32[1,64], index: 11, kind: input, shape index: {}]
  %s12 = inlined_call_operand.vmem [shape: f32[12,32], index: 12, kind: input, shape index: {}]
  %s13 = inlined_call_operand.vmem [shape: f32[1,32], index: 13, kind: input, shape index: {}]
  %s14 = inlined_call_operand.vmem [shape: f32[32,16], index: 14, kind: input, shape index: {}]
  %s15 = inlined_call_operand.vmem [shape: f32[1,16], index: 15, kind: input, shape index: {}]
  %s16 = inlined_call_operand.vmem [shape: f32[32,64], index: 16, kind: input, shape index: {}]
  %s17 = inlined_call_operand.vmem [shape: f32[16,64], index: 17, kind: input, shape index: {}]
  %s18 = inlined_call_operand.vmem [shape: f32[16,64], index: 18, kind: input, shape index: {}]
  %s19 = inlined_call_operand.vmem [shape: f32[1,64], index: 19, kind: input, shape index: {}]
  %s20 = inlined_call_operand.vmem [shape: f32[64,1], index: 20, kind: input, shape index: {}]
  %s21 = inlined_call_operand.<no memory space> [shape: f32[1,1], index: 21, kind: input, shape index: {}]
  %s22 = inlined_call_operand.vmem [shape: f32[2,1], index: 22, kind: output, shape index: {}]
  %s23 = sld [smem:[#allocation0]]
  $region98: #{lstm_model_forward.1} parent=0
    _
  %s25 = ssub.s32 1, %s23
  %s26 = scalar_select 0, %s25, %s23
  %v27 = vstv %s21
  %28 = vst [vmem:[#allocation2] sm:$0x1] %v27
  // Predicated region
  $region2: #{lstm_model_forward.1} parent=0 // pred_check
    _
  $region3: #{lstm_model_forward.1} parent=0 // pred_check_branch
    %30 = sbr.rel (0) target = $region5
  $region4: #{lstm_model_forward.1} parent=0 // pred_region
    _
  $region5: #{lstm_model_forward.1} parent=0 // pred_fallthru
    _
  // Predicated region
  $region6: #{lstm_model_forward.1} parent=0 // pred_check
    _
  $region7: #{lstm_model_forward.1} parent=0 // pred_check_branch
    %32 = sbr.rel (0) target = $region9
  $region8: #{lstm_model_forward.1} parent=0 // pred_region
    _
  $region9: #{lstm_model_forward.1} parent=0 // pred_fallthru
    _
  // Predicated region
  $region10: #{lstm_model_forward.1} parent=0 // pred_check
    _
  $region11: #{lstm_model_forward.1} parent=0 // pred_check_branch
    %34 = sbr.rel (0) target = $region13
  $region12: #{lstm_model_forward.1} parent=0 // pred_region
    _
  $region13: #{lstm_model_forward.1} parent=0 // pred_fallthru
    _
  // Predicated region
  $region14: #{lstm_model_forward.1} parent=0 // pred_check
    _
  $region15: #{lstm_model_forward.1} parent=0 // pred_check_branch
    %36 = sbr.rel (0) target = $region17
  $region16: #{lstm_model_forward.1} parent=0 // pred_region
    _
  $region17: #{lstm_model_forward.1} parent=0 // pred_fallthru
    _
  // Predicated region
  $region18: #{lstm_model_forward.1} parent=0 // pred_check
    _
  $region19: #{lstm_model_forward.1} parent=0 // pred_check_branch
    %38 = sbr.rel (0) target = $region21
  $region20: #{lstm_model_forward.1} parent=0 // pred_region
    _
  $region21: #{lstm_model_forward.1} parent=0 // pred_fallthru
    _
  // Predicated region
  $region22: #{lstm_model_forward.1} parent=0 // pred_check
    _
  $region23: #{lstm_model_forward.1} parent=0 // pred_check_branch
    %40 = sbr.rel (0) target = $region25
  $region24: #{lstm_model_forward.1} parent=0 // pred_region
    _
  $region25: #{lstm_model_forward.1} parent=0 // pred_fallthru
    _
  // Predicated region
  $region26: #{lstm_model_forward.1} parent=0 // pred_check
    _
  $region27: #{lstm_model_forward.1} parent=0 // pred_check_branch
    %42 = sbr.rel (0) target = $region29
  $region28: #{lstm_model_forward.1} parent=0 // pred_region
    _
  $region29: #{lstm_model_forward.1} parent=0 // pred_fallthru
    _
  // Predicated region
  $region30: #{lstm_model_forward.1} parent=0 // pred_check
    _
  $region31: #{lstm_model_forward.1} parent=0 // pred_check_branch
    %44 = sbr.rel (0) target = $region33
  $region32: #{lstm_model_forward.1} parent=0 // pred_region
    _
  $region33: #{lstm_model_forward.1} parent=0 // pred_fallthru
    _
  // Predicated region
  $region34: #{lstm_model_forward.1} parent=0 // pred_check
    _
  $region35: #{lstm_model_forward.1} parent=0 // pred_check_branch
    %46 = sbr.rel (0) target = $region37
  $region36: #{lstm_model_forward.1} parent=0 // pred_region
    _
  $region37: #{lstm_model_forward.1} parent=0 // pred_fallthru
    _
  // Predicated region
  $region38: #{lstm_model_forward.1} parent=0 // pred_check
    _
  $region39: #{lstm_model_forward.1} parent=0 // pred_check_branch
    %48 = sbr.rel (0) target = $region41
  $region40: #{lstm_model_forward.1} parent=0 // pred_region
    _
  $region41: #{lstm_model_forward.1} parent=0 // pred_fallthru
    _
  // Predicated region
  $region42: #{lstm_model_forward.1} parent=0 // pred_check
    _
  $region43: #{lstm_model_forward.1} parent=0 // pred_check_branch
    %50 = sbr.rel (0) target = $region45
  $region44: #{lstm_model_forward.1} parent=0 // pred_region
    _
  $region45: #{lstm_model_forward.1} parent=0 // pred_fallthru
    _
  // Predicated region
  $region46: #{lstm_model_forward.1} parent=0 // pred_check
    _
  $region47: #{lstm_model_forward.1} parent=0 // pred_check_branch
    %52 = sbr.rel (0) target = $region49
  $region48: #{lstm_model_forward.1} parent=0 // pred_region
    _
  $region49: #{lstm_model_forward.1} parent=0 // pred_fallthru
    _
  // Predicated region
  $region50: #{lstm_model_forward.1} parent=0 // pred_check
    _
  $region51: #{lstm_model_forward.1} parent=0 // pred_check_branch
    %54 = sbr.rel (0) target = $region53
  $region52: #{lstm_model_forward.1} parent=0 // pred_region
    _
  $region53: #{lstm_model_forward.1} parent=0 // pred_fallthru
    _
  // Predicated region
  $region54: #{lstm_model_forward.1} parent=0 // pred_check
    _
  $region55: #{lstm_model_forward.1} parent=0 // pred_check_branch
    %56 = sbr.rel (0) target = $region57
  $region56: #{lstm_model_forward.1} parent=0 // pred_region
    _
  $region57: #{lstm_model_forward.1} parent=0 // pred_fallthru
    _
  // Predicated region
  $region58: #{lstm_model_forward.1} parent=0 // pred_check
    _
  $region59: #{lstm_model_forward.1} parent=0 // pred_check_branch
    %58 = sbr.rel (0) target = $region61
  $region60: #{lstm_model_forward.1} parent=0 // pred_region
    _
  $region61: #{lstm_model_forward.1} parent=0 // pred_fallthru
    _
  // Predicated region
  $region62: #{lstm_model_forward.1} parent=0 // pred_check
    _
  $region63: #{lstm_model_forward.1} parent=0 // pred_check_branch
    %60 = sbr.rel (0) target = $region65
  $region64: #{lstm_model_forward.1} parent=0 // pred_region
    _
  $region65: #{lstm_model_forward.1} parent=0 // pred_fallthru
    _
  // Predicated region
  $region66: #{lstm_model_forward.1} parent=0 // pred_check
    _
  $region67: #{lstm_model_forward.1} parent=0 // pred_check_branch
    %62 = sbr.rel (0) target = $region69
  $region68: #{lstm_model_forward.1} parent=0 // pred_region
    _
  $region69: #{lstm_model_forward.1} parent=0 // pred_fallthru
    _
  // Predicated region
  $region70: #{lstm_model_forward.1} parent=0 // pred_check
    _
  $region71: #{lstm_model_forward.1} parent=0 // pred_check_branch
    %64 = sbr.rel (0) target = $region73
  $region72: #{lstm_model_forward.1} parent=0 // pred_region
    _
  $region73: #{lstm_model_forward.1} parent=0 // pred_fallthru
    _
  // Predicated region
  $region74: #{lstm_model_forward.1} parent=0 // pred_check
    _
  $region75: #{lstm_model_forward.1} parent=0 // pred_check_branch
    %66 = sbr.rel (0) target = $region77
  $region76: #{lstm_model_forward.1} parent=0 // pred_region
    _
  $region77: #{lstm_model_forward.1} parent=0 // pred_fallthru
    _
  // Predicated region
  $region78: #{lstm_model_forward.1} parent=0 // pred_check
    _
  $region79: #{lstm_model_forward.1} parent=0 // pred_check_branch
    %68 = sbr.rel (0) target = $region81
  $region80: #{lstm_model_forward.1} parent=0 // pred_region
    _
  $region81: #{lstm_model_forward.1} parent=0 // pred_fallthru
    _
  // Predicated region
  $region82: #{lstm_model_forward.1} parent=0 // pred_check
    _
  $region83: #{lstm_model_forward.1} parent=0 // pred_check_branch
    %70 = sbr.rel (0) target = $region85
  $region84: #{lstm_model_forward.1} parent=0 // pred_region
    _
  $region85: #{lstm_model_forward.1} parent=0 // pred_fallthru
    _
  // Predicated region
  $region86: #{lstm_model_forward.1} parent=0 // pred_check
    _
  $region87: #{lstm_model_forward.1} parent=0 // pred_check_branch
    %72 = sbr.rel (0) target = $region89
  $region88: #{lstm_model_forward.1} parent=0 // pred_region
    _
  $region89: #{lstm_model_forward.1} parent=0 // pred_fallthru
    _
  %v73 = vld [vmem:[%s0] sm:$0xff]
  %v74 = vld [vmem:[%s0 + $0x8] sm:$0xff]
  %v75 = vld [vmem:[%s1] sm:$0xff]
  %v76 = vld [vmem:[%s1 + $0x8] sm:$0xff]
  %v77 = vld [vmem:[%s1 + $0x10] sm:$0xf]
  %v78 = vld [vmem:[%s2] sm:$0x3]
  %v79 = vld [vmem:[%s3] sm:$0xf]
  %v80 = vld [vmem:[%s4] sm:$0xff]
  %v81 = vld [vmem:[%s4 + $0x8] sm:$0xff]
  %v82 = vld [vmem:[%s4 + $0x10] sm:$0xff]
  %v83 = vld [vmem:[%s4 + $0x18] sm:$0xff]
  %v84 = vld [vmem:[%s5] sm:$0x1]
  %v85 = vld [vmem:[%s6] sm:$0x3f]
  %v86 = vld [vmem:[%s7] sm:$0xff]
  %v87 = vld [vmem:[%s7 + $0x8] sm:$0xff]
  %v88 = vld [vmem:[%s8] sm:$0x1]
  %v89 = vld [vmem:[%s9] sm:$0xff]
  %v90 = vld [vmem:[%s9 + $0x8] sm:$0xff]
  %v91 = vld [vmem:[%s10] sm:$0xff]
  %v92 = vld [vmem:[%s10 + $0x8] sm:$0xff]
  %v93 = vld [vmem:[%s11] sm:$0x1]
  %v94 = vld [vmem:[%s12] sm:$0xff]
  %v95 = vld [vmem:[%s12 + $0x8] sm:$0xf]
  %v96 = vld [vmem:[%s13] sm:$0x1]
  %v97 = vld [vmem:[%s14] sm:$0xff]
  %v98 = vld [vmem:[%s14 + $0x8] sm:$0xff]
  %v99 = vld [vmem:[%s14 + $0x10] sm:$0xff]
  %v100 = vld [vmem:[%s14 + $0x18] sm:$0xff]
  %v101 = vld [vmem:[%s15] sm:$0x1]
  %v102 = vld [vmem:[%s16] sm:$0xff]
  %v103 = vld [vmem:[%s16 + $0x8] sm:$0xff]
  %v104 = vld [vmem:[%s16 + $0x10] sm:$0xff]
  %v105 = vld [vmem:[%s16 + $0x18] sm:$0xff]
  %v106 = vld [vmem:[%s17] sm:$0xff]
  %v107 = vld [vmem:[%s17 + $0x8] sm:$0xff]
  %v108 = vld [vmem:[%s18] sm:$0xff]
  %v109 = vld [vmem:[%s18 + $0x8] sm:$0xff]
  %v110 = vld [vmem:[%s19] sm:$0x1]
  %v111 = vld [vmem:[%s20] sm:$0xff]
  %v112 = vld [vmem:[%s20 + $0x8] sm:$0xff]
  %v113 = vld [vmem:[%s20 + $0x10] sm:$0xff]
  %v114 = vld [vmem:[%s20 + $0x18] sm:$0xff]
  %v115 = vld [vmem:[%s20 + $0x20] sm:$0xff]
  %v116 = vld [vmem:[%s20 + $0x28] sm:$0xff]
  %v117 = vld [vmem:[%s20 + $0x30] sm:$0xff]
  %v118 = vld [vmem:[%s20 + $0x38] sm:$0xff]
  %v119 = vld [vmem:[#allocation2] sm:$0x1]
  %v121 = vlaneseq
  %v122 = vshrl.u32 %v121, 7
  %v123 = vsub.s32 0, %v122
  %v124 = vrot.slane %v84, %v123
  %vm126 = vcmask 31744
  %v128 = vsel %vm126, %v73, 0
  %v131 = vsel %vm126, %v74, 0
  %vm133 = vcmask 1043456
  %v135 = vsel %vm133, %v79, 0
  %137 = vmatprep.subr.mxu0 0.0
  %138 = vmatpush1.msra.mxu0 %v135
  %139 = vmatprep.subr.mxu0 0.0
  %140 = vmatpush1.msra.mxu0 0.0
  %141 = vmatprep.subr.mxu0 0.0
  %142 = vmatpush1.msra.mxu0 0.0
  %143 = vmatprep.subr.mxu0 0.0
  %144 = vmatpush1.msra.mxu0 0.0
  %145 = vmatprep.subr.mxu0 0.0
  %146 = vmatpush1.msra.mxu0 0.0
  %147 = vmatprep.subr.mxu0 0.0
  %148 = vmatpush1.msra.mxu0 0.0
  %149 = vmatprep.subr.mxu0 0.0
  %150 = vmatpush1.msra.mxu0 0.0
  %151 = vmatprep.subr.mxu0 0.0
  %152 = vmatpush1.msra.mxu0 0.0
  %153 = vmatprep.subr.mxu0 0.0
  %154 = vmatpush1.msra.mxu0 0.0
  %155 = vmatprep.subr.mxu0 0.0
  %156 = vmatpush1.msra.mxu0 0.0
  %157 = vmatprep.subr.mxu0 0.0
  %158 = vmatpush1.msra.mxu0 0.0
  %159 = vmatprep.subr.mxu0 0.0
  %160 = vmatpush1.msra.mxu0 0.0
  %161 = vmatprep.subr.mxu0 0.0
  %162 = vmatpush1.msra.mxu0 0.0
  %163 = vmatprep.subr.mxu0 0.0
  %164 = vmatpush1.msra.mxu0 0.0
  %165 = vmatprep.subr.mxu0 0.0
  %166 = vmatpush1.msra.mxu0 0.0
  %167 = vmatprep.subr.mxu0 0.0
  %168 = vmatpush1.msra.mxu0 0.0
  %169 = vmatprep.subr.mxu0 0.0
  %170 = vmatpush1.msra.mxu0 0.0
  %171 = vmatprep.subr.mxu0 0.0
  %172 = vmatpush1.msra.mxu0 0.0
  %173 = vmatprep.subr.mxu0 0.0
  %174 = vmatpush1.msra.mxu0 0.0
  %175 = vmatprep.subr.mxu0 0.0
  %176 = vmatpush1.msra.mxu0 0.0
  %177 = vmatprep.subr.mxu0 0.0
  %178 = vmatpush1.msra.mxu0 0.0
  %179 = vmatprep.subr.mxu0 0.0
  %180 = vmatpush1.msra.mxu0 0.0
  %181 = vmatprep.subr.mxu0 0.0
  %182 = vmatpush1.msra.mxu0 0.0
  %183 = vmatprep.subr.mxu0 0.0
  %184 = vmatpush1.msra.mxu0 0.0
  %185 = vmatprep.subr.mxu0 0.0
  %186 = vmatpush1.msra.mxu0 0.0
  %187 = vmatprep.subr.mxu0 0.0
  %188 = vmatpush1.msra.mxu0 0.0
  %189 = vmatprep.subr.mxu0 0.0
  %190 = vmatpush1.msra.mxu0 0.0
  %191 = vmatprep.subr.mxu0 0.0
  %192 = vmatpush1.msra.mxu0 0.0
  %193 = vmatprep.subr.mxu0 0.0
  %194 = vmatpush1.msra.mxu0 0.0
  %195 = vmatprep.subr.mxu0 0.0
  %196 = vmatpush1.msra.mxu0 0.0
  %197 = vmatprep.subr.mxu0 0.0
  %198 = vmatpush1.msra.mxu0 0.0
  %199 = vmatprep.subr.mxu0 0.0
  %200 = vmatpush1.msra.mxu0 0.0
  %201 = vmatprep.mubr.f32.mxu0 0.0
  %202 = vmatmul.mubr.f32.gmra.mrb[0].mxu0 %v128
  %v203 = vpop.f32.mrb[0].mxu0
  %v204 = vadd.f32 %v124, %v203
  %v205 = vpop.f32.mrb[0].mxu0
  %206 = vmatprep.mubr.f32.mxu0 0.0
  %207 = vmatmul.mubr.f32.gmra.mrb[0].mxu0 %v131
  %v208 = vpop.f32.mrb[0].mxu0
  %v209 = vadd.f32 %v124, %v208
  %v210 = vpop.f32.mrb[0].mxu0
  %211 = vdwg.mxu0
  %vm212 = vcmask 261120
  %v214 = vsel %vm212, 0.0, 0
  %216 = vmatprep.subr.mxu0 0.0
  %217 = vmatpush1.msra.mxu0 %v80
  %218 = vmatprep.subr.mxu0 0.0
  %219 = vmatpush1.msra.mxu0 %v81
  %220 = vmatprep.subr.mxu0 0.0
  %221 = vmatpush1.msra.mxu0 %v82
  %222 = vmatprep.subr.mxu0 0.0
  %223 = vmatpush1.msra.mxu0 %v83
  %224 = vmatprep.subr.mxu0 0.0
  %225 = vmatpush1.msra.mxu0 0.0
  %226 = vmatprep.subr.mxu0 0.0
  %227 = vmatpush1.msra.mxu0 0.0
  %228 = vmatprep.subr.mxu0 0.0
  %229 = vmatpush1.msra.mxu0 0.0
  %230 = vmatprep.subr.mxu0 0.0
  %231 = vmatpush1.msra.mxu0 0.0
  %232 = vmatprep.subr.mxu0 0.0
  %233 = vmatpush1.msra.mxu0 0.0
  %234 = vmatprep.subr.mxu0 0.0
  %235 = vmatpush1.msra.mxu0 0.0
  %236 = vmatprep.subr.mxu0 0.0
  %237 = vmatpush1.msra.mxu0 0.0
  %238 = vmatprep.subr.mxu0 0.0
  %239 = vmatpush1.msra.mxu0 0.0
  %240 = vmatprep.subr.mxu0 0.0
  %241 = vmatpush1.msra.mxu0 0.0
  %242 = vmatprep.subr.mxu0 0.0
  %243 = vmatpush1.msra.mxu0 0.0
  %244 = vmatprep.subr.mxu0 0.0
  %245 = vmatpush1.msra.mxu0 0.0
  %246 = vmatprep.subr.mxu0 0.0
  %247 = vmatpush1.msra.mxu0 0.0
  %248 = vmatprep.subr.mxu0 0.0
  %249 = vmatpush1.msra.mxu0 0.0
  %250 = vmatprep.subr.mxu0 0.0
  %251 = vmatpush1.msra.mxu0 0.0
  %252 = vmatprep.subr.mxu0 0.0
  %253 = vmatpush1.msra.mxu0 0.0
  %254 = vmatprep.subr.mxu0 0.0
  %255 = vmatpush1.msra.mxu0 0.0
  %256 = vmatprep.subr.mxu0 0.0
  %257 = vmatpush1.msra.mxu0 0.0
  %258 = vmatprep.subr.mxu0 0.0
  %259 = vmatpush1.msra.mxu0 0.0
  %260 = vmatprep.subr.mxu0 0.0
  %261 = vmatpush1.msra.mxu0 0.0
  %262 = vmatprep.subr.mxu0 0.0
  %263 = vmatpush1.msra.mxu0 0.0
  %264 = vmatprep.subr.mxu0 0.0
  %265 = vmatpush1.msra.mxu0 0.0
  %266 = vmatprep.subr.mxu0 0.0
  %267 = vmatpush1.msra.mxu0 0.0
  %268 = vmatprep.subr.mxu0 0.0
  %269 = vmatpush1.msra.mxu0 0.0
  %270 = vmatprep.subr.mxu0 0.0
  %271 = vmatpush1.msra.mxu0 0.0
  %272 = vmatprep.subr.mxu0 0.0
  %273 = vmatpush1.msra.mxu0 0.0
  %274 = vmatprep.subr.mxu0 0.0
  %275 = vmatpush1.msra.mxu0 0.0
  %276 = vmatprep.subr.mxu0 0.0
  %277 = vmatpush1.msra.mxu0 0.0
  %278 = vmatprep.subr.mxu0 0.0
  %279 = vmatpush1.msra.mxu0 0.0
  %280 = vmatprep.mubr.f32.mxu0 0.0
  %281 = vmatmul.mubr.f32.gmra.mrb[0].mxu0 %v214
  %v282 = vpop.f32.mrb[0].mxu0
  %v283 = vadd.f32 0.0, %v282
  %v284 = vpop.f32.mrb[0].mxu0
  %285 = vdwg.mxu0
  %v286 = vadd.f32 %v204, %v283
  %v287 = vxor.u32 %v286, 2147483648
  %v288 = vmul.f32 %v287, 1.442695
  %v289 = vpow.pop %v288
  %v290 = vadd.f32 %v289, 1.0
  %v291 = vrcp.pop %v290
  %v292 = vmul.f32 1.0, %v291
  %v293 = vtanh.pop %v286
  %v294 = vmul.f32 %v292, 0.0
  %296 = vrot.lane.b32.xlu0 %v293, 64
  %v297 = vpop.permute.xlu0 %296
  %v299 = vmul.f32 %v292, %v297
  %301 = vrot.lane.b32.xlu0 %v299, 32
  %v302 = vpop.permute.xlu0 %301
  %v304 = vadd.f32 %v294, %v302
  %v305 = vtanh.pop %v304
  %307 = vrot.lane.b32.xlu0 %v305, 64
  %v308 = vpop.permute.xlu0 %307
  %v310 = vmul.f32 %v292, %v308
  %312 = vrot.lane.b32.xlu0 %v310, 32
  %v313 = vpop.permute.xlu0 %312
  %v314 = vsel %vm212, %v313, 0
  %316 = vmatprep.subr.mxu0 0.0
  %317 = vmatpush1.msra.mxu0 %v80
  %318 = vmatprep.subr.mxu0 0.0
  %319 = vmatpush1.msra.mxu0 %v81
  %320 = vmatprep.subr.mxu0 0.0
  %321 = vmatpush1.msra.mxu0 %v82
  %322 = vmatprep.subr.mxu0 0.0
  %323 = vmatpush1.msra.mxu0 %v83
  %324 = vmatprep.subr.mxu0 0.0
  %325 = vmatpush1.msra.mxu0 0.0
  %326 = vmatprep.subr.mxu0 0.0
  %327 = vmatpush1.msra.mxu0 0.0
  %328 = vmatprep.subr.mxu0 0.0
  %329 = vmatpush1.msra.mxu0 0.0
  %330 = vmatprep.subr.mxu0 0.0
  %331 = vmatpush1.msra.mxu0 0.0
  %332 = vmatprep.subr.mxu0 0.0
  %333 = vmatpush1.msra.mxu0 0.0
  %334 = vmatprep.subr.mxu0 0.0
  %335 = vmatpush1.msra.mxu0 0.0
  %336 = vmatprep.subr.mxu0 0.0
  %337 = vmatpush1.msra.mxu0 0.0
  %338 = vmatprep.subr.mxu0 0.0
  %339 = vmatpush1.msra.mxu0 0.0
  %340 = vmatprep.subr.mxu0 0.0
  %341 = vmatpush1.msra.mxu0 0.0
  %342 = vmatprep.subr.mxu0 0.0
  %343 = vmatpush1.msra.mxu0 0.0
  %344 = vmatprep.subr.mxu0 0.0
  %345 = vmatpush1.msra.mxu0 0.0
  %346 = vmatprep.subr.mxu0 0.0
  %347 = vmatpush1.msra.mxu0 0.0
  %348 = vmatprep.subr.mxu0 0.0
  %349 = vmatpush1.msra.mxu0 0.0
  %350 = vmatprep.subr.mxu0 0.0
  %351 = vmatpush1.msra.mxu0 0.0
  %352 = vmatprep.subr.mxu0 0.0
  %353 = vmatpush1.msra.mxu0 0.0
  %354 = vmatprep.subr.mxu0 0.0
  %355 = vmatpush1.msra.mxu0 0.0
  %356 = vmatprep.subr.mxu0 0.0
  %357 = vmatpush1.msra.mxu0 0.0
  %358 = vmatprep.subr.mxu0 0.0
  %359 = vmatpush1.msra.mxu0 0.0
  %360 = vmatprep.subr.mxu0 0.0
  %361 = vmatpush1.msra.mxu0 0.0
  %362 = vmatprep.subr.mxu0 0.0
  %363 = vmatpush1.msra.mxu0 0.0
  %364 = vmatprep.subr.mxu0 0.0
  %365 = vmatpush1.msra.mxu0 0.0
  %366 = vmatprep.subr.mxu0 0.0
  %367 = vmatpush1.msra.mxu0 0.0
  %368 = vmatprep.subr.mxu0 0.0
  %369 = vmatpush1.msra.mxu0 0.0
  %370 = vmatprep.subr.mxu0 0.0
  %371 = vmatpush1.msra.mxu0 0.0
  %372 = vmatprep.subr.mxu0 0.0
  %373 = vmatpush1.msra.mxu0 0.0
  %374 = vmatprep.subr.mxu0 0.0
  %375 = vmatpush1.msra.mxu0 0.0
  %376 = vmatprep.subr.mxu0 0.0
  %377 = vmatpush1.msra.mxu0 0.0
  %378 = vmatprep.subr.mxu0 0.0
  %379 = vmatpush1.msra.mxu0 0.0
  %380 = vmatprep.mubr.f32.mxu0 0.0
  %381 = vmatmul.mubr.f32.gmra.mrb[0].mxu0 %v314
  %v382 = vpop.f32.mrb[0].mxu0
  %v383 = vadd.f32 0.0, %v382
  %v384 = vpop.f32.mrb[0].mxu0
  %385 = vdwg.mxu0
  %v387 = vrot.slane %v383, 6
  %v389 = vadd.f32 %v204, %v387
  %v390 = vxor.u32 %v389, 2147483648
  %v391 = vmul.f32 %v390, 1.442695
  %v392 = vpow.pop %v391
  %v393 = vadd.f32 %v392, 1.0
  %v394 = vrcp.pop %v393
  %v395 = vmul.f32 1.0, %v394
  %v396 = vtanh.pop %v389
  %v398 = vrot.slane %v304, 6
  %v400 = vmul.f32 %v395, %v398
  %402 = vrot.lane.b32.xlu0 %v396, 64
  %v403 = vpop.permute.xlu0 %402
  %v405 = vmul.f32 %v395, %v403
  %407 = vrot.lane.b32.xlu0 %v405, 32
  %v408 = vpop.permute.xlu0 %407
  %v410 = vadd.f32 %v400, %v408
  %v411 = vtanh.pop %v410
  %413 = vrot.lane.b32.xlu0 %v411, 64
  %v414 = vpop.permute.xlu0 %413
  %v416 = vmul.f32 %v395, %v414
  %v418 = vrot.slane %v416, 2
  %419 = vrot.lane.b32.xlu0 %v418, 32
  %v420 = vpop.permute.xlu0 %419
  %v421 = vsel %vm212, %v420, 0
  %423 = vmatprep.subr.mxu0 0.0
  %424 = vmatpush1.msra.mxu0 %v80
  %425 = vmatprep.subr.mxu0 0.0
  %426 = vmatpush1.msra.mxu0 %v81
  %427 = vmatprep.subr.mxu0 0.0
  %428 = vmatpush1.msra.mxu0 %v82
  %429 = vmatprep.subr.mxu0 0.0
  %430 = vmatpush1.msra.mxu0 %v83
  %431 = vmatprep.subr.mxu0 0.0
  %432 = vmatpush1.msra.mxu0 0.0
  %433 = vmatprep.subr.mxu0 0.0
  %434 = vmatpush1.msra.mxu0 0.0
  %435 = vmatprep.subr.mxu0 0.0
  %436 = vmatpush1.msra.mxu0 0.0
  %437 = vmatprep.subr.mxu0 0.0
  %438 = vmatpush1.msra.mxu0 0.0
  %439 = vmatprep.subr.mxu0 0.0
  %440 = vmatpush1.msra.mxu0 0.0
  %441 = vmatprep.subr.mxu0 0.0
  %442 = vmatpush1.msra.mxu0 0.0
  %443 = vmatprep.subr.mxu0 0.0
  %444 = vmatpush1.msra.mxu0 0.0
  %445 = vmatprep.subr.mxu0 0.0
  %446 = vmatpush1.msra.mxu0 0.0
  %447 = vmatprep.subr.mxu0 0.0
  %448 = vmatpush1.msra.mxu0 0.0
  %449 = vmatprep.subr.mxu0 0.0
  %450 = vmatpush1.msra.mxu0 0.0
  %451 = vmatprep.subr.mxu0 0.0
  %452 = vmatpush1.msra.mxu0 0.0
  %453 = vmatprep.subr.mxu0 0.0
  %454 = vmatpush1.msra.mxu0 0.0
  %455 = vmatprep.subr.mxu0 0.0
  %456 = vmatpush1.msra.mxu0 0.0
  %457 = vmatprep.subr.mxu0 0.0
  %458 = vmatpush1.msra.mxu0 0.0
  %459 = vmatprep.subr.mxu0 0.0
  %460 = vmatpush1.msra.mxu0 0.0
  %461 = vmatprep.subr.mxu0 0.0
  %462 = vmatpush1.msra.mxu0 0.0
  %463 = vmatprep.subr.mxu0 0.0
  %464 = vmatpush1.msra.mxu0 0.0
  %465 = vmatprep.subr.mxu0 0.0
  %466 = vmatpush1.msra.mxu0 0.0
  %467 = vmatprep.subr.mxu0 0.0
  %468 = vmatpush1.msra.mxu0 0.0
  %469 = vmatprep.subr.mxu0 0.0
  %470 = vmatpush1.msra.mxu0 0.0
  %471 = vmatprep.subr.mxu0 0.0
  %472 = vmatpush1.msra.mxu0 0.0
  %473 = vmatprep.subr.mxu0 0.0
  %474 = vmatpush1.msra.mxu0 0.0
  %475 = vmatprep.subr.mxu0 0.0
  %476 = vmatpush1.msra.mxu0 0.0
  %477 = vmatprep.subr.mxu0 0.0
  %478 = vmatpush1.msra.mxu0 0.0
  %479 = vmatprep.subr.mxu0 0.0
  %480 = vmatpush1.msra.mxu0 0.0
  %481 = vmatprep.subr.mxu0 0.0
  %482 = vmatpush1.msra.mxu0 0.0
  %483 = vmatprep.subr.mxu0 0.0
  %484 = vmatpush1.msra.mxu0 0.0
  %485 = vmatprep.subr.mxu0 0.0
  %486 = vmatpush1.msra.mxu0 0.0
  %487 = vmatprep.mubr.f32.mxu0 0.0
  %488 = vmatmul.mubr.f32.gmra.mrb[0].mxu0 %v421
  %v489 = vpop.f32.mrb[0].mxu0
  %v490 = vadd.f32 0.0, %v489
  %v491 = vpop.f32.mrb[0].mxu0
  %492 = vdwg.mxu0
  %v494 = vrot.slane %v490, 4
  %v496 = vadd.f32 %v204, %v494
  %v497 = vxor.u32 %v496, 2147483648
  %v498 = vmul.f32 %v497, 1.442695
  %v499 = vpow.pop %v498
  %v500 = vadd.f32 %v499, 1.0
  %v501 = vrcp.pop %v500
  %v502 = vmul.f32 1.0, %v501
  %v503 = vtanh.pop %v496
  %v505 = vrot.slane %v410, 6
  %v507 = vmul.f32 %v502, %v505
  %509 = vrot.lane.b32.xlu0 %v503, 64
  %v510 = vpop.permute.xlu0 %509
  %v512 = vmul.f32 %v502, %v510
  %514 = vrot.lane.b32.xlu0 %v512, 32
  %v515 = vpop.permute.xlu0 %514
  %v517 = vadd.f32 %v507, %v515
  %v518 = vtanh.pop %v517
  %520 = vrot.lane.b32.xlu0 %v518, 64
  %v521 = vpop.permute.xlu0 %520
  %v523 = vmul.f32 %v502, %v521
  %v525 = vrot.slane %v523, 4
  %526 = vrot.lane.b32.xlu0 %v525, 32
  %v527 = vpop.permute.xlu0 %526
  %v528 = vsel %vm212, %v527, 0
  %530 = vmatprep.subr.mxu0 0.0
  %531 = vmatpush1.msra.mxu0 %v80
  %532 = vmatprep.subr.mxu0 0.0
  %533 = vmatpush1.msra.mxu0 %v81
  %534 = vmatprep.subr.mxu0 0.0
  %535 = vmatpush1.msra.mxu0 %v82
  %536 = vmatprep.subr.mxu0 0.0
  %537 = vmatpush1.msra.mxu0 %v83
  %538 = vmatprep.subr.mxu0 0.0
  %539 = vmatpush1.msra.mxu0 0.0
  %540 = vmatprep.subr.mxu0 0.0
  %541 = vmatpush1.msra.mxu0 0.0
  %542 = vmatprep.subr.mxu0 0.0
  %543 = vmatpush1.msra.mxu0 0.0
  %544 = vmatprep.subr.mxu0 0.0
  %545 = vmatpush1.msra.mxu0 0.0
  %546 = vmatprep.subr.mxu0 0.0
  %547 = vmatpush1.msra.mxu0 0.0
  %548 = vmatprep.subr.mxu0 0.0
  %549 = vmatpush1.msra.mxu0 0.0
  %550 = vmatprep.subr.mxu0 0.0
  %551 = vmatpush1.msra.mxu0 0.0
  %552 = vmatprep.subr.mxu0 0.0
  %553 = vmatpush1.msra.mxu0 0.0
  %554 = vmatprep.subr.mxu0 0.0
  %555 = vmatpush1.msra.mxu0 0.0
  %556 = vmatprep.subr.mxu0 0.0
  %557 = vmatpush1.msra.mxu0 0.0
  %558 = vmatprep.subr.mxu0 0.0
  %559 = vmatpush1.msra.mxu0 0.0
  %560 = vmatprep.subr.mxu0 0.0
  %561 = vmatpush1.msra.mxu0 0.0
  %562 = vmatprep.subr.mxu0 0.0
  %563 = vmatpush1.msra.mxu0 0.0
  %564 = vmatprep.subr.mxu0 0.0
  %565 = vmatpush1.msra.mxu0 0.0
  %566 = vmatprep.subr.mxu0 0.0
  %567 = vmatpush1.msra.mxu0 0.0
  %568 = vmatprep.subr.mxu0 0.0
  %569 = vmatpush1.msra.mxu0 0.0
  %570 = vmatprep.subr.mxu0 0.0
  %571 = vmatpush1.msra.mxu0 0.0
  %572 = vmatprep.subr.mxu0 0.0
  %573 = vmatpush1.msra.mxu0 0.0
  %574 = vmatprep.subr.mxu0 0.0
  %575 = vmatpush1.msra.mxu0 0.0
  %576 = vmatprep.subr.mxu0 0.0
  %577 = vmatpush1.msra.mxu0 0.0
  %578 = vmatprep.subr.mxu0 0.0
  %579 = vmatpush1.msra.mxu0 0.0
  %580 = vmatprep.subr.mxu0 0.0
  %581 = vmatpush1.msra.mxu0 0.0
  %582 = vmatprep.subr.mxu0 0.0
  %583 = vmatpush1.msra.mxu0 0.0
  %584 = vmatprep.subr.mxu0 0.0
  %585 = vmatpush1.msra.mxu0 0.0
  %586 = vmatprep.subr.mxu0 0.0
  %587 = vmatpush1.msra.mxu0 0.0
  %588 = vmatprep.subr.mxu0 0.0
  %589 = vmatpush1.msra.mxu0 0.0
  %590 = vmatprep.subr.mxu0 0.0
  %591 = vmatpush1.msra.mxu0 0.0
  %592 = vmatprep.subr.mxu0 0.0
  %593 = vmatpush1.msra.mxu0 0.0
  %594 = vmatprep.mubr.f32.mxu0 0.0
  %595 = vmatmul.mubr.f32.gmra.mrb[0].mxu0 %v528
  %v596 = vpop.f32.mrb[0].mxu0
  %v597 = vadd.f32 0.0, %v596
  %v598 = vpop.f32.mrb[0].mxu0
  %599 = vdwg.mxu0
  %v601 = vrot.slane %v597, 2
  %v603 = vadd.f32 %v204, %v601
  %v604 = vxor.u32 %v603, 2147483648
  %v605 = vmul.f32 %v604, 1.442695
  %v606 = vpow.pop %v605
  %v607 = vadd.f32 %v606, 1.0
  %v608 = vrcp.pop %v607
  %v609 = vmul.f32 1.0, %v608
  %v610 = vtanh.pop %v603
  %v612 = vrot.slane %v517, 6
  %v614 = vmul.f32 %v609, %v612
  %616 = vrot.lane.b32.xlu0 %v610, 64
  %v617 = vpop.permute.xlu0 %616
  %v619 = vmul.f32 %v609, %v617
  %621 = vrot.lane.b32.xlu0 %v619, 32
  %v622 = vpop.permute.xlu0 %621
  %v624 = vadd.f32 %v614, %v622
  %v625 = vtanh.pop %v624
  %627 = vrot.lane.b32.xlu0 %v625, 64
  %v628 = vpop.permute.xlu0 %627
  %v630 = vmul.f32 %v609, %v628
  %v632 = vrot.slane %v630, 6
  %633 = vrot.lane.b32.xlu0 %v632, 32
  %v634 = vpop.permute.xlu0 %633
  %v635 = vsel %vm212, %v634, 0
  %637 = vmatprep.subr.mxu0 0.0
  %638 = vmatpush1.msra.mxu0 %v80
  %639 = vmatprep.subr.mxu0 0.0
  %640 = vmatpush1.msra.mxu0 %v81
  %641 = vmatprep.subr.mxu0 0.0
  %642 = vmatpush1.msra.mxu0 %v82
  %643 = vmatprep.subr.mxu0 0.0
  %644 = vmatpush1.msra.mxu0 %v83
  %645 = vmatprep.subr.mxu0 0.0
  %646 = vmatpush1.msra.mxu0 0.0
  %647 = vmatprep.subr.mxu0 0.0
  %648 = vmatpush1.msra.mxu0 0.0
  %649 = vmatprep.subr.mxu0 0.0
  %650 = vmatpush1.msra.mxu0 0.0
  %651 = vmatprep.subr.mxu0 0.0
  %652 = vmatpush1.msra.mxu0 0.0
  %653 = vmatprep.subr.mxu0 0.0
  %654 = vmatpush1.msra.mxu0 0.0
  %655 = vmatprep.subr.mxu0 0.0
  %656 = vmatpush1.msra.mxu0 0.0
  %657 = vmatprep.subr.mxu0 0.0
  %658 = vmatpush1.msra.mxu0 0.0
  %659 = vmatprep.subr.mxu0 0.0
  %660 = vmatpush1.msra.mxu0 0.0
  %661 = vmatprep.subr.mxu0 0.0
  %662 = vmatpush1.msra.mxu0 0.0
  %663 = vmatprep.subr.mxu0 0.0
  %664 = vmatpush1.msra.mxu0 0.0
  %665 = vmatprep.subr.mxu0 0.0
  %666 = vmatpush1.msra.mxu0 0.0
  %667 = vmatprep.subr.mxu0 0.0
  %668 = vmatpush1.msra.mxu0 0.0
  %669 = vmatprep.subr.mxu0 0.0
  %670 = vmatpush1.msra.mxu0 0.0
  %671 = vmatprep.subr.mxu0 0.0
  %672 = vmatpush1.msra.mxu0 0.0
  %673 = vmatprep.subr.mxu0 0.0
  %674 = vmatpush1.msra.mxu0 0.0
  %675 = vmatprep.subr.mxu0 0.0
  %676 = vmatpush1.msra.mxu0 0.0
  %677 = vmatprep.subr.mxu0 0.0
  %678 = vmatpush1.msra.mxu0 0.0
  %679 = vmatprep.subr.mxu0 0.0
  %680 = vmatpush1.msra.mxu0 0.0
  %681 = vmatprep.subr.mxu0 0.0
  %682 = vmatpush1.msra.mxu0 0.0
  %683 = vmatprep.subr.mxu0 0.0
  %684 = vmatpush1.msra.mxu0 0.0
  %685 = vmatprep.subr.mxu0 0.0
  %686 = vmatpush1.msra.mxu0 0.0
  %687 = vmatprep.subr.mxu0 0.0
  %688 = vmatpush1.msra.mxu0 0.0
  %689 = vmatprep.subr.mxu0 0.0
  %690 = vmatpush1.msra.mxu0 0.0
  %691 = vmatprep.subr.mxu0 0.0
  %692 = vmatpush1.msra.mxu0 0.0
  %693 = vmatprep.subr.mxu0 0.0
  %694 = vmatpush1.msra.mxu0 0.0
  %695 = vmatprep.subr.mxu0 0.0
  %696 = vmatpush1.msra.mxu0 0.0
  %697 = vmatprep.subr.mxu0 0.0
  %698 = vmatpush1.msra.mxu0 0.0
  %699 = vmatprep.subr.mxu0 0.0
  %700 = vmatpush1.msra.mxu0 0.0
  %701 = vmatprep.mubr.f32.mxu0 0.0
  %702 = vmatmul.mubr.f32.gmra.mrb[0].mxu0 %v635
  %v703 = vpop.f32.mrb[0].mxu0
  %v704 = vadd.f32 0.0, %v703
  %v705 = vpop.f32.mrb[0].mxu0
  %706 = vdwg.mxu0
  %v707 = vadd.f32 %v209, %v704
  %v708 = vxor.u32 %v707, 2147483648
  %v709 = vmul.f32 %v708, 1.442695
  %v710 = vpow.pop %v709
  %v711 = vadd.f32 %v710, 1.0
  %v712 = vrcp.pop %v711
  %v713 = vmul.f32 1.0, %v712
  %v714 = vtanh.pop %v707
  %v716 = vrot.slane %v624, 6
  %v718 = vmul.f32 %v713, %v716
  %720 = vrot.lane.b32.xlu0 %v714, 64
  %v721 = vpop.permute.xlu0 %720
  %v723 = vmul.f32 %v713, %v721
  %725 = vrot.lane.b32.xlu0 %v723, 32
  %v726 = vpop.permute.xlu0 %725
  %v728 = vadd.f32 %v718, %v726
  %v729 = vtanh.pop %v728
  %731 = vrot.lane.b32.xlu0 %v729, 64
  %v732 = vpop.permute.xlu0 %731
  %v734 = vmul.f32 %v713, %v732
  %736 = vrot.lane.b32.xlu0 %v734, 32
  %v737 = vpop.permute.xlu0 %736
  %v738 = vsel %vm212, %v737, 0
  %740 = vmatprep.subr.mxu0 0.0
  %741 = vmatpush1.msra.mxu0 %v80
  %742 = vmatprep.subr.mxu0 0.0
  %743 = vmatpush1.msra.mxu0 %v81
  %744 = vmatprep.subr.mxu0 0.0
  %745 = vmatpush1.msra.mxu0 %v82
  %746 = vmatprep.subr.mxu0 0.0
  %747 = vmatpush1.msra.mxu0 %v83
  %748 = vmatprep.subr.mxu0 0.0
  %749 = vmatpush1.msra.mxu0 0.0
  %750 = vmatprep.subr.mxu0 0.0
  %751 = vmatpush1.msra.mxu0 0.0
  %752 = vmatprep.subr.mxu0 0.0
  %753 = vmatpush1.msra.mxu0 0.0
  %754 = vmatprep.subr.mxu0 0.0
  %755 = vmatpush1.msra.mxu0 0.0
  %756 = vmatprep.subr.mxu0 0.0
  %757 = vmatpush1.msra.mxu0 0.0
  %758 = vmatprep.subr.mxu0 0.0
  %759 = vmatpush1.msra.mxu0 0.0
  %760 = vmatprep.subr.mxu0 0.0
  %761 = vmatpush1.msra.mxu0 0.0
  %762 = vmatprep.subr.mxu0 0.0
  %763 = vmatpush1.msra.mxu0 0.0
  %764 = vmatprep.subr.mxu0 0.0
  %765 = vmatpush1.msra.mxu0 0.0
  %766 = vmatprep.subr.mxu0 0.0
  %767 = vmatpush1.msra.mxu0 0.0
  %768 = vmatprep.subr.mxu0 0.0
  %769 = vmatpush1.msra.mxu0 0.0
  %770 = vmatprep.subr.mxu0 0.0
  %771 = vmatpush1.msra.mxu0 0.0
  %772 = vmatprep.subr.mxu0 0.0
  %773 = vmatpush1.msra.mxu0 0.0
  %774 = vmatprep.subr.mxu0 0.0
  %775 = vmatpush1.msra.mxu0 0.0
  %776 = vmatprep.subr.mxu0 0.0
  %777 = vmatpush1.msra.mxu0 0.0
  %778 = vmatprep.subr.mxu0 0.0
  %779 = vmatpush1.msra.mxu0 0.0
  %780 = vmatprep.subr.mxu0 0.0
  %781 = vmatpush1.msra.mxu0 0.0
  %782 = vmatprep.subr.mxu0 0.0
  %783 = vmatpush1.msra.mxu0 0.0
  %784 = vmatprep.subr.mxu0 0.0
  %785 = vmatpush1.msra.mxu0 0.0
  %786 = vmatprep.subr.mxu0 0.0
  %787 = vmatpush1.msra.mxu0 0.0
  %788 = vmatprep.subr.mxu0 0.0
  %789 = vmatpush1.msra.mxu0 0.0
  %790 = vmatprep.subr.mxu0 0.0
  %791 = vmatpush1.msra.mxu0 0.0
  %792 = vmatprep.subr.mxu0 0.0
  %793 = vmatpush1.msra.mxu0 0.0
  %794 = vmatprep.subr.mxu0 0.0
  %795 = vmatpush1.msra.mxu0 0.0
  %796 = vmatprep.subr.mxu0 0.0
  %797 = vmatpush1.msra.mxu0 0.0
  %798 = vmatprep.subr.mxu0 0.0
  %799 = vmatpush1.msra.mxu0 0.0
  %800 = vmatprep.subr.mxu0 0.0
  %801 = vmatpush1.msra.mxu0 0.0
  %802 = vmatprep.subr.mxu0 0.0
  %803 = vmatpush1.msra.mxu0 0.0
  %804 = vmatprep.mubr.f32.mxu0 0.0
  %805 = vmatmul.mubr.f32.gmra.mrb[0].mxu0 %v738
  %v806 = vpop.f32.mrb[0].mxu0
  %v807 = vadd.f32 0.0, %v806
  %v808 = vpop.f32.mrb[0].mxu0
  %809 = vdwg.mxu0
  %v811 = vrot.slane %v807, 6
  %v813 = vadd.f32 %v209, %v811
  %v814 = vxor.u32 %v813, 2147483648
  %v815 = vmul.f32 %v814, 1.442695
  %v816 = vpow.pop %v815
  %v817 = vadd.f32 %v816, 1.0
  %v818 = vrcp.pop %v817
  %v819 = vmul.f32 1.0, %v818
  %v820 = vtanh.pop %v813
  %v822 = vrot.slane %v728, 6
  %v824 = vmul.f32 %v819, %v822
  %826 = vrot.lane.b32.xlu0 %v820, 64
  %v827 = vpop.permute.xlu0 %826
  %v829 = vmul.f32 %v819, %v827
  %831 = vrot.lane.b32.xlu0 %v829, 32
  %v832 = vpop.permute.xlu0 %831
  %v834 = vadd.f32 %v824, %v832
  %v835 = vtanh.pop %v834
  %837 = vrot.lane.b32.xlu0 %v835, 64
  %v838 = vpop.permute.xlu0 %837
  %v840 = vmul.f32 %v819, %v838
  %v842 = vrot.slane %v840, 2
  %843 = vrot.lane.b32.xlu0 %v842, 32
  %v844 = vpop.permute.xlu0 %843
  %v845 = vsel %vm212, %v844, 0
  %847 = vmatprep.subr.mxu0 0.0
  %848 = vmatpush1.msra.mxu0 %v80
  %849 = vmatprep.subr.mxu0 0.0
  %850 = vmatpush1.msra.mxu0 %v81
  %851 = vmatprep.subr.mxu0 0.0
  %852 = vmatpush1.msra.mxu0 %v82
  %853 = vmatprep.subr.mxu0 0.0
  %854 = vmatpush1.msra.mxu0 %v83
  %855 = vmatprep.subr.mxu0 0.0
  %856 = vmatpush1.msra.mxu0 0.0
  %857 = vmatprep.subr.mxu0 0.0
  %858 = vmatpush1.msra.mxu0 0.0
  %859 = vmatprep.subr.mxu0 0.0
  %860 = vmatpush1.msra.mxu0 0.0
  %861 = vmatprep.subr.mxu0 0.0
  %862 = vmatpush1.msra.mxu0 0.0
  %863 = vmatprep.subr.mxu0 0.0
  %864 = vmatpush1.msra.mxu0 0.0
  %865 = vmatprep.subr.mxu0 0.0
  %866 = vmatpush1.msra.mxu0 0.0
  %867 = vmatprep.subr.mxu0 0.0
  %868 = vmatpush1.msra.mxu0 0.0
  %869 = vmatprep.subr.mxu0 0.0
  %870 = vmatpush1.msra.mxu0 0.0
  %871 = vmatprep.subr.mxu0 0.0
  %872 = vmatpush1.msra.mxu0 0.0
  %873 = vmatprep.subr.mxu0 0.0
  %874 = vmatpush1.msra.mxu0 0.0
  %875 = vmatprep.subr.mxu0 0.0
  %876 = vmatpush1.msra.mxu0 0.0
  %877 = vmatprep.subr.mxu0 0.0
  %878 = vmatpush1.msra.mxu0 0.0
  %879 = vmatprep.subr.mxu0 0.0
  %880 = vmatpush1.msra.mxu0 0.0
  %881 = vmatprep.subr.mxu0 0.0
  %882 = vmatpush1.msra.mxu0 0.0
  %883 = vmatprep.subr.mxu0 0.0
  %884 = vmatpush1.msra.mxu0 0.0
  %885 = vmatprep.subr.mxu0 0.0
  %886 = vmatpush1.msra.mxu0 0.0
  %887 = vmatprep.subr.mxu0 0.0
  %888 = vmatpush1.msra.mxu0 0.0
  %889 = vmatprep.subr.mxu0 0.0
  %890 = vmatpush1.msra.mxu0 0.0
  %891 = vmatprep.subr.mxu0 0.0
  %892 = vmatpush1.msra.mxu0 0.0
  %893 = vmatprep.subr.mxu0 0.0
  %894 = vmatpush1.msra.mxu0 0.0
  %895 = vmatprep.subr.mxu0 0.0
  %896 = vmatpush1.msra.mxu0 0.0
  %897 = vmatprep.subr.mxu0 0.0
  %898 = vmatpush1.msra.mxu0 0.0
  %899 = vmatprep.subr.mxu0 0.0
  %900 = vmatpush1.msra.mxu0 0.0
  %901 = vmatprep.subr.mxu0 0.0
  %902 = vmatpush1.msra.mxu0 0.0
  %903 = vmatprep.subr.mxu0 0.0
  %904 = vmatpush1.msra.mxu0 0.0
  %905 = vmatprep.subr.mxu0 0.0
  %906 = vmatpush1.msra.mxu0 0.0
  %907 = vmatprep.subr.mxu0 0.0
  %908 = vmatpush1.msra.mxu0 0.0
  %909 = vmatprep.subr.mxu0 0.0
  %910 = vmatpush1.msra.mxu0 0.0
  %911 = vmatprep.mubr.f32.mxu0 0.0
  %912 = vmatmul.mubr.f32.gmra.mrb[0].mxu0 %v845
  %v913 = vpop.f32.mrb[0].mxu0
  %v914 = vadd.f32 0.0, %v913
  %v915 = vpop.f32.mrb[0].mxu0
  %916 = vdwg.mxu0
  %v918 = vrot.slane %v914, 4
  %v920 = vadd.f32 %v209, %v918
  %v921 = vxor.u32 %v920, 2147483648
  %v922 = vmul.f32 %v921, 1.442695
  %v923 = vpow.pop %v922
  %v924 = vadd.f32 %v923, 1.0
  %v925 = vrcp.pop %v924
  %v926 = vmul.f32 1.0, %v925
  %v927 = vtanh.pop %v920
  %v929 = vrot.slane %v834, 6
  %v931 = vmul.f32 %v926, %v929
  %933 = vrot.lane.b32.xlu0 %v927, 64
  %v934 = vpop.permute.xlu0 %933
  %v936 = vmul.f32 %v926, %v934
  %938 = vrot.lane.b32.xlu0 %v936, 32
  %v939 = vpop.permute.xlu0 %938
  %v941 = vadd.f32 %v931, %v939
  %v942 = vtanh.pop %v941
  %944 = vrot.lane.b32.xlu0 %v942, 64
  %v945 = vpop.permute.xlu0 %944
  %v947 = vmul.f32 %v926, %v945
  %v949 = vrot.slane %v947, 4
  %950 = vrot.lane.b32.xlu0 %v949, 32
  %v951 = vpop.permute.xlu0 %950
  %v952 = vsel %vm212, %v951, 0
  %954 = vmatprep.subr.mxu0 0.0
  %955 = vmatpush1.msra.mxu0 %v80
  %956 = vmatprep.subr.mxu0 0.0
  %957 = vmatpush1.msra.mxu0 %v81
  %958 = vmatprep.subr.mxu0 0.0
  %959 = vmatpush1.msra.mxu0 %v82
  %960 = vmatprep.subr.mxu0 0.0
  %961 = vmatpush1.msra.mxu0 %v83
  %962 = vmatprep.subr.mxu0 0.0
  %963 = vmatpush1.msra.mxu0 0.0
  %964 = vmatprep.subr.mxu0 0.0
  %965 = vmatpush1.msra.mxu0 0.0
  %966 = vmatprep.subr.mxu0 0.0
  %967 = vmatpush1.msra.mxu0 0.0
  %968 = vmatprep.subr.mxu0 0.0
  %969 = vmatpush1.msra.mxu0 0.0
  %970 = vmatprep.subr.mxu0 0.0
  %971 = vmatpush1.msra.mxu0 0.0
  %972 = vmatprep.subr.mxu0 0.0
  %973 = vmatpush1.msra.mxu0 0.0
  %974 = vmatprep.subr.mxu0 0.0
  %975 = vmatpush1.msra.mxu0 0.0
  %976 = vmatprep.subr.mxu0 0.0
  %977 = vmatpush1.msra.mxu0 0.0
  %978 = vmatprep.subr.mxu0 0.0
  %979 = vmatpush1.msra.mxu0 0.0
  %980 = vmatprep.subr.mxu0 0.0
  %981 = vmatpush1.msra.mxu0 0.0
  %982 = vmatprep.subr.mxu0 0.0
  %983 = vmatpush1.msra.mxu0 0.0
  %984 = vmatprep.subr.mxu0 0.0
  %985 = vmatpush1.msra.mxu0 0.0
  %986 = vmatprep.subr.mxu0 0.0
  %987 = vmatpush1.msra.mxu0 0.0
  %988 = vmatprep.subr.mxu0 0.0
  %989 = vmatpush1.msra.mxu0 0.0
  %990 = vmatprep.subr.mxu0 0.0
  %991 = vmatpush1.msra.mxu0 0.0
  %992 = vmatprep.subr.mxu0 0.0
  %993 = vmatpush1.msra.mxu0 0.0
  %994 = vmatprep.subr.mxu0 0.0
  %995 = vmatpush1.msra.mxu0 0.0
  %996 = vmatprep.subr.mxu0 0.0
  %997 = vmatpush1.msra.mxu0 0.0
  %998 = vmatprep.subr.mxu0 0.0
  %999 = vmatpush1.msra.mxu0 0.0
  %1000 = vmatprep.subr.mxu0 0.0
  %1001 = vmatpush1.msra.mxu0 0.0
  %1002 = vmatprep.subr.mxu0 0.0
  %1003 = vmatpush1.msra.mxu0 0.0
  %1004 = vmatprep.subr.mxu0 0.0
  %1005 = vmatpush1.msra.mxu0 0.0
  %1006 = vmatprep.subr.mxu0 0.0
  %1007 = vmatpush1.msra.mxu0 0.0
  %1008 = vmatprep.subr.mxu0 0.0
  %1009 = vmatpush1.msra.mxu0 0.0
  %1010 = vmatprep.subr.mxu0 0.0
  %1011 = vmatpush1.msra.mxu0 0.0
  %1012 = vmatprep.subr.mxu0 0.0
  %1013 = vmatpush1.msra.mxu0 0.0
  %1014 = vmatprep.subr.mxu0 0.0
  %1015 = vmatpush1.msra.mxu0 0.0
  %1016 = vmatprep.subr.mxu0 0.0
  %1017 = vmatpush1.msra.mxu0 0.0
  %1018 = vmatprep.mubr.f32.mxu0 0.0
  %1019 = vmatmul.mubr.f32.gmra.mrb[0].mxu0 %v952
  %v1020 = vpop.f32.mrb[0].mxu0
  %v1021 = vadd.f32 0.0, %v1020
  %v1022 = vpop.f32.mrb[0].mxu0
  %1023 = vdwg.mxu0
  %v1025 = vrot.slane %v1021, 2
  %v1027 = vadd.f32 %v209, %v1025
  %v1028 = vxor.u32 %v1027, 2147483648
  %v1029 = vmul.f32 %v1028, 1.442695
  %v1030 = vpow.pop %v1029
  %v1031 = vadd.f32 %v1030, 1.0
  %v1032 = vrcp.pop %v1031
  %v1033 = vmul.f32 1.0, %v1032
  %v1034 = vtanh.pop %v1027
  %v1036 = vrot.slane %v941, 6
  %v1038 = vmul.f32 %v1033, %v1036
  %1040 = vrot.lane.b32.xlu0 %v1034, 64
  %v1041 = vpop.permute.xlu0 %1040
  %v1043 = vmul.f32 %v1033, %v1041
  %1045 = vrot.lane.b32.xlu0 %v1043, 32
  %v1046 = vpop.permute.xlu0 %1045
  %v1048 = vadd.f32 %v1038, %v1046
  %v1049 = vtanh.pop %v1048
  %1051 = vrot.lane.b32.xlu0 %v1049, 64
  %v1052 = vpop.permute.xlu0 %1051
  %v1054 = vmul.f32 %v1033, %v1052
  %v1056 = vlaneseq
  %v1057 = vshrl.u32 %v1056, 7
  %v1058 = vsub.s32 0, %v1057
  %v1059 = vrot.slane %v88, %v1058
  %vm1061 = vcmask 48128
  %v1063 = vsel %vm1061, %v75, 0
  %v1066 = vsel %vm1061, %v76, 0
  %v1069 = vsel %vm1061, %v77, 0
  %vm1071 = vcmask 1045504
  %v1073 = vsel %vm1071, %v85, 0
  %1075 = vmatprep.subr.mxu0 0.0
  %1076 = vmatpush1.msra.mxu0 %v1073
  %1077 = vmatprep.subr.mxu0 0.0
  %1078 = vmatpush1.msra.mxu0 0.0
  %1079 = vmatprep.subr.mxu0 0.0
  %1080 = vmatpush1.msra.mxu0 0.0
  %1081 = vmatprep.subr.mxu0 0.0
  %1082 = vmatpush1.msra.mxu0 0.0
  %1083 = vmatprep.subr.mxu0 0.0
  %1084 = vmatpush1.msra.mxu0 0.0
  %1085 = vmatprep.subr.mxu0 0.0
  %1086 = vmatpush1.msra.mxu0 0.0
  %1087 = vmatprep.subr.mxu0 0.0
  %1088 = vmatpush1.msra.mxu0 0.0
  %1089 = vmatprep.subr.mxu0 0.0
  %1090 = vmatpush1.msra.mxu0 0.0
  %1091 = vmatprep.subr.mxu0 0.0
  %1092 = vmatpush1.msra.mxu0 0.0
  %1093 = vmatprep.subr.mxu0 0.0
  %1094 = vmatpush1.msra.mxu0 0.0
  %1095 = vmatprep.subr.mxu0 0.0
  %1096 = vmatpush1.msra.mxu0 0.0
  %1097 = vmatprep.subr.mxu0 0.0
  %1098 = vmatpush1.msra.mxu0 0.0
  %1099 = vmatprep.subr.mxu0 0.0
  %1100 = vmatpush1.msra.mxu0 0.0
  %1101 = vmatprep.subr.mxu0 0.0
  %1102 = vmatpush1.msra.mxu0 0.0
  %1103 = vmatprep.subr.mxu0 0.0
  %1104 = vmatpush1.msra.mxu0 0.0
  %1105 = vmatprep.subr.mxu0 0.0
  %1106 = vmatpush1.msra.mxu0 0.0
  %1107 = vmatprep.subr.mxu0 0.0
  %1108 = vmatpush1.msra.mxu0 0.0
  %1109 = vmatprep.subr.mxu0 0.0
  %1110 = vmatpush1.msra.mxu0 0.0
  %1111 = vmatprep.subr.mxu0 0.0
  %1112 = vmatpush1.msra.mxu0 0.0
  %1113 = vmatprep.subr.mxu0 0.0
  %1114 = vmatpush1.msra.mxu0 0.0
  %1115 = vmatprep.subr.mxu0 0.0
  %1116 = vmatpush1.msra.mxu0 0.0
  %1117 = vmatprep.subr.mxu0 0.0
  %1118 = vmatpush1.msra.mxu0 0.0
  %1119 = vmatprep.subr.mxu0 0.0
  %1120 = vmatpush1.msra.mxu0 0.0
  %1121 = vmatprep.subr.mxu0 0.0
  %1122 = vmatpush1.msra.mxu0 0.0
  %1123 = vmatprep.subr.mxu0 0.0
  %1124 = vmatpush1.msra.mxu0 0.0
  %1125 = vmatprep.subr.mxu0 0.0
  %1126 = vmatpush1.msra.mxu0 0.0
  %1127 = vmatprep.subr.mxu0 0.0
  %1128 = vmatpush1.msra.mxu0 0.0
  %1129 = vmatprep.subr.mxu0 0.0
  %1130 = vmatpush1.msra.mxu0 0.0
  %1131 = vmatprep.subr.mxu0 0.0
  %1132 = vmatpush1.msra.mxu0 0.0
  %1133 = vmatprep.subr.mxu0 0.0
  %1134 = vmatpush1.msra.mxu0 0.0
  %1135 = vmatprep.subr.mxu0 0.0
  %1136 = vmatpush1.msra.mxu0 0.0
  %1137 = vmatprep.subr.mxu0 0.0
  %1138 = vmatpush1.msra.mxu0 0.0
  %1139 = vmatprep.mubr.f32.mxu0 0.0
  %1140 = vmatmul.mubr.f32.gmra.mrb[0].mxu0 %v1063
  %v1141 = vpop.f32.mrb[0].mxu0
  %v1142 = vadd.f32 %v1059, %v1141
  %v1143 = vpop.f32.mrb[0].mxu0
  %1144 = vmatprep.mubr.f32.mxu0 0.0
  %1145 = vmatmul.mubr.f32.gmra.mrb[0].mxu0 %v1066
  %v1146 = vpop.f32.mrb[0].mxu0
  %v1147 = vadd.f32 %v1059, %v1146
  %v1148 = vpop.f32.mrb[0].mxu0
  %1149 = vmatprep.mubr.f32.mxu0 0.0
  %1150 = vmatmul.mubr.f32.gmra.mrb[0].mxu0 %v1069
  %v1151 = vpop.f32.mrb[0].mxu0
  %v1152 = vadd.f32 %v1059, %v1151
  %v1153 = vpop.f32.mrb[0].mxu0
  %1154 = vdwg.mxu0
  %vm1155 = vcmask 130048
  %v1156 = vsel %vm1155, 0.0, 0
  %1158 = vmatprep.subr.mxu0 0.0
  %1159 = vmatpush1.msra.mxu0 %v86
  %1160 = vmatprep.subr.mxu0 0.0
  %1161 = vmatpush1.msra.mxu0 %v87
  %1162 = vmatprep.subr.mxu0 0.0
  %1163 = vmatpush1.msra.mxu0 0.0
  %1164 = vmatprep.subr.mxu0 0.0
  %1165 = vmatpush1.msra.mxu0 0.0
  %1166 = vmatprep.subr.mxu0 0.0
  %1167 = vmatpush1.msra.mxu0 0.0
  %1168 = vmatprep.subr.mxu0 0.0
  %1169 = vmatpush1.msra.mxu0 0.0
  %1170 = vmatprep.subr.mxu0 0.0
  %1171 = vmatpush1.msra.mxu0 0.0
  %1172 = vmatprep.subr.mxu0 0.0
  %1173 = vmatpush1.msra.mxu0 0.0
  %1174 = vmatprep.subr.mxu0 0.0
  %1175 = vmatpush1.msra.mxu0 0.0
  %1176 = vmatprep.subr.mxu0 0.0
  %1177 = vmatpush1.msra.mxu0 0.0
  %1178 = vmatprep.subr.mxu0 0.0
  %1179 = vmatpush1.msra.mxu0 0.0
  %1180 = vmatprep.subr.mxu0 0.0
  %1181 = vmatpush1.msra.mxu0 0.0
  %1182 = vmatprep.subr.mxu0 0.0
  %1183 = vmatpush1.msra.mxu0 0.0
  %1184 = vmatprep.subr.mxu0 0.0
  %1185 = vmatpush1.msra.mxu0 0.0
  %1186 = vmatprep.subr.mxu0 0.0
  %1187 = vmatpush1.msra.mxu0 0.0
  %1188 = vmatprep.subr.mxu0 0.0
  %1189 = vmatpush1.msra.mxu0 0.0
  %1190 = vmatprep.subr.mxu0 0.0
  %1191 = vmatpush1.msra.mxu0 0.0
  %1192 = vmatprep.subr.mxu0 0.0
  %1193 = vmatpush1.msra.mxu0 0.0
  %1194 = vmatprep.subr.mxu0 0.0
  %1195 = vmatpush1.msra.mxu0 0.0
  %1196 = vmatprep.subr.mxu0 0.0
  %1197 = vmatpush1.msra.mxu0 0.0
  %1198 = vmatprep.subr.mxu0 0.0
  %1199 = vmatpush1.msra.mxu0 0.0
  %1200 = vmatprep.subr.mxu0 0.0
  %1201 = vmatpush1.msra.mxu0 0.0
  %1202 = vmatprep.subr.mxu0 0.0
  %1203 = vmatpush1.msra.mxu0 0.0
  %1204 = vmatprep.subr.mxu0 0.0
  %1205 = vmatpush1.msra.mxu0 0.0
  %1206 = vmatprep.subr.mxu0 0.0
  %1207 = vmatpush1.msra.mxu0 0.0
  %1208 = vmatprep.subr.mxu0 0.0
  %1209 = vmatpush1.msra.mxu0 0.0
  %1210 = vmatprep.subr.mxu0 0.0
  %1211 = vmatpush1.msra.mxu0 0.0
  %1212 = vmatprep.subr.mxu0 0.0
  %1213 = vmatpush1.msra.mxu0 0.0
  %1214 = vmatprep.subr.mxu0 0.0
  %1215 = vmatpush1.msra.mxu0 0.0
  %1216 = vmatprep.subr.mxu0 0.0
  %1217 = vmatpush1.msra.mxu0 0.0
  %1218 = vmatprep.subr.mxu0 0.0
  %1219 = vmatpush1.msra.mxu0 0.0
  %1220 = vmatprep.subr.mxu0 0.0
  %1221 = vmatpush1.msra.mxu0 0.0
  %1222 = vmatprep.mubr.f32.mxu0 0.0
  %1223 = vmatmul.mubr.f32.gmra.mrb[0].mxu0 %v1156
  %v1224 = vpop.f32.mrb[0].mxu0
  %v1225 = vadd.f32 0.0, %v1224
  %v1226 = vpop.f32.mrb[0].mxu0
  %1227 = vdwg.mxu0
  %v1228 = vadd.f32 %v1142, %v1225
  %v1229 = vxor.u32 %v1228, 2147483648
  %v1230 = vmul.f32 %v1229, 1.442695
  %v1231 = vpow.pop %v1230
  %v1232 = vadd.f32 %v1231, 1.0
  %v1233 = vrcp.pop %v1232
  %v1234 = vmul.f32 1.0, %v1233
  %v1235 = vtanh.pop %v1228
  %v1236 = vmul.f32 %v1234, 0.0
  %1238 = vrot.lane.b32.xlu0 %v1235, 96
  %v1239 = vpop.permute.xlu0 %1238
  %v1241 = vmul.f32 %v1234, %v1239
  %1243 = vrot.lane.b32.xlu0 %v1241, 16
  %v1244 = vpop.permute.xlu0 %1243
  %v1246 = vadd.f32 %v1236, %v1244
  %v1247 = vtanh.pop %v1246
  %1249 = vrot.lane.b32.xlu0 %v1247, 32
  %v1250 = vpop.permute.xlu0 %1249
  %v1252 = vmul.f32 %v1234, %v1250
  %1254 = vrot.lane.b32.xlu0 %v1252, 80
  %v1255 = vpop.permute.xlu0 %1254
  %v1256 = vsel %vm1155, %v1255, 0
  %1258 = vmatprep.subr.mxu0 0.0
  %1259 = vmatpush1.msra.mxu0 %v86
  %1260 = vmatprep.subr.mxu0 0.0
  %1261 = vmatpush1.msra.mxu0 %v87
  %1262 = vmatprep.subr.mxu0 0.0
  %1263 = vmatpush1.msra.mxu0 0.0
  %1264 = vmatprep.subr.mxu0 0.0
  %1265 = vmatpush1.msra.mxu0 0.0
  %1266 = vmatprep.subr.mxu0 0.0
  %1267 = vmatpush1.msra.mxu0 0.0
  %1268 = vmatprep.subr.mxu0 0.0
  %1269 = vmatpush1.msra.mxu0 0.0
  %1270 = vmatprep.subr.mxu0 0.0
  %1271 = vmatpush1.msra.mxu0 0.0
  %1272 = vmatprep.subr.mxu0 0.0
  %1273 = vmatpush1.msra.mxu0 0.0
  %1274 = vmatprep.subr.mxu0 0.0
  %1275 = vmatpush1.msra.mxu0 0.0
  %1276 = vmatprep.subr.mxu0 0.0
  %1277 = vmatpush1.msra.mxu0 0.0
  %1278 = vmatprep.subr.mxu0 0.0
  %1279 = vmatpush1.msra.mxu0 0.0
  %1280 = vmatprep.subr.mxu0 0.0
  %1281 = vmatpush1.msra.mxu0 0.0
  %1282 = vmatprep.subr.mxu0 0.0
  %1283 = vmatpush1.msra.mxu0 0.0
  %1284 = vmatprep.subr.mxu0 0.0
  %1285 = vmatpush1.msra.mxu0 0.0
  %1286 = vmatprep.subr.mxu0 0.0
  %1287 = vmatpush1.msra.mxu0 0.0
  %1288 = vmatprep.subr.mxu0 0.0
  %1289 = vmatpush1.msra.mxu0 0.0
  %1290 = vmatprep.subr.mxu0 0.0
  %1291 = vmatpush1.msra.mxu0 0.0
  %1292 = vmatprep.subr.mxu0 0.0
  %1293 = vmatpush1.msra.mxu0 0.0
  %1294 = vmatprep.subr.mxu0 0.0
  %1295 = vmatpush1.msra.mxu0 0.0
  %1296 = vmatprep.subr.mxu0 0.0
  %1297 = vmatpush1.msra.mxu0 0.0
  %1298 = vmatprep.subr.mxu0 0.0
  %1299 = vmatpush1.msra.mxu0 0.0
  %1300 = vmatprep.subr.mxu0 0.0
  %1301 = vmatpush1.msra.mxu0 0.0
  %1302 = vmatprep.subr.mxu0 0.0
  %1303 = vmatpush1.msra.mxu0 0.0
  %1304 = vmatprep.subr.mxu0 0.0
  %1305 = vmatpush1.msra.mxu0 0.0
  %1306 = vmatprep.subr.mxu0 0.0
  %1307 = vmatpush1.msra.mxu0 0.0
  %1308 = vmatprep.subr.mxu0 0.0
  %1309 = vmatpush1.msra.mxu0 0.0
  %1310 = vmatprep.subr.mxu0 0.0
  %1311 = vmatpush1.msra.mxu0 0.0
  %1312 = vmatprep.subr.mxu0 0.0
  %1313 = vmatpush1.msra.mxu0 0.0
  %1314 = vmatprep.subr.mxu0 0.0
  %1315 = vmatpush1.msra.mxu0 0.0
  %1316 = vmatprep.subr.mxu0 0.0
  %1317 = vmatpush1.msra.mxu0 0.0
  %1318 = vmatprep.subr.mxu0 0.0
  %1319 = vmatpush1.msra.mxu0 0.0
  %1320 = vmatprep.subr.mxu0 0.0
  %1321 = vmatpush1.msra.mxu0 0.0
  %1322 = vmatprep.mubr.f32.mxu0 0.0
  %1323 = vmatmul.mubr.f32.gmra.mrb[0].mxu0 %v1256
  %v1324 = vpop.f32.mrb[0].mxu0
  %v1325 = vadd.f32 0.0, %v1324
  %v1326 = vpop.f32.mrb[0].mxu0
  %1327 = vdwg.mxu0
  %v1329 = vrot.slane %v1325, 6
  %v1331 = vadd.f32 %v1142, %v1329
  %v1332 = vxor.u32 %v1331, 2147483648
  %v1333 = vmul.f32 %v1332, 1.442695
  %v1334 = vpow.pop %v1333
  %v1335 = vadd.f32 %v1334, 1.0
  %v1336 = vrcp.pop %v1335
  %v1337 = vmul.f32 1.0, %v1336
  %v1338 = vtanh.pop %v1331
  %v1340 = vrot.slane %v1246, 6
  %v1342 = vmul.f32 %v1337, %v1340
  %1344 = vrot.lane.b32.xlu0 %v1338, 96
  %v1345 = vpop.permute.xlu0 %1344
  %v1347 = vmul.f32 %v1337, %v1345
  %1349 = vrot.lane.b32.xlu0 %v1347, 16
  %v1350 = vpop.permute.xlu0 %1349
  %v1352 = vadd.f32 %v1342, %v1350
  %v1353 = vtanh.pop %v1352
  %1355 = vrot.lane.b32.xlu0 %v1353, 32
  %v1356 = vpop.permute.xlu0 %1355
  %v1358 = vmul.f32 %v1337, %v1356
  %v1360 = vrot.slane %v1358, 2
  %1361 = vrot.lane.b32.xlu0 %v1360, 80
  %v1362 = vpop.permute.xlu0 %1361
  %v1363 = vsel %vm1155, %v1362, 0
  %1365 = vmatprep.subr.mxu0 0.0
  %1366 = vmatpush1.msra.mxu0 %v86
  %1367 = vmatprep.subr.mxu0 0.0
  %1368 = vmatpush1.msra.mxu0 %v87
  %1369 = vmatprep.subr.mxu0 0.0
  %1370 = vmatpush1.msra.mxu0 0.0
  %1371 = vmatprep.subr.mxu0 0.0
  %1372 = vmatpush1.msra.mxu0 0.0
  %1373 = vmatprep.subr.mxu0 0.0
  %1374 = vmatpush1.msra.mxu0 0.0
  %1375 = vmatprep.subr.mxu0 0.0
  %1376 = vmatpush1.msra.mxu0 0.0
  %1377 = vmatprep.subr.mxu0 0.0
  %1378 = vmatpush1.msra.mxu0 0.0
  %1379 = vmatprep.subr.mxu0 0.0
  %1380 = vmatpush1.msra.mxu0 0.0
  %1381 = vmatprep.subr.mxu0 0.0
  %1382 = vmatpush1.msra.mxu0 0.0
  %1383 = vmatprep.subr.mxu0 0.0
  %1384 = vmatpush1.msra.mxu0 0.0
  %1385 = vmatprep.subr.mxu0 0.0
  %1386 = vmatpush1.msra.mxu0 0.0
  %1387 = vmatprep.subr.mxu0 0.0
  %1388 = vmatpush1.msra.mxu0 0.0
  %1389 = vmatprep.subr.mxu0 0.0
  %1390 = vmatpush1.msra.mxu0 0.0
  %1391 = vmatprep.subr.mxu0 0.0
  %1392 = vmatpush1.msra.mxu0 0.0
  %1393 = vmatprep.subr.mxu0 0.0
  %1394 = vmatpush1.msra.mxu0 0.0
  %1395 = vmatprep.subr.mxu0 0.0
  %1396 = vmatpush1.msra.mxu0 0.0
  %1397 = vmatprep.subr.mxu0 0.0
  %1398 = vmatpush1.msra.mxu0 0.0
  %1399 = vmatprep.subr.mxu0 0.0
  %1400 = vmatpush1.msra.mxu0 0.0
  %1401 = vmatprep.subr.mxu0 0.0
  %1402 = vmatpush1.msra.mxu0 0.0
  %1403 = vmatprep.subr.mxu0 0.0
  %1404 = vmatpush1.msra.mxu0 0.0
  %1405 = vmatprep.subr.mxu0 0.0
  %1406 = vmatpush1.msra.mxu0 0.0
  %1407 = vmatprep.subr.mxu0 0.0
  %1408 = vmatpush1.msra.mxu0 0.0
  %1409 = vmatprep.subr.mxu0 0.0
  %1410 = vmatpush1.msra.mxu0 0.0
  %1411 = vmatprep.subr.mxu0 0.0
  %1412 = vmatpush1.msra.mxu0 0.0
  %1413 = vmatprep.subr.mxu0 0.0
  %1414 = vmatpush1.msra.mxu0 0.0
  %1415 = vmatprep.subr.mxu0 0.0
  %1416 = vmatpush1.msra.mxu0 0.0
  %1417 = vmatprep.subr.mxu0 0.0
  %1418 = vmatpush1.msra.mxu0 0.0
  %1419 = vmatprep.subr.mxu0 0.0
  %1420 = vmatpush1.msra.mxu0 0.0
  %1421 = vmatprep.subr.mxu0 0.0
  %1422 = vmatpush1.msra.mxu0 0.0
  %1423 = vmatprep.subr.mxu0 0.0
  %1424 = vmatpush1.msra.mxu0 0.0
  %1425 = vmatprep.subr.mxu0 0.0
  %1426 = vmatpush1.msra.mxu0 0.0
  %1427 = vmatprep.subr.mxu0 0.0
  %1428 = vmatpush1.msra.mxu0 0.0
  %1429 = vmatprep.mubr.f32.mxu0 0.0
  %1430 = vmatmul.mubr.f32.gmra.mrb[0].mxu0 %v1363
  %v1431 = vpop.f32.mrb[0].mxu0
  %v1432 = vadd.f32 0.0, %v1431
  %v1433 = vpop.f32.mrb[0].mxu0
  %1434 = vdwg.mxu0
  %v1436 = vrot.slane %v1432, 4
  %v1438 = vadd.f32 %v1142, %v1436
  %v1439 = vxor.u32 %v1438, 2147483648
  %v1440 = vmul.f32 %v1439, 1.442695
  %v1441 = vpow.pop %v1440
  %v1442 = vadd.f32 %v1441, 1.0
  %v1443 = vrcp.pop %v1442
  %v1444 = vmul.f32 1.0, %v1443
  %v1445 = vtanh.pop %v1438
  %v1447 = vrot.slane %v1352, 6
  %v1449 = vmul.f32 %v1444, %v1447
  %1451 = vrot.lane.b32.xlu0 %v1445, 96
  %v1452 = vpop.permute.xlu0 %1451
  %v1454 = vmul.f32 %v1444, %v1452
  %1456 = vrot.lane.b32.xlu0 %v1454, 16
  %v1457 = vpop.permute.xlu0 %1456
  %v1459 = vadd.f32 %v1449, %v1457
  %v1460 = vtanh.pop %v1459
  %1462 = vrot.lane.b32.xlu0 %v1460, 32
  %v1463 = vpop.permute.xlu0 %1462
  %v1465 = vmul.f32 %v1444, %v1463
  %v1467 = vrot.slane %v1465, 4
  %1468 = vrot.lane.b32.xlu0 %v1467, 80
  %v1469 = vpop.permute.xlu0 %1468
  %v1470 = vsel %vm1155, %v1469, 0
  %1472 = vmatprep.subr.mxu0 0.0
  %1473 = vmatpush1.msra.mxu0 %v86
  %1474 = vmatprep.subr.mxu0 0.0
  %1475 = vmatpush1.msra.mxu0 %v87
  %1476 = vmatprep.subr.mxu0 0.0
  %1477 = vmatpush1.msra.mxu0 0.0
  %1478 = vmatprep.subr.mxu0 0.0
  %1479 = vmatpush1.msra.mxu0 0.0
  %1480 = vmatprep.subr.mxu0 0.0
  %1481 = vmatpush1.msra.mxu0 0.0
  %1482 = vmatprep.subr.mxu0 0.0
  %1483 = vmatpush1.msra.mxu0 0.0
  %1484 = vmatprep.subr.mxu0 0.0
  %1485 = vmatpush1.msra.mxu0 0.0
  %1486 = vmatprep.subr.mxu0 0.0
  %1487 = vmatpush1.msra.mxu0 0.0
  %1488 = vmatprep.subr.mxu0 0.0
  %1489 = vmatpush1.msra.mxu0 0.0
  %1490 = vmatprep.subr.mxu0 0.0
  %1491 = vmatpush1.msra.mxu0 0.0
  %1492 = vmatprep.subr.mxu0 0.0
  %1493 = vmatpush1.msra.mxu0 0.0
  %1494 = vmatprep.subr.mxu0 0.0
  %1495 = vmatpush1.msra.mxu0 0.0
  %1496 = vmatprep.subr.mxu0 0.0
  %1497 = vmatpush1.msra.mxu0 0.0
  %1498 = vmatprep.subr.mxu0 0.0
  %1499 = vmatpush1.msra.mxu0 0.0
  %1500 = vmatprep.subr.mxu0 0.0
  %1501 = vmatpush1.msra.mxu0 0.0
  %1502 = vmatprep.subr.mxu0 0.0
  %1503 = vmatpush1.msra.mxu0 0.0
  %1504 = vmatprep.subr.mxu0 0.0
  %1505 = vmatpush1.msra.mxu0 0.0
  %1506 = vmatprep.subr.mxu0 0.0
  %1507 = vmatpush1.msra.mxu0 0.0
  %1508 = vmatprep.subr.mxu0 0.0
  %1509 = vmatpush1.msra.mxu0 0.0
  %1510 = vmatprep.subr.mxu0 0.0
  %1511 = vmatpush1.msra.mxu0 0.0
  %1512 = vmatprep.subr.mxu0 0.0
  %1513 = vmatpush1.msra.mxu0 0.0
  %1514 = vmatprep.subr.mxu0 0.0
  %1515 = vmatpush1.msra.mxu0 0.0
  %1516 = vmatprep.subr.mxu0 0.0
  %1517 = vmatpush1.msra.mxu0 0.0
  %1518 = vmatprep.subr.mxu0 0.0
  %1519 = vmatpush1.msra.mxu0 0.0
  %1520 = vmatprep.subr.mxu0 0.0
  %1521 = vmatpush1.msra.mxu0 0.0
  %1522 = vmatprep.subr.mxu0 0.0
  %1523 = vmatpush1.msra.mxu0 0.0
  %1524 = vmatprep.subr.mxu0 0.0
  %1525 = vmatpush1.msra.mxu0 0.0
  %1526 = vmatprep.subr.mxu0 0.0
  %1527 = vmatpush1.msra.mxu0 0.0
  %1528 = vmatprep.subr.mxu0 0.0
  %1529 = vmatpush1.msra.mxu0 0.0
  %1530 = vmatprep.subr.mxu0 0.0
  %1531 = vmatpush1.msra.mxu0 0.0
  %1532 = vmatprep.subr.mxu0 0.0
  %1533 = vmatpush1.msra.mxu0 0.0
  %1534 = vmatprep.subr.mxu0 0.0
  %1535 = vmatpush1.msra.mxu0 0.0
  %1536 = vmatprep.mubr.f32.mxu0 0.0
  %1537 = vmatmul.mubr.f32.gmra.mrb[0].mxu0 %v1470
  %v1538 = vpop.f32.mrb[0].mxu0
  %v1539 = vadd.f32 0.0, %v1538
  %v1540 = vpop.f32.mrb[0].mxu0
  %1541 = vdwg.mxu0
  %v1543 = vrot.slane %v1539, 2
  %v1545 = vadd.f32 %v1142, %v1543
  %v1546 = vxor.u32 %v1545, 2147483648
  %v1547 = vmul.f32 %v1546, 1.442695
  %v1548 = vpow.pop %v1547
  %v1549 = vadd.f32 %v1548, 1.0
  %v1550 = vrcp.pop %v1549
  %v1551 = vmul.f32 1.0, %v1550
  %v1552 = vtanh.pop %v1545
  %v1554 = vrot.slane %v1459, 6
  %v1556 = vmul.f32 %v1551, %v1554
  %1558 = vrot.lane.b32.xlu0 %v1552, 96
  %v1559 = vpop.permute.xlu0 %1558
  %v1561 = vmul.f32 %v1551, %v1559
  %1563 = vrot.lane.b32.xlu0 %v1561, 16
  %v1564 = vpop.permute.xlu0 %1563
  %v1566 = vadd.f32 %v1556, %v1564
  %v1567 = vtanh.pop %v1566
  %1569 = vrot.lane.b32.xlu0 %v1567, 32
  %v1570 = vpop.permute.xlu0 %1569
  %v1572 = vmul.f32 %v1551, %v1570
  %v1574 = vrot.slane %v1572, 6
  %1575 = vrot.lane.b32.xlu0 %v1574, 80
  %v1576 = vpop.permute.xlu0 %1575
  %v1577 = vsel %vm1155, %v1576, 0
  %1579 = vmatprep.subr.mxu0 0.0
  %1580 = vmatpush1.msra.mxu0 %v86
  %1581 = vmatprep.subr.mxu0 0.0
  %1582 = vmatpush1.msra.mxu0 %v87
  %1583 = vmatprep.subr.mxu0 0.0
  %1584 = vmatpush1.msra.mxu0 0.0
  %1585 = vmatprep.subr.mxu0 0.0
  %1586 = vmatpush1.msra.mxu0 0.0
  %1587 = vmatprep.subr.mxu0 0.0
  %1588 = vmatpush1.msra.mxu0 0.0
  %1589 = vmatprep.subr.mxu0 0.0
  %1590 = vmatpush1.msra.mxu0 0.0
  %1591 = vmatprep.subr.mxu0 0.0
  %1592 = vmatpush1.msra.mxu0 0.0
  %1593 = vmatprep.subr.mxu0 0.0
  %1594 = vmatpush1.msra.mxu0 0.0
  %1595 = vmatprep.subr.mxu0 0.0
  %1596 = vmatpush1.msra.mxu0 0.0
  %1597 = vmatprep.subr.mxu0 0.0
  %1598 = vmatpush1.msra.mxu0 0.0
  %1599 = vmatprep.subr.mxu0 0.0
  %1600 = vmatpush1.msra.mxu0 0.0
  %1601 = vmatprep.subr.mxu0 0.0
  %1602 = vmatpush1.msra.mxu0 0.0
  %1603 = vmatprep.subr.mxu0 0.0
  %1604 = vmatpush1.msra.mxu0 0.0
  %1605 = vmatprep.subr.mxu0 0.0
  %1606 = vmatpush1.msra.mxu0 0.0
  %1607 = vmatprep.subr.mxu0 0.0
  %1608 = vmatpush1.msra.mxu0 0.0
  %1609 = vmatprep.subr.mxu0 0.0
  %1610 = vmatpush1.msra.mxu0 0.0
  %1611 = vmatprep.subr.mxu0 0.0
  %1612 = vmatpush1.msra.mxu0 0.0
  %1613 = vmatprep.subr.mxu0 0.0
  %1614 = vmatpush1.msra.mxu0 0.0
  %1615 = vmatprep.subr.mxu0 0.0
  %1616 = vmatpush1.msra.mxu0 0.0
  %1617 = vmatprep.subr.mxu0 0.0
  %1618 = vmatpush1.msra.mxu0 0.0
  %1619 = vmatprep.subr.mxu0 0.0
  %1620 = vmatpush1.msra.mxu0 0.0
  %1621 = vmatprep.subr.mxu0 0.0
  %1622 = vmatpush1.msra.mxu0 0.0
  %1623 = vmatprep.subr.mxu0 0.0
  %1624 = vmatpush1.msra.mxu0 0.0
  %1625 = vmatprep.subr.mxu0 0.0
  %1626 = vmatpush1.msra.mxu0 0.0
  %1627 = vmatprep.subr.mxu0 0.0
  %1628 = vmatpush1.msra.mxu0 0.0
  %1629 = vmatprep.subr.mxu0 0.0
  %1630 = vmatpush1.msra.mxu0 0.0
  %1631 = vmatprep.subr.mxu0 0.0
  %1632 = vmatpush1.msra.mxu0 0.0
  %1633 = vmatprep.subr.mxu0 0.0
  %1634 = vmatpush1.msra.mxu0 0.0
  %1635 = vmatprep.subr.mxu0 0.0
  %1636 = vmatpush1.msra.mxu0 0.0
  %1637 = vmatprep.subr.mxu0 0.0
  %1638 = vmatpush1.msra.mxu0 0.0
  %1639 = vmatprep.subr.mxu0 0.0
  %1640 = vmatpush1.msra.mxu0 0.0
  %1641 = vmatprep.subr.mxu0 0.0
  %1642 = vmatpush1.msra.mxu0 0.0
  %1643 = vmatprep.mubr.f32.mxu0 0.0
  %1644 = vmatmul.mubr.f32.gmra.mrb[0].mxu0 %v1577
  %v1645 = vpop.f32.mrb[0].mxu0
  %v1646 = vadd.f32 0.0, %v1645
  %v1647 = vpop.f32.mrb[0].mxu0
  %1648 = vdwg.mxu0
  %v1649 = vadd.f32 %v1147, %v1646
  %v1650 = vxor.u32 %v1649, 2147483648
  %v1651 = vmul.f32 %v1650, 1.442695
  %v1652 = vpow.pop %v1651
  %v1653 = vadd.f32 %v1652, 1.0
  %v1654 = vrcp.pop %v1653
  %v1655 = vmul.f32 1.0, %v1654
  %v1656 = vtanh.pop %v1649
  %v1658 = vrot.slane %v1566, 6
  %v1660 = vmul.f32 %v1655, %v1658
  %1662 = vrot.lane.b32.xlu0 %v1656, 96
  %v1663 = vpop.permute.xlu0 %1662
  %v1665 = vmul.f32 %v1655, %v1663
  %1667 = vrot.lane.b32.xlu0 %v1665, 16
  %v1668 = vpop.permute.xlu0 %1667
  %v1670 = vadd.f32 %v1660, %v1668
  %v1671 = vtanh.pop %v1670
  %1673 = vrot.lane.b32.xlu0 %v1671, 32
  %v1674 = vpop.permute.xlu0 %1673
  %v1676 = vmul.f32 %v1655, %v1674
  %1678 = vrot.lane.b32.xlu0 %v1676, 80
  %v1679 = vpop.permute.xlu0 %1678
  %v1680 = vsel %vm1155, %v1679, 0
  %1682 = vmatprep.subr.mxu0 0.0
  %1683 = vmatpush1.msra.mxu0 %v86
  %1684 = vmatprep.subr.mxu0 0.0
  %1685 = vmatpush1.msra.mxu0 %v87
  %1686 = vmatprep.subr.mxu0 0.0
  %1687 = vmatpush1.msra.mxu0 0.0
  %1688 = vmatprep.subr.mxu0 0.0
  %1689 = vmatpush1.msra.mxu0 0.0
  %1690 = vmatprep.subr.mxu0 0.0
  %1691 = vmatpush1.msra.mxu0 0.0
  %1692 = vmatprep.subr.mxu0 0.0
  %1693 = vmatpush1.msra.mxu0 0.0
  %1694 = vmatprep.subr.mxu0 0.0
  %1695 = vmatpush1.msra.mxu0 0.0
  %1696 = vmatprep.subr.mxu0 0.0
  %1697 = vmatpush1.msra.mxu0 0.0
  %1698 = vmatprep.subr.mxu0 0.0
  %1699 = vmatpush1.msra.mxu0 0.0
  %1700 = vmatprep.subr.mxu0 0.0
  %1701 = vmatpush1.msra.mxu0 0.0
  %1702 = vmatprep.subr.mxu0 0.0
  %1703 = vmatpush1.msra.mxu0 0.0
  %1704 = vmatprep.subr.mxu0 0.0
  %1705 = vmatpush1.msra.mxu0 0.0
  %1706 = vmatprep.subr.mxu0 0.0
  %1707 = vmatpush1.msra.mxu0 0.0
  %1708 = vmatprep.subr.mxu0 0.0
  %1709 = vmatpush1.msra.mxu0 0.0
  %1710 = vmatprep.subr.mxu0 0.0
  %1711 = vmatpush1.msra.mxu0 0.0
  %1712 = vmatprep.subr.mxu0 0.0
  %1713 = vmatpush1.msra.mxu0 0.0
  %1714 = vmatprep.subr.mxu0 0.0
  %1715 = vmatpush1.msra.mxu0 0.0
  %1716 = vmatprep.subr.mxu0 0.0
  %1717 = vmatpush1.msra.mxu0 0.0
  %1718 = vmatprep.subr.mxu0 0.0
  %1719 = vmatpush1.msra.mxu0 0.0
  %1720 = vmatprep.subr.mxu0 0.0
  %1721 = vmatpush1.msra.mxu0 0.0
  %1722 = vmatprep.subr.mxu0 0.0
  %1723 = vmatpush1.msra.mxu0 0.0
  %1724 = vmatprep.subr.mxu0 0.0
  %1725 = vmatpush1.msra.mxu0 0.0
  %1726 = vmatprep.subr.mxu0 0.0
  %1727 = vmatpush1.msra.mxu0 0.0
  %1728 = vmatprep.subr.mxu0 0.0
  %1729 = vmatpush1.msra.mxu0 0.0
  %1730 = vmatprep.subr.mxu0 0.0
  %1731 = vmatpush1.msra.mxu0 0.0
  %1732 = vmatprep.subr.mxu0 0.0
  %1733 = vmatpush1.msra.mxu0 0.0
  %1734 = vmatprep.subr.mxu0 0.0
  %1735 = vmatpush1.msra.mxu0 0.0
  %1736 = vmatprep.subr.mxu0 0.0
  %1737 = vmatpush1.msra.mxu0 0.0
  %1738 = vmatprep.subr.mxu0 0.0
  %1739 = vmatpush1.msra.mxu0 0.0
  %1740 = vmatprep.subr.mxu0 0.0
  %1741 = vmatpush1.msra.mxu0 0.0
  %1742 = vmatprep.subr.mxu0 0.0
  %1743 = vmatpush1.msra.mxu0 0.0
  %1744 = vmatprep.subr.mxu0 0.0
  %1745 = vmatpush1.msra.mxu0 0.0
  %1746 = vmatprep.mubr.f32.mxu0 0.0
  %1747 = vmatmul.mubr.f32.gmra.mrb[0].mxu0 %v1680
  %v1748 = vpop.f32.mrb[0].mxu0
  %v1749 = vadd.f32 0.0, %v1748
  %v1750 = vpop.f32.mrb[0].mxu0
  %1751 = vdwg.mxu0
  %v1753 = vrot.slane %v1749, 6
  %v1755 = vadd.f32 %v1147, %v1753
  %v1756 = vxor.u32 %v1755, 2147483648
  %v1757 = vmul.f32 %v1756, 1.442695
  %v1758 = vpow.pop %v1757
  %v1759 = vadd.f32 %v1758, 1.0
  %v1760 = vrcp.pop %v1759
  %v1761 = vmul.f32 1.0, %v1760
  %v1762 = vtanh.pop %v1755
  %v1764 = vrot.slane %v1670, 6
  %v1766 = vmul.f32 %v1761, %v1764
  %1768 = vrot.lane.b32.xlu0 %v1762, 96
  %v1769 = vpop.permute.xlu0 %1768
  %v1771 = vmul.f32 %v1761, %v1769
  %1773 = vrot.lane.b32.xlu0 %v1771, 16
  %v1774 = vpop.permute.xlu0 %1773
  %v1776 = vadd.f32 %v1766, %v1774
  %v1777 = vtanh.pop %v1776
  %1779 = vrot.lane.b32.xlu0 %v1777, 32
  %v1780 = vpop.permute.xlu0 %1779
  %v1782 = vmul.f32 %v1761, %v1780
  %v1784 = vrot.slane %v1782, 2
  %1785 = vrot.lane.b32.xlu0 %v1784, 80
  %v1786 = vpop.permute.xlu0 %1785
  %v1787 = vsel %vm1155, %v1786, 0
  %1789 = vmatprep.subr.mxu0 0.0
  %1790 = vmatpush1.msra.mxu0 %v86
  %1791 = vmatprep.subr.mxu0 0.0
  %1792 = vmatpush1.msra.mxu0 %v87
  %1793 = vmatprep.subr.mxu0 0.0
  %1794 = vmatpush1.msra.mxu0 0.0
  %1795 = vmatprep.subr.mxu0 0.0
  %1796 = vmatpush1.msra.mxu0 0.0
  %1797 = vmatprep.subr.mxu0 0.0
  %1798 = vmatpush1.msra.mxu0 0.0
  %1799 = vmatprep.subr.mxu0 0.0
  %1800 = vmatpush1.msra.mxu0 0.0
  %1801 = vmatprep.subr.mxu0 0.0
  %1802 = vmatpush1.msra.mxu0 0.0
  %1803 = vmatprep.subr.mxu0 0.0
  %1804 = vmatpush1.msra.mxu0 0.0
  %1805 = vmatprep.subr.mxu0 0.0
  %1806 = vmatpush1.msra.mxu0 0.0
  %1807 = vmatprep.subr.mxu0 0.0
  %1808 = vmatpush1.msra.mxu0 0.0
  %1809 = vmatprep.subr.mxu0 0.0
  %1810 = vmatpush1.msra.mxu0 0.0
  %1811 = vmatprep.subr.mxu0 0.0
  %1812 = vmatpush1.msra.mxu0 0.0
  %1813 = vmatprep.subr.mxu0 0.0
  %1814 = vmatpush1.msra.mxu0 0.0
  %1815 = vmatprep.subr.mxu0 0.0
  %1816 = vmatpush1.msra.mxu0 0.0
  %1817 = vmatprep.subr.mxu0 0.0
  %1818 = vmatpush1.msra.mxu0 0.0
  %1819 = vmatprep.subr.mxu0 0.0
  %1820 = vmatpush1.msra.mxu0 0.0
  %1821 = vmatprep.subr.mxu0 0.0
  %1822 = vmatpush1.msra.mxu0 0.0
  %1823 = vmatprep.subr.mxu0 0.0
  %1824 = vmatpush1.msra.mxu0 0.0
  %1825 = vmatprep.subr.mxu0 0.0
  %1826 = vmatpush1.msra.mxu0 0.0
  %1827 = vmatprep.subr.mxu0 0.0
  %1828 = vmatpush1.msra.mxu0 0.0
  %1829 = vmatprep.subr.mxu0 0.0
  %1830 = vmatpush1.msra.mxu0 0.0
  %1831 = vmatprep.subr.mxu0 0.0
  %1832 = vmatpush1.msra.mxu0 0.0
  %1833 = vmatprep.subr.mxu0 0.0
  %1834 = vmatpush1.msra.mxu0 0.0
  %1835 = vmatprep.subr.mxu0 0.0
  %1836 = vmatpush1.msra.mxu0 0.0
  %1837 = vmatprep.subr.mxu0 0.0
  %1838 = vmatpush1.msra.mxu0 0.0
  %1839 = vmatprep.subr.mxu0 0.0
  %1840 = vmatpush1.msra.mxu0 0.0
  %1841 = vmatprep.subr.mxu0 0.0
  %1842 = vmatpush1.msra.mxu0 0.0
  %1843 = vmatprep.subr.mxu0 0.0
  %1844 = vmatpush1.msra.mxu0 0.0
  %1845 = vmatprep.subr.mxu0 0.0
  %1846 = vmatpush1.msra.mxu0 0.0
  %1847 = vmatprep.subr.mxu0 0.0
  %1848 = vmatpush1.msra.mxu0 0.0
  %1849 = vmatprep.subr.mxu0 0.0
  %1850 = vmatpush1.msra.mxu0 0.0
  %1851 = vmatprep.subr.mxu0 0.0
  %1852 = vmatpush1.msra.mxu0 0.0
  %1853 = vmatprep.mubr.f32.mxu0 0.0
  %1854 = vmatmul.mubr.f32.gmra.mrb[0].mxu0 %v1787
  %v1855 = vpop.f32.mrb[0].mxu0
  %v1856 = vadd.f32 0.0, %v1855
  %v1857 = vpop.f32.mrb[0].mxu0
  %1858 = vdwg.mxu0
  %v1860 = vrot.slane %v1856, 4
  %v1862 = vadd.f32 %v1147, %v1860
  %v1863 = vxor.u32 %v1862, 2147483648
  %v1864 = vmul.f32 %v1863, 1.442695
  %v1865 = vpow.pop %v1864
  %v1866 = vadd.f32 %v1865, 1.0
  %v1867 = vrcp.pop %v1866
  %v1868 = vmul.f32 1.0, %v1867
  %v1869 = vtanh.pop %v1862
  %v1871 = vrot.slane %v1776, 6
  %v1873 = vmul.f32 %v1868, %v1871
  %1875 = vrot.lane.b32.xlu0 %v1869, 96
  %v1876 = vpop.permute.xlu0 %1875
  %v1878 = vmul.f32 %v1868, %v1876
  %1880 = vrot.lane.b32.xlu0 %v1878, 16
  %v1881 = vpop.permute.xlu0 %1880
  %v1883 = vadd.f32 %v1873, %v1881
  %v1884 = vtanh.pop %v1883
  %1886 = vrot.lane.b32.xlu0 %v1884, 32
  %v1887 = vpop.permute.xlu0 %1886
  %v1889 = vmul.f32 %v1868, %v1887
  %v1891 = vrot.slane %v1889, 4
  %1892 = vrot.lane.b32.xlu0 %v1891, 80
  %v1893 = vpop.permute.xlu0 %1892
  %v1894 = vsel %vm1155, %v1893, 0
  %1896 = vmatprep.subr.mxu0 0.0
  %1897 = vmatpush1.msra.mxu0 %v86
  %1898 = vmatprep.subr.mxu0 0.0
  %1899 = vmatpush1.msra.mxu0 %v87
  %1900 = vmatprep.subr.mxu0 0.0
  %1901 = vmatpush1.msra.mxu0 0.0
  %1902 = vmatprep.subr.mxu0 0.0
  %1903 = vmatpush1.msra.mxu0 0.0
  %1904 = vmatprep.subr.mxu0 0.0
  %1905 = vmatpush1.msra.mxu0 0.0
  %1906 = vmatprep.subr.mxu0 0.0
  %1907 = vmatpush1.msra.mxu0 0.0
  %1908 = vmatprep.subr.mxu0 0.0
  %1909 = vmatpush1.msra.mxu0 0.0
  %1910 = vmatprep.subr.mxu0 0.0
  %1911 = vmatpush1.msra.mxu0 0.0
  %1912 = vmatprep.subr.mxu0 0.0
  %1913 = vmatpush1.msra.mxu0 0.0
  %1914 = vmatprep.subr.mxu0 0.0
  %1915 = vmatpush1.msra.mxu0 0.0
  %1916 = vmatprep.subr.mxu0 0.0
  %1917 = vmatpush1.msra.mxu0 0.0
  %1918 = vmatprep.subr.mxu0 0.0
  %1919 = vmatpush1.msra.mxu0 0.0
  %1920 = vmatprep.subr.mxu0 0.0
  %1921 = vmatpush1.msra.mxu0 0.0
  %1922 = vmatprep.subr.mxu0 0.0
  %1923 = vmatpush1.msra.mxu0 0.0
  %1924 = vmatprep.subr.mxu0 0.0
  %1925 = vmatpush1.msra.mxu0 0.0
  %1926 = vmatprep.subr.mxu0 0.0
  %1927 = vmatpush1.msra.mxu0 0.0
  %1928 = vmatprep.subr.mxu0 0.0
  %1929 = vmatpush1.msra.mxu0 0.0
  %1930 = vmatprep.subr.mxu0 0.0
  %1931 = vmatpush1.msra.mxu0 0.0
  %1932 = vmatprep.subr.mxu0 0.0
  %1933 = vmatpush1.msra.mxu0 0.0
  %1934 = vmatprep.subr.mxu0 0.0
  %1935 = vmatpush1.msra.mxu0 0.0
  %1936 = vmatprep.subr.mxu0 0.0
  %1937 = vmatpush1.msra.mxu0 0.0
  %1938 = vmatprep.subr.mxu0 0.0
  %1939 = vmatpush1.msra.mxu0 0.0
  %1940 = vmatprep.subr.mxu0 0.0
  %1941 = vmatpush1.msra.mxu0 0.0
  %1942 = vmatprep.subr.mxu0 0.0
  %1943 = vmatpush1.msra.mxu0 0.0
  %1944 = vmatprep.subr.mxu0 0.0
  %1945 = vmatpush1.msra.mxu0 0.0
  %1946 = vmatprep.subr.mxu0 0.0
  %1947 = vmatpush1.msra.mxu0 0.0
  %1948 = vmatprep.subr.mxu0 0.0
  %1949 = vmatpush1.msra.mxu0 0.0
  %1950 = vmatprep.subr.mxu0 0.0
  %1951 = vmatpush1.msra.mxu0 0.0
  %1952 = vmatprep.subr.mxu0 0.0
  %1953 = vmatpush1.msra.mxu0 0.0
  %1954 = vmatprep.subr.mxu0 0.0
  %1955 = vmatpush1.msra.mxu0 0.0
  %1956 = vmatprep.subr.mxu0 0.0
  %1957 = vmatpush1.msra.mxu0 0.0
  %1958 = vmatprep.subr.mxu0 0.0
  %1959 = vmatpush1.msra.mxu0 0.0
  %1960 = vmatprep.mubr.f32.mxu0 0.0
  %1961 = vmatmul.mubr.f32.gmra.mrb[0].mxu0 %v1894
  %v1962 = vpop.f32.mrb[0].mxu0
  %v1963 = vadd.f32 0.0, %v1962
  %v1964 = vpop.f32.mrb[0].mxu0
  %1965 = vdwg.mxu0
  %v1967 = vrot.slane %v1963, 2
  %v1969 = vadd.f32 %v1147, %v1967
  %v1970 = vxor.u32 %v1969, 2147483648
  %v1971 = vmul.f32 %v1970, 1.442695
  %v1972 = vpow.pop %v1971
  %v1973 = vadd.f32 %v1972, 1.0
  %v1974 = vrcp.pop %v1973
  %v1975 = vmul.f32 1.0, %v1974
  %v1976 = vtanh.pop %v1969
  %v1978 = vrot.slane %v1883, 6
  %v1980 = vmul.f32 %v1975, %v1978
  %1982 = vrot.lane.b32.xlu0 %v1976, 96
  %v1983 = vpop.permute.xlu0 %1982
  %v1985 = vmul.f32 %v1975, %v1983
  %1987 = vrot.lane.b32.xlu0 %v1985, 16
  %v1988 = vpop.permute.xlu0 %1987
  %v1990 = vadd.f32 %v1980, %v1988
  %v1991 = vtanh.pop %v1990
  %1993 = vrot.lane.b32.xlu0 %v1991, 32
  %v1994 = vpop.permute.xlu0 %1993
  %v1996 = vmul.f32 %v1975, %v1994
  %v1998 = vrot.slane %v1996, 6
  %1999 = vrot.lane.b32.xlu0 %v1998, 80
  %v2000 = vpop.permute.xlu0 %1999
  %v2001 = vsel %vm1155, %v2000, 0
  %2003 = vmatprep.subr.mxu0 0.0
  %2004 = vmatpush1.msra.mxu0 %v86
  %2005 = vmatprep.subr.mxu0 0.0
  %2006 = vmatpush1.msra.mxu0 %v87
  %2007 = vmatprep.subr.mxu0 0.0
  %2008 = vmatpush1.msra.mxu0 0.0
  %2009 = vmatprep.subr.mxu0 0.0
  %2010 = vmatpush1.msra.mxu0 0.0
  %2011 = vmatprep.subr.mxu0 0.0
  %2012 = vmatpush1.msra.mxu0 0.0
  %2013 = vmatprep.subr.mxu0 0.0
  %2014 = vmatpush1.msra.mxu0 0.0
  %2015 = vmatprep.subr.mxu0 0.0
  %2016 = vmatpush1.msra.mxu0 0.0
  %2017 = vmatprep.subr.mxu0 0.0
  %2018 = vmatpush1.msra.mxu0 0.0
  %2019 = vmatprep.subr.mxu0 0.0
  %2020 = vmatpush1.msra.mxu0 0.0
  %2021 = vmatprep.subr.mxu0 0.0
  %2022 = vmatpush1.msra.mxu0 0.0
  %2023 = vmatprep.subr.mxu0 0.0
  %2024 = vmatpush1.msra.mxu0 0.0
  %2025 = vmatprep.subr.mxu0 0.0
  %2026 = vmatpush1.msra.mxu0 0.0
  %2027 = vmatprep.subr.mxu0 0.0
  %2028 = vmatpush1.msra.mxu0 0.0
  %2029 = vmatprep.subr.mxu0 0.0
  %2030 = vmatpush1.msra.mxu0 0.0
  %2031 = vmatprep.subr.mxu0 0.0
  %2032 = vmatpush1.msra.mxu0 0.0
  %2033 = vmatprep.subr.mxu0 0.0
  %2034 = vmatpush1.msra.mxu0 0.0
  %2035 = vmatprep.subr.mxu0 0.0
  %2036 = vmatpush1.msra.mxu0 0.0
  %2037 = vmatprep.subr.mxu0 0.0
  %2038 = vmatpush1.msra.mxu0 0.0
  %2039 = vmatprep.subr.mxu0 0.0
  %2040 = vmatpush1.msra.mxu0 0.0
  %2041 = vmatprep.subr.mxu0 0.0
  %2042 = vmatpush1.msra.mxu0 0.0
  %2043 = vmatprep.subr.mxu0 0.0
  %2044 = vmatpush1.msra.mxu0 0.0
  %2045 = vmatprep.subr.mxu0 0.0
  %2046 = vmatpush1.msra.mxu0 0.0
  %2047 = vmatprep.subr.mxu0 0.0
  %2048 = vmatpush1.msra.mxu0 0.0
  %2049 = vmatprep.subr.mxu0 0.0
  %2050 = vmatpush1.msra.mxu0 0.0
  %2051 = vmatprep.subr.mxu0 0.0
  %2052 = vmatpush1.msra.mxu0 0.0
  %2053 = vmatprep.subr.mxu0 0.0
  %2054 = vmatpush1.msra.mxu0 0.0
  %2055 = vmatprep.subr.mxu0 0.0
  %2056 = vmatpush1.msra.mxu0 0.0
  %2057 = vmatprep.subr.mxu0 0.0
  %2058 = vmatpush1.msra.mxu0 0.0
  %2059 = vmatprep.subr.mxu0 0.0
  %2060 = vmatpush1.msra.mxu0 0.0
  %2061 = vmatprep.subr.mxu0 0.0
  %2062 = vmatpush1.msra.mxu0 0.0
  %2063 = vmatprep.subr.mxu0 0.0
  %2064 = vmatpush1.msra.mxu0 0.0
  %2065 = vmatprep.subr.mxu0 0.0
  %2066 = vmatpush1.msra.mxu0 0.0
  %2067 = vmatprep.mubr.f32.mxu0 0.0
  %2068 = vmatmul.mubr.f32.gmra.mrb[0].mxu0 %v2001
  %v2069 = vpop.f32.mrb[0].mxu0
  %v2070 = vadd.f32 0.0, %v2069
  %v2071 = vpop.f32.mrb[0].mxu0
  %2072 = vdwg.mxu0
  %v2073 = vadd.f32 %v1152, %v2070
  %v2074 = vxor.u32 %v2073, 2147483648
  %v2075 = vmul.f32 %v2074, 1.442695
  %v2076 = vpow.pop %v2075
  %v2077 = vadd.f32 %v2076, 1.0
  %v2078 = vrcp.pop %v2077
  %v2079 = vmul.f32 1.0, %v2078
  %v2080 = vtanh.pop %v2073
  %v2082 = vrot.slane %v1990, 6
  %v2084 = vmul.f32 %v2079, %v2082
  %2086 = vrot.lane.b32.xlu0 %v2080, 96
  %v2087 = vpop.permute.xlu0 %2086
  %v2089 = vmul.f32 %v2079, %v2087
  %2091 = vrot.lane.b32.xlu0 %v2089, 16
  %v2092 = vpop.permute.xlu0 %2091
  %v2094 = vadd.f32 %v2084, %v2092
  %v2095 = vtanh.pop %v2094
  %2097 = vrot.lane.b32.xlu0 %v2095, 32
  %v2098 = vpop.permute.xlu0 %2097
  %v2100 = vmul.f32 %v2079, %v2098
  %2102 = vrot.lane.b32.xlu0 %v2100, 80
  %v2103 = vpop.permute.xlu0 %2102
  %v2104 = vsel %vm1155, %v2103, 0
  %2106 = vmatprep.subr.mxu0 0.0
  %2107 = vmatpush1.msra.mxu0 %v86
  %2108 = vmatprep.subr.mxu0 0.0
  %2109 = vmatpush1.msra.mxu0 %v87
  %2110 = vmatprep.subr.mxu0 0.0
  %2111 = vmatpush1.msra.mxu0 0.0
  %2112 = vmatprep.subr.mxu0 0.0
  %2113 = vmatpush1.msra.mxu0 0.0
  %2114 = vmatprep.subr.mxu0 0.0
  %2115 = vmatpush1.msra.mxu0 0.0
  %2116 = vmatprep.subr.mxu0 0.0
  %2117 = vmatpush1.msra.mxu0 0.0
  %2118 = vmatprep.subr.mxu0 0.0
  %2119 = vmatpush1.msra.mxu0 0.0
  %2120 = vmatprep.subr.mxu0 0.0
  %2121 = vmatpush1.msra.mxu0 0.0
  %2122 = vmatprep.subr.mxu0 0.0
  %2123 = vmatpush1.msra.mxu0 0.0
  %2124 = vmatprep.subr.mxu0 0.0
  %2125 = vmatpush1.msra.mxu0 0.0
  %2126 = vmatprep.subr.mxu0 0.0
  %2127 = vmatpush1.msra.mxu0 0.0
  %2128 = vmatprep.subr.mxu0 0.0
  %2129 = vmatpush1.msra.mxu0 0.0
  %2130 = vmatprep.subr.mxu0 0.0
  %2131 = vmatpush1.msra.mxu0 0.0
  %2132 = vmatprep.subr.mxu0 0.0
  %2133 = vmatpush1.msra.mxu0 0.0
  %2134 = vmatprep.subr.mxu0 0.0
  %2135 = vmatpush1.msra.mxu0 0.0
  %2136 = vmatprep.subr.mxu0 0.0
  %2137 = vmatpush1.msra.mxu0 0.0
  %2138 = vmatprep.subr.mxu0 0.0
  %2139 = vmatpush1.msra.mxu0 0.0
  %2140 = vmatprep.subr.mxu0 0.0
  %2141 = vmatpush1.msra.mxu0 0.0
  %2142 = vmatprep.subr.mxu0 0.0
  %2143 = vmatpush1.msra.mxu0 0.0
  %2144 = vmatprep.subr.mxu0 0.0
  %2145 = vmatpush1.msra.mxu0 0.0
  %2146 = vmatprep.subr.mxu0 0.0
  %2147 = vmatpush1.msra.mxu0 0.0
  %2148 = vmatprep.subr.mxu0 0.0
  %2149 = vmatpush1.msra.mxu0 0.0
  %2150 = vmatprep.subr.mxu0 0.0
  %2151 = vmatpush1.msra.mxu0 0.0
  %2152 = vmatprep.subr.mxu0 0.0
  %2153 = vmatpush1.msra.mxu0 0.0
  %2154 = vmatprep.subr.mxu0 0.0
  %2155 = vmatpush1.msra.mxu0 0.0
  %2156 = vmatprep.subr.mxu0 0.0
  %2157 = vmatpush1.msra.mxu0 0.0
  %2158 = vmatprep.subr.mxu0 0.0
  %2159 = vmatpush1.msra.mxu0 0.0
  %2160 = vmatprep.subr.mxu0 0.0
  %2161 = vmatpush1.msra.mxu0 0.0
  %2162 = vmatprep.subr.mxu0 0.0
  %2163 = vmatpush1.msra.mxu0 0.0
  %2164 = vmatprep.subr.mxu0 0.0
  %2165 = vmatpush1.msra.mxu0 0.0
  %2166 = vmatprep.subr.mxu0 0.0
  %2167 = vmatpush1.msra.mxu0 0.0
  %2168 = vmatprep.subr.mxu0 0.0
  %2169 = vmatpush1.msra.mxu0 0.0
  %2170 = vmatprep.mubr.f32.mxu0 0.0
  %2171 = vmatmul.mubr.f32.gmra.mrb[0].mxu0 %v2104
  %v2172 = vpop.f32.mrb[0].mxu0
  %v2173 = vadd.f32 0.0, %v2172
  %v2174 = vpop.f32.mrb[0].mxu0
  %2175 = vdwg.mxu0
  %v2177 = vrot.slane %v2173, 6
  %v2179 = vadd.f32 %v1152, %v2177
  %v2180 = vxor.u32 %v2179, 2147483648
  %v2181 = vmul.f32 %v2180, 1.442695
  %v2182 = vpow.pop %v2181
  %v2183 = vadd.f32 %v2182, 1.0
  %v2184 = vrcp.pop %v2183
  %v2185 = vmul.f32 1.0, %v2184
  %v2186 = vtanh.pop %v2179
  %v2188 = vrot.slane %v2094, 6
  %v2190 = vmul.f32 %v2185, %v2188
  %2192 = vrot.lane.b32.xlu0 %v2186, 96
  %v2193 = vpop.permute.xlu0 %2192
  %v2195 = vmul.f32 %v2185, %v2193
  %2197 = vrot.lane.b32.xlu0 %v2195, 16
  %v2198 = vpop.permute.xlu0 %2197
  %v2200 = vadd.f32 %v2190, %v2198
  %v2201 = vtanh.pop %v2200
  %2203 = vrot.lane.b32.xlu0 %v2201, 32
  %v2204 = vpop.permute.xlu0 %2203
  %v2206 = vmul.f32 %v2185, %v2204
  %v2208 = vlaneseq
  %v2209 = vshrl.u32 %v2208, 7
  %v2210 = vsub.s32 0, %v2209
  %v2211 = vrot.slane %v93, %v2210
  %2213 = vmatprep.subr.mxu0 0.0
  %2214 = vmatpush1.msra.mxu0 %v89
  %2215 = vmatprep.subr.mxu0 0.0
  %2216 = vmatpush1.msra.mxu0 %v90
  %2217 = vmatprep.subr.mxu0 0.0
  %2218 = vmatpush1.msra.mxu0 0.0
  %2219 = vmatprep.subr.mxu0 0.0
  %2220 = vmatpush1.msra.mxu0 0.0
  %2221 = vmatprep.subr.mxu0 0.0
  %2222 = vmatpush1.msra.mxu0 0.0
  %2223 = vmatprep.subr.mxu0 0.0
  %2224 = vmatpush1.msra.mxu0 0.0
  %2225 = vmatprep.subr.mxu0 0.0
  %2226 = vmatpush1.msra.mxu0 0.0
  %2227 = vmatprep.subr.mxu0 0.0
  %2228 = vmatpush1.msra.mxu0 0.0
  %2229 = vmatprep.subr.mxu0 0.0
  %2230 = vmatpush1.msra.mxu0 0.0
  %2231 = vmatprep.subr.mxu0 0.0
  %2232 = vmatpush1.msra.mxu0 0.0
  %2233 = vmatprep.subr.mxu0 0.0
  %2234 = vmatpush1.msra.mxu0 0.0
  %2235 = vmatprep.subr.mxu0 0.0
  %2236 = vmatpush1.msra.mxu0 0.0
  %2237 = vmatprep.subr.mxu0 0.0
  %2238 = vmatpush1.msra.mxu0 0.0
  %2239 = vmatprep.subr.mxu0 0.0
  %2240 = vmatpush1.msra.mxu0 0.0
  %2241 = vmatprep.subr.mxu0 0.0
  %2242 = vmatpush1.msra.mxu0 0.0
  %2243 = vmatprep.subr.mxu0 0.0
  %2244 = vmatpush1.msra.mxu0 0.0
  %2245 = vmatprep.subr.mxu0 0.0
  %2246 = vmatpush1.msra.mxu0 0.0
  %2247 = vmatprep.subr.mxu0 0.0
  %2248 = vmatpush1.msra.mxu0 0.0
  %2249 = vmatprep.subr.mxu0 0.0
  %2250 = vmatpush1.msra.mxu0 0.0
  %2251 = vmatprep.subr.mxu0 0.0
  %2252 = vmatpush1.msra.mxu0 0.0
  %2253 = vmatprep.subr.mxu0 0.0
  %2254 = vmatpush1.msra.mxu0 0.0
  %2255 = vmatprep.subr.mxu0 0.0
  %2256 = vmatpush1.msra.mxu0 0.0
  %2257 = vmatprep.subr.mxu0 0.0
  %2258 = vmatpush1.msra.mxu0 0.0
  %2259 = vmatprep.subr.mxu0 0.0
  %2260 = vmatpush1.msra.mxu0 0.0
  %2261 = vmatprep.subr.mxu0 0.0
  %2262 = vmatpush1.msra.mxu0 0.0
  %2263 = vmatprep.subr.mxu0 0.0
  %2264 = vmatpush1.msra.mxu0 0.0
  %2265 = vmatprep.subr.mxu0 0.0
  %2266 = vmatpush1.msra.mxu0 0.0
  %2267 = vmatprep.subr.mxu0 0.0
  %2268 = vmatpush1.msra.mxu0 0.0
  %2269 = vmatprep.subr.mxu0 0.0
  %2270 = vmatpush1.msra.mxu0 0.0
  %2271 = vmatprep.subr.mxu0 0.0
  %2272 = vmatpush1.msra.mxu0 0.0
  %2273 = vmatprep.subr.mxu0 0.0
  %2274 = vmatpush1.msra.mxu0 0.0
  %2275 = vmatprep.subr.mxu0 0.0
  %2276 = vmatpush1.msra.mxu0 0.0
  %2277 = vmatprep.mubr.f32.mxu0 0.0
  %2278 = vmatmul.mubr.f32.gmra.mrb[0].mxu0 %v1256
  %v2279 = vpop.f32.mrb[0].mxu0
  %v2280 = vadd.f32 %v2211, %v2279
  %v2281 = vpop.f32.mrb[0].mxu0
  %2282 = vdwg.mxu0
  %2283 = vmatprep.subr.mxu0 0.0
  %2284 = vmatpush1.msra.mxu0 %v91
  %2285 = vmatprep.subr.mxu0 0.0
  %2286 = vmatpush1.msra.mxu0 %v92
  %2287 = vmatprep.subr.mxu0 0.0
  %2288 = vmatpush1.msra.mxu0 0.0
  %2289 = vmatprep.subr.mxu0 0.0
  %2290 = vmatpush1.msra.mxu0 0.0
  %2291 = vmatprep.subr.mxu0 0.0
  %2292 = vmatpush1.msra.mxu0 0.0
  %2293 = vmatprep.subr.mxu0 0.0
  %2294 = vmatpush1.msra.mxu0 0.0
  %2295 = vmatprep.subr.mxu0 0.0
  %2296 = vmatpush1.msra.mxu0 0.0
  %2297 = vmatprep.subr.mxu0 0.0
  %2298 = vmatpush1.msra.mxu0 0.0
  %2299 = vmatprep.subr.mxu0 0.0
  %2300 = vmatpush1.msra.mxu0 0.0
  %2301 = vmatprep.subr.mxu0 0.0
  %2302 = vmatpush1.msra.mxu0 0.0
  %2303 = vmatprep.subr.mxu0 0.0
  %2304 = vmatpush1.msra.mxu0 0.0
  %2305 = vmatprep.subr.mxu0 0.0
  %2306 = vmatpush1.msra.mxu0 0.0
  %2307 = vmatprep.subr.mxu0 0.0
  %2308 = vmatpush1.msra.mxu0 0.0
  %2309 = vmatprep.subr.mxu0 0.0
  %2310 = vmatpush1.msra.mxu0 0.0
  %2311 = vmatprep.subr.mxu0 0.0
  %2312 = vmatpush1.msra.mxu0 0.0
  %2313 = vmatprep.subr.mxu0 0.0
  %2314 = vmatpush1.msra.mxu0 0.0
  %2315 = vmatprep.subr.mxu0 0.0
  %2316 = vmatpush1.msra.mxu0 0.0
  %2317 = vmatprep.subr.mxu0 0.0
  %2318 = vmatpush1.msra.mxu0 0.0
  %2319 = vmatprep.subr.mxu0 0.0
  %2320 = vmatpush1.msra.mxu0 0.0
  %2321 = vmatprep.subr.mxu0 0.0
  %2322 = vmatpush1.msra.mxu0 0.0
  %2323 = vmatprep.subr.mxu0 0.0
  %2324 = vmatpush1.msra.mxu0 0.0
  %2325 = vmatprep.subr.mxu0 0.0
  %2326 = vmatpush1.msra.mxu0 0.0
  %2327 = vmatprep.subr.mxu0 0.0
  %2328 = vmatpush1.msra.mxu0 0.0
  %2329 = vmatprep.subr.mxu0 0.0
  %2330 = vmatpush1.msra.mxu0 0.0
  %2331 = vmatprep.subr.mxu0 0.0
  %2332 = vmatpush1.msra.mxu0 0.0
  %2333 = vmatprep.subr.mxu0 0.0
  %2334 = vmatpush1.msra.mxu0 0.0
  %2335 = vmatprep.subr.mxu0 0.0
  %2336 = vmatpush1.msra.mxu0 0.0
  %2337 = vmatprep.subr.mxu0 0.0
  %2338 = vmatpush1.msra.mxu0 0.0
  %2339 = vmatprep.subr.mxu0 0.0
  %2340 = vmatpush1.msra.mxu0 0.0
  %2341 = vmatprep.subr.mxu0 0.0
  %2342 = vmatpush1.msra.mxu0 0.0
  %2343 = vmatprep.subr.mxu0 0.0
  %2344 = vmatpush1.msra.mxu0 0.0
  %2345 = vmatprep.subr.mxu0 0.0
  %2346 = vmatpush1.msra.mxu0 0.0
  %2347 = vmatprep.mubr.f32.mxu0 0.0
  %2348 = vmatmul.mubr.f32.gmra.mrb[0].mxu0 %v1156
  %v2349 = vpop.f32.mrb[0].mxu0
  %v2350 = vadd.f32 0.0, %v2349
  %v2351 = vpop.f32.mrb[0].mxu0
  %2352 = vdwg.mxu0
  %v2353 = vadd.f32 %v2280, %v2350
  %v2354 = vxor.u32 %v2353, 2147483648
  %v2355 = vmul.f32 %v2354, 1.442695
  %v2356 = vpow.pop %v2355
  %v2357 = vadd.f32 %v2356, 1.0
  %v2358 = vrcp.pop %v2357
  %v2359 = vmul.f32 1.0, %v2358
  %v2360 = vtanh.pop %v2353
  %v2361 = vmul.f32 %v2359, 0.0
  %2363 = vrot.lane.b32.xlu0 %v2360, 96
  %v2364 = vpop.permute.xlu0 %2363
  %v2366 = vmul.f32 %v2359, %v2364
  %2368 = vrot.lane.b32.xlu0 %v2366, 16
  %v2369 = vpop.permute.xlu0 %2368
  %v2371 = vadd.f32 %v2361, %v2369
  %v2372 = vtanh.pop %v2371
  %2374 = vrot.lane.b32.xlu0 %v2372, 32
  %v2375 = vpop.permute.xlu0 %2374
  %v2377 = vmul.f32 %v2359, %v2375
  %2378 = vmatprep.subr.mxu0 0.0
  %2379 = vmatpush1.msra.mxu0 %v89
  %2380 = vmatprep.subr.mxu0 0.0
  %2381 = vmatpush1.msra.mxu0 %v90
  %2382 = vmatprep.subr.mxu0 0.0
  %2383 = vmatpush1.msra.mxu0 0.0
  %2384 = vmatprep.subr.mxu0 0.0
  %2385 = vmatpush1.msra.mxu0 0.0
  %2386 = vmatprep.subr.mxu0 0.0
  %2387 = vmatpush1.msra.mxu0 0.0
  %2388 = vmatprep.subr.mxu0 0.0
  %2389 = vmatpush1.msra.mxu0 0.0
  %2390 = vmatprep.subr.mxu0 0.0
  %2391 = vmatpush1.msra.mxu0 0.0
  %2392 = vmatprep.subr.mxu0 0.0
  %2393 = vmatpush1.msra.mxu0 0.0
  %2394 = vmatprep.subr.mxu0 0.0
  %2395 = vmatpush1.msra.mxu0 0.0
  %2396 = vmatprep.subr.mxu0 0.0
  %2397 = vmatpush1.msra.mxu0 0.0
  %2398 = vmatprep.subr.mxu0 0.0
  %2399 = vmatpush1.msra.mxu0 0.0
  %2400 = vmatprep.subr.mxu0 0.0
  %2401 = vmatpush1.msra.mxu0 0.0
  %2402 = vmatprep.subr.mxu0 0.0
  %2403 = vmatpush1.msra.mxu0 0.0
  %2404 = vmatprep.subr.mxu0 0.0
  %2405 = vmatpush1.msra.mxu0 0.0
  %2406 = vmatprep.subr.mxu0 0.0
  %2407 = vmatpush1.msra.mxu0 0.0
  %2408 = vmatprep.subr.mxu0 0.0
  %2409 = vmatpush1.msra.mxu0 0.0
  %2410 = vmatprep.subr.mxu0 0.0
  %2411 = vmatpush1.msra.mxu0 0.0
  %2412 = vmatprep.subr.mxu0 0.0
  %2413 = vmatpush1.msra.mxu0 0.0
  %2414 = vmatprep.subr.mxu0 0.0
  %2415 = vmatpush1.msra.mxu0 0.0
  %2416 = vmatprep.subr.mxu0 0.0
  %2417 = vmatpush1.msra.mxu0 0.0
  %2418 = vmatprep.subr.mxu0 0.0
  %2419 = vmatpush1.msra.mxu0 0.0
  %2420 = vmatprep.subr.mxu0 0.0
  %2421 = vmatpush1.msra.mxu0 0.0
  %2422 = vmatprep.subr.mxu0 0.0
  %2423 = vmatpush1.msra.mxu0 0.0
  %2424 = vmatprep.subr.mxu0 0.0
  %2425 = vmatpush1.msra.mxu0 0.0
  %2426 = vmatprep.subr.mxu0 0.0
  %2427 = vmatpush1.msra.mxu0 0.0
  %2428 = vmatprep.subr.mxu0 0.0
  %2429 = vmatpush1.msra.mxu0 0.0
  %2430 = vmatprep.subr.mxu0 0.0
  %2431 = vmatpush1.msra.mxu0 0.0
  %2432 = vmatprep.subr.mxu0 0.0
  %2433 = vmatpush1.msra.mxu0 0.0
  %2434 = vmatprep.subr.mxu0 0.0
  %2435 = vmatpush1.msra.mxu0 0.0
  %2436 = vmatprep.subr.mxu0 0.0
  %2437 = vmatpush1.msra.mxu0 0.0
  %2438 = vmatprep.subr.mxu0 0.0
  %2439 = vmatpush1.msra.mxu0 0.0
  %2440 = vmatprep.subr.mxu0 0.0
  %2441 = vmatpush1.msra.mxu0 0.0
  %2442 = vmatprep.mubr.f32.mxu0 0.0
  %2443 = vmatmul.mubr.f32.gmra.mrb[0].mxu0 %v1363
  %v2444 = vpop.f32.mrb[0].mxu0
  %v2445 = vadd.f32 %v2211, %v2444
  %v2446 = vpop.f32.mrb[0].mxu0
  %2447 = vdwg.mxu0
  %2449 = vrot.lane.b32.xlu0 %v2377, 80
  %v2450 = vpop.permute.xlu0 %2449
  %v2451 = vsel %vm1155, %v2450, 0
  %2453 = vmatprep.subr.mxu0 0.0
  %2454 = vmatpush1.msra.mxu0 %v91
  %2455 = vmatprep.subr.mxu0 0.0
  %2456 = vmatpush1.msra.mxu0 %v92
  %2457 = vmatprep.subr.mxu0 0.0
  %2458 = vmatpush1.msra.mxu0 0.0
  %2459 = vmatprep.subr.mxu0 0.0
  %2460 = vmatpush1.msra.mxu0 0.0
  %2461 = vmatprep.subr.mxu0 0.0
  %2462 = vmatpush1.msra.mxu0 0.0
  %2463 = vmatprep.subr.mxu0 0.0
  %2464 = vmatpush1.msra.mxu0 0.0
  %2465 = vmatprep.subr.mxu0 0.0
  %2466 = vmatpush1.msra.mxu0 0.0
  %2467 = vmatprep.subr.mxu0 0.0
  %2468 = vmatpush1.msra.mxu0 0.0
  %2469 = vmatprep.subr.mxu0 0.0
  %2470 = vmatpush1.msra.mxu0 0.0
  %2471 = vmatprep.subr.mxu0 0.0
  %2472 = vmatpush1.msra.mxu0 0.0
  %2473 = vmatprep.subr.mxu0 0.0
  %2474 = vmatpush1.msra.mxu0 0.0
  %2475 = vmatprep.subr.mxu0 0.0
  %2476 = vmatpush1.msra.mxu0 0.0
  %2477 = vmatprep.subr.mxu0 0.0
  %2478 = vmatpush1.msra.mxu0 0.0
  %2479 = vmatprep.subr.mxu0 0.0
  %2480 = vmatpush1.msra.mxu0 0.0
  %2481 = vmatprep.subr.mxu0 0.0
  %2482 = vmatpush1.msra.mxu0 0.0
  %2483 = vmatprep.subr.mxu0 0.0
  %2484 = vmatpush1.msra.mxu0 0.0
  %2485 = vmatprep.subr.mxu0 0.0
  %2486 = vmatpush1.msra.mxu0 0.0
  %2487 = vmatprep.subr.mxu0 0.0
  %2488 = vmatpush1.msra.mxu0 0.0
  %2489 = vmatprep.subr.mxu0 0.0
  %2490 = vmatpush1.msra.mxu0 0.0
  %2491 = vmatprep.subr.mxu0 0.0
  %2492 = vmatpush1.msra.mxu0 0.0
  %2493 = vmatprep.subr.mxu0 0.0
  %2494 = vmatpush1.msra.mxu0 0.0
  %2495 = vmatprep.subr.mxu0 0.0
  %2496 = vmatpush1.msra.mxu0 0.0
  %2497 = vmatprep.subr.mxu0 0.0
  %2498 = vmatpush1.msra.mxu0 0.0
  %2499 = vmatprep.subr.mxu0 0.0
  %2500 = vmatpush1.msra.mxu0 0.0
  %2501 = vmatprep.subr.mxu0 0.0
  %2502 = vmatpush1.msra.mxu0 0.0
  %2503 = vmatprep.subr.mxu0 0.0
  %2504 = vmatpush1.msra.mxu0 0.0
  %2505 = vmatprep.subr.mxu0 0.0
  %2506 = vmatpush1.msra.mxu0 0.0
  %2507 = vmatprep.subr.mxu0 0.0
  %2508 = vmatpush1.msra.mxu0 0.0
  %2509 = vmatprep.subr.mxu0 0.0
  %2510 = vmatpush1.msra.mxu0 0.0
  %2511 = vmatprep.subr.mxu0 0.0
  %2512 = vmatpush1.msra.mxu0 0.0
  %2513 = vmatprep.subr.mxu0 0.0
  %2514 = vmatpush1.msra.mxu0 0.0
  %2515 = vmatprep.subr.mxu0 0.0
  %2516 = vmatpush1.msra.mxu0 0.0
  %2517 = vmatprep.mubr.f32.mxu0 0.0
  %2518 = vmatmul.mubr.f32.gmra.mrb[0].mxu0 %v2451
  %v2519 = vpop.f32.mrb[0].mxu0
  %v2520 = vadd.f32 0.0, %v2519
  %v2521 = vpop.f32.mrb[0].mxu0
  %2522 = vdwg.mxu0
  %v2523 = vadd.f32 %v2445, %v2520
  %v2524 = vxor.u32 %v2523, 2147483648
  %v2525 = vmul.f32 %v2524, 1.442695
  %v2526 = vpow.pop %v2525
  %v2527 = vadd.f32 %v2526, 1.0
  %v2528 = vrcp.pop %v2527
  %v2529 = vmul.f32 1.0, %v2528
  %v2530 = vtanh.pop %v2523
  %v2531 = vmul.f32 %v2529, %v2371
  %2533 = vrot.lane.b32.xlu0 %v2530, 96
  %v2534 = vpop.permute.xlu0 %2533
  %v2536 = vmul.f32 %v2529, %v2534
  %2538 = vrot.lane.b32.xlu0 %v2536, 16
  %v2539 = vpop.permute.xlu0 %2538
  %v2541 = vadd.f32 %v2531, %v2539
  %v2542 = vtanh.pop %v2541
  %2544 = vrot.lane.b32.xlu0 %v2542, 32
  %v2545 = vpop.permute.xlu0 %2544
  %v2547 = vmul.f32 %v2529, %v2545
  %2548 = vmatprep.subr.mxu0 0.0
  %2549 = vmatpush1.msra.mxu0 %v89
  %2550 = vmatprep.subr.mxu0 0.0
  %2551 = vmatpush1.msra.mxu0 %v90
  %2552 = vmatprep.subr.mxu0 0.0
  %2553 = vmatpush1.msra.mxu0 0.0
  %2554 = vmatprep.subr.mxu0 0.0
  %2555 = vmatpush1.msra.mxu0 0.0
  %2556 = vmatprep.subr.mxu0 0.0
  %2557 = vmatpush1.msra.mxu0 0.0
  %2558 = vmatprep.subr.mxu0 0.0
  %2559 = vmatpush1.msra.mxu0 0.0
  %2560 = vmatprep.subr.mxu0 0.0
  %2561 = vmatpush1.msra.mxu0 0.0
  %2562 = vmatprep.subr.mxu0 0.0
  %2563 = vmatpush1.msra.mxu0 0.0
  %2564 = vmatprep.subr.mxu0 0.0
  %2565 = vmatpush1.msra.mxu0 0.0
  %2566 = vmatprep.subr.mxu0 0.0
  %2567 = vmatpush1.msra.mxu0 0.0
  %2568 = vmatprep.subr.mxu0 0.0
  %2569 = vmatpush1.msra.mxu0 0.0
  %2570 = vmatprep.subr.mxu0 0.0
  %2571 = vmatpush1.msra.mxu0 0.0
  %2572 = vmatprep.subr.mxu0 0.0
  %2573 = vmatpush1.msra.mxu0 0.0
  %2574 = vmatprep.subr.mxu0 0.0
  %2575 = vmatpush1.msra.mxu0 0.0
  %2576 = vmatprep.subr.mxu0 0.0
  %2577 = vmatpush1.msra.mxu0 0.0
  %2578 = vmatprep.subr.mxu0 0.0
  %2579 = vmatpush1.msra.mxu0 0.0
  %2580 = vmatprep.subr.mxu0 0.0
  %2581 = vmatpush1.msra.mxu0 0.0
  %2582 = vmatprep.subr.mxu0 0.0
  %2583 = vmatpush1.msra.mxu0 0.0
  %2584 = vmatprep.subr.mxu0 0.0
  %2585 = vmatpush1.msra.mxu0 0.0
  %2586 = vmatprep.subr.mxu0 0.0
  %2587 = vmatpush1.msra.mxu0 0.0
  %2588 = vmatprep.subr.mxu0 0.0
  %2589 = vmatpush1.msra.mxu0 0.0
  %2590 = vmatprep.subr.mxu0 0.0
  %2591 = vmatpush1.msra.mxu0 0.0
  %2592 = vmatprep.subr.mxu0 0.0
  %2593 = vmatpush1.msra.mxu0 0.0
  %2594 = vmatprep.subr.mxu0 0.0
  %2595 = vmatpush1.msra.mxu0 0.0
  %2596 = vmatprep.subr.mxu0 0.0
  %2597 = vmatpush1.msra.mxu0 0.0
  %2598 = vmatprep.subr.mxu0 0.0
  %2599 = vmatpush1.msra.mxu0 0.0
  %2600 = vmatprep.subr.mxu0 0.0
  %2601 = vmatpush1.msra.mxu0 0.0
  %2602 = vmatprep.subr.mxu0 0.0
  %2603 = vmatpush1.msra.mxu0 0.0
  %2604 = vmatprep.subr.mxu0 0.0
  %2605 = vmatpush1.msra.mxu0 0.0
  %2606 = vmatprep.subr.mxu0 0.0
  %2607 = vmatpush1.msra.mxu0 0.0
  %2608 = vmatprep.subr.mxu0 0.0
  %2609 = vmatpush1.msra.mxu0 0.0
  %2610 = vmatprep.subr.mxu0 0.0
  %2611 = vmatpush1.msra.mxu0 0.0
  %2612 = vmatprep.mubr.f32.mxu0 0.0
  %2613 = vmatmul.mubr.f32.gmra.mrb[0].mxu0 %v1470
  %v2614 = vpop.f32.mrb[0].mxu0
  %v2615 = vadd.f32 %v2211, %v2614
  %v2616 = vpop.f32.mrb[0].mxu0
  %2617 = vdwg.mxu0
  %2619 = vrot.lane.b32.xlu0 %v2547, 80
  %v2620 = vpop.permute.xlu0 %2619
  %v2621 = vsel %vm1155, %v2620, 0
  %2623 = vmatprep.subr.mxu0 0.0
  %2624 = vmatpush1.msra.mxu0 %v91
  %2625 = vmatprep.subr.mxu0 0.0
  %2626 = vmatpush1.msra.mxu0 %v92
  %2627 = vmatprep.subr.mxu0 0.0
  %2628 = vmatpush1.msra.mxu0 0.0
  %2629 = vmatprep.subr.mxu0 0.0
  %2630 = vmatpush1.msra.mxu0 0.0
  %2631 = vmatprep.subr.mxu0 0.0
  %2632 = vmatpush1.msra.mxu0 0.0
  %2633 = vmatprep.subr.mxu0 0.0
  %2634 = vmatpush1.msra.mxu0 0.0
  %2635 = vmatprep.subr.mxu0 0.0
  %2636 = vmatpush1.msra.mxu0 0.0
  %2637 = vmatprep.subr.mxu0 0.0
  %2638 = vmatpush1.msra.mxu0 0.0
  %2639 = vmatprep.subr.mxu0 0.0
  %2640 = vmatpush1.msra.mxu0 0.0
  %2641 = vmatprep.subr.mxu0 0.0
  %2642 = vmatpush1.msra.mxu0 0.0
  %2643 = vmatprep.subr.mxu0 0.0
  %2644 = vmatpush1.msra.mxu0 0.0
  %2645 = vmatprep.subr.mxu0 0.0
  %2646 = vmatpush1.msra.mxu0 0.0
  %2647 = vmatprep.subr.mxu0 0.0
  %2648 = vmatpush1.msra.mxu0 0.0
  %2649 = vmatprep.subr.mxu0 0.0
  %2650 = vmatpush1.msra.mxu0 0.0
  %2651 = vmatprep.subr.mxu0 0.0
  %2652 = vmatpush1.msra.mxu0 0.0
  %2653 = vmatprep.subr.mxu0 0.0
  %2654 = vmatpush1.msra.mxu0 0.0
  %2655 = vmatprep.subr.mxu0 0.0
  %2656 = vmatpush1.msra.mxu0 0.0
  %2657 = vmatprep.subr.mxu0 0.0
  %2658 = vmatpush1.msra.mxu0 0.0
  %2659 = vmatprep.subr.mxu0 0.0
  %2660 = vmatpush1.msra.mxu0 0.0
  %2661 = vmatprep.subr.mxu0 0.0
  %2662 = vmatpush1.msra.mxu0 0.0
  %2663 = vmatprep.subr.mxu0 0.0
  %2664 = vmatpush1.msra.mxu0 0.0
  %2665 = vmatprep.subr.mxu0 0.0
  %2666 = vmatpush1.msra.mxu0 0.0
  %2667 = vmatprep.subr.mxu0 0.0
  %2668 = vmatpush1.msra.mxu0 0.0
  %2669 = vmatprep.subr.mxu0 0.0
  %2670 = vmatpush1.msra.mxu0 0.0
  %2671 = vmatprep.subr.mxu0 0.0
  %2672 = vmatpush1.msra.mxu0 0.0
  %2673 = vmatprep.subr.mxu0 0.0
  %2674 = vmatpush1.msra.mxu0 0.0
  %2675 = vmatprep.subr.mxu0 0.0
  %2676 = vmatpush1.msra.mxu0 0.0
  %2677 = vmatprep.subr.mxu0 0.0
  %2678 = vmatpush1.msra.mxu0 0.0
  %2679 = vmatprep.subr.mxu0 0.0
  %2680 = vmatpush1.msra.mxu0 0.0
  %2681 = vmatprep.subr.mxu0 0.0
  %2682 = vmatpush1.msra.mxu0 0.0
  %2683 = vmatprep.subr.mxu0 0.0
  %2684 = vmatpush1.msra.mxu0 0.0
  %2685 = vmatprep.subr.mxu0 0.0
  %2686 = vmatpush1.msra.mxu0 0.0
  %2687 = vmatprep.mubr.f32.mxu0 0.0
  %2688 = vmatmul.mubr.f32.gmra.mrb[0].mxu0 %v2621
  %v2689 = vpop.f32.mrb[0].mxu0
  %v2690 = vadd.f32 0.0, %v2689
  %v2691 = vpop.f32.mrb[0].mxu0
  %2692 = vdwg.mxu0
  %v2693 = vadd.f32 %v2615, %v2690
  %v2694 = vxor.u32 %v2693, 2147483648
  %v2695 = vmul.f32 %v2694, 1.442695
  %v2696 = vpow.pop %v2695
  %v2697 = vadd.f32 %v2696, 1.0
  %v2698 = vrcp.pop %v2697
  %v2699 = vmul.f32 1.0, %v2698
  %v2700 = vtanh.pop %v2693
  %v2701 = vmul.f32 %v2699, %v2541
  %2703 = vrot.lane.b32.xlu0 %v2700, 96
  %v2704 = vpop.permute.xlu0 %2703
  %v2706 = vmul.f32 %v2699, %v2704
  %2708 = vrot.lane.b32.xlu0 %v2706, 16
  %v2709 = vpop.permute.xlu0 %2708
  %v2711 = vadd.f32 %v2701, %v2709
  %v2712 = vtanh.pop %v2711
  %2714 = vrot.lane.b32.xlu0 %v2712, 32
  %v2715 = vpop.permute.xlu0 %2714
  %v2717 = vmul.f32 %v2699, %v2715
  %2718 = vmatprep.subr.mxu0 0.0
  %2719 = vmatpush1.msra.mxu0 %v89
  %2720 = vmatprep.subr.mxu0 0.0
  %2721 = vmatpush1.msra.mxu0 %v90
  %2722 = vmatprep.subr.mxu0 0.0
  %2723 = vmatpush1.msra.mxu0 0.0
  %2724 = vmatprep.subr.mxu0 0.0
  %2725 = vmatpush1.msra.mxu0 0.0
  %2726 = vmatprep.subr.mxu0 0.0
  %2727 = vmatpush1.msra.mxu0 0.0
  %2728 = vmatprep.subr.mxu0 0.0
  %2729 = vmatpush1.msra.mxu0 0.0
  %2730 = vmatprep.subr.mxu0 0.0
  %2731 = vmatpush1.msra.mxu0 0.0
  %2732 = vmatprep.subr.mxu0 0.0
  %2733 = vmatpush1.msra.mxu0 0.0
  %2734 = vmatprep.subr.mxu0 0.0
  %2735 = vmatpush1.msra.mxu0 0.0
  %2736 = vmatprep.subr.mxu0 0.0
  %2737 = vmatpush1.msra.mxu0 0.0
  %2738 = vmatprep.subr.mxu0 0.0
  %2739 = vmatpush1.msra.mxu0 0.0
  %2740 = vmatprep.subr.mxu0 0.0
  %2741 = vmatpush1.msra.mxu0 0.0
  %2742 = vmatprep.subr.mxu0 0.0
  %2743 = vmatpush1.msra.mxu0 0.0
  %2744 = vmatprep.subr.mxu0 0.0
  %2745 = vmatpush1.msra.mxu0 0.0
  %2746 = vmatprep.subr.mxu0 0.0
  %2747 = vmatpush1.msra.mxu0 0.0
  %2748 = vmatprep.subr.mxu0 0.0
  %2749 = vmatpush1.msra.mxu0 0.0
  %2750 = vmatprep.subr.mxu0 0.0
  %2751 = vmatpush1.msra.mxu0 0.0
  %2752 = vmatprep.subr.mxu0 0.0
  %2753 = vmatpush1.msra.mxu0 0.0
  %2754 = vmatprep.subr.mxu0 0.0
  %2755 = vmatpush1.msra.mxu0 0.0
  %2756 = vmatprep.subr.mxu0 0.0
  %2757 = vmatpush1.msra.mxu0 0.0
  %2758 = vmatprep.subr.mxu0 0.0
  %2759 = vmatpush1.msra.mxu0 0.0
  %2760 = vmatprep.subr.mxu0 0.0
  %2761 = vmatpush1.msra.mxu0 0.0
  %2762 = vmatprep.subr.mxu0 0.0
  %2763 = vmatpush1.msra.mxu0 0.0
  %2764 = vmatprep.subr.mxu0 0.0
  %2765 = vmatpush1.msra.mxu0 0.0
  %2766 = vmatprep.subr.mxu0 0.0
  %2767 = vmatpush1.msra.mxu0 0.0
  %2768 = vmatprep.subr.mxu0 0.0
  %2769 = vmatpush1.msra.mxu0 0.0
  %2770 = vmatprep.subr.mxu0 0.0
  %2771 = vmatpush1.msra.mxu0 0.0
  %2772 = vmatprep.subr.mxu0 0.0
  %2773 = vmatpush1.msra.mxu0 0.0
  %2774 = vmatprep.subr.mxu0 0.0
  %2775 = vmatpush1.msra.mxu0 0.0
  %2776 = vmatprep.subr.mxu0 0.0
  %2777 = vmatpush1.msra.mxu0 0.0
  %2778 = vmatprep.subr.mxu0 0.0
  %2779 = vmatpush1.msra.mxu0 0.0
  %2780 = vmatprep.subr.mxu0 0.0
  %2781 = vmatpush1.msra.mxu0 0.0
  %2782 = vmatprep.mubr.f32.mxu0 0.0
  %2783 = vmatmul.mubr.f32.gmra.mrb[0].mxu0 %v1577
  %v2784 = vpop.f32.mrb[0].mxu0
  %v2785 = vadd.f32 %v2211, %v2784
  %v2786 = vpop.f32.mrb[0].mxu0
  %2787 = vdwg.mxu0
  %2789 = vrot.lane.b32.xlu0 %v2717, 80
  %v2790 = vpop.permute.xlu0 %2789
  %v2791 = vsel %vm1155, %v2790, 0
  %2793 = vmatprep.subr.mxu0 0.0
  %2794 = vmatpush1.msra.mxu0 %v91
  %2795 = vmatprep.subr.mxu0 0.0
  %2796 = vmatpush1.msra.mxu0 %v92
  %2797 = vmatprep.subr.mxu0 0.0
  %2798 = vmatpush1.msra.mxu0 0.0
  %2799 = vmatprep.subr.mxu0 0.0
  %2800 = vmatpush1.msra.mxu0 0.0
  %2801 = vmatprep.subr.mxu0 0.0
  %2802 = vmatpush1.msra.mxu0 0.0
  %2803 = vmatprep.subr.mxu0 0.0
  %2804 = vmatpush1.msra.mxu0 0.0
  %2805 = vmatprep.subr.mxu0 0.0
  %2806 = vmatpush1.msra.mxu0 0.0
  %2807 = vmatprep.subr.mxu0 0.0
  %2808 = vmatpush1.msra.mxu0 0.0
  %2809 = vmatprep.subr.mxu0 0.0
  %2810 = vmatpush1.msra.mxu0 0.0
  %2811 = vmatprep.subr.mxu0 0.0
  %2812 = vmatpush1.msra.mxu0 0.0
  %2813 = vmatprep.subr.mxu0 0.0
  %2814 = vmatpush1.msra.mxu0 0.0
  %2815 = vmatprep.subr.mxu0 0.0
  %2816 = vmatpush1.msra.mxu0 0.0
  %2817 = vmatprep.subr.mxu0 0.0
  %2818 = vmatpush1.msra.mxu0 0.0
  %2819 = vmatprep.subr.mxu0 0.0
  %2820 = vmatpush1.msra.mxu0 0.0
  %2821 = vmatprep.subr.mxu0 0.0
  %2822 = vmatpush1.msra.mxu0 0.0
  %2823 = vmatprep.subr.mxu0 0.0
  %2824 = vmatpush1.msra.mxu0 0.0
  %2825 = vmatprep.subr.mxu0 0.0
  %2826 = vmatpush1.msra.mxu0 0.0
  %2827 = vmatprep.subr.mxu0 0.0
  %2828 = vmatpush1.msra.mxu0 0.0
  %2829 = vmatprep.subr.mxu0 0.0
  %2830 = vmatpush1.msra.mxu0 0.0
  %2831 = vmatprep.subr.mxu0 0.0
  %2832 = vmatpush1.msra.mxu0 0.0
  %2833 = vmatprep.subr.mxu0 0.0
  %2834 = vmatpush1.msra.mxu0 0.0
  %2835 = vmatprep.subr.mxu0 0.0
  %2836 = vmatpush1.msra.mxu0 0.0
  %2837 = vmatprep.subr.mxu0 0.0
  %2838 = vmatpush1.msra.mxu0 0.0
  %2839 = vmatprep.subr.mxu0 0.0
  %2840 = vmatpush1.msra.mxu0 0.0
  %2841 = vmatprep.subr.mxu0 0.0
  %2842 = vmatpush1.msra.mxu0 0.0
  %2843 = vmatprep.subr.mxu0 0.0
  %2844 = vmatpush1.msra.mxu0 0.0
  %2845 = vmatprep.subr.mxu0 0.0
  %2846 = vmatpush1.msra.mxu0 0.0
  %2847 = vmatprep.subr.mxu0 0.0
  %2848 = vmatpush1.msra.mxu0 0.0
  %2849 = vmatprep.subr.mxu0 0.0
  %2850 = vmatpush1.msra.mxu0 0.0
  %2851 = vmatprep.subr.mxu0 0.0
  %2852 = vmatpush1.msra.mxu0 0.0
  %2853 = vmatprep.subr.mxu0 0.0
  %2854 = vmatpush1.msra.mxu0 0.0
  %2855 = vmatprep.subr.mxu0 0.0
  %2856 = vmatpush1.msra.mxu0 0.0
  %2857 = vmatprep.mubr.f32.mxu0 0.0
  %2858 = vmatmul.mubr.f32.gmra.mrb[0].mxu0 %v2791
  %v2859 = vpop.f32.mrb[0].mxu0
  %v2860 = vadd.f32 0.0, %v2859
  %v2861 = vpop.f32.mrb[0].mxu0
  %2862 = vdwg.mxu0
  %v2863 = vadd.f32 %v2785, %v2860
  %v2864 = vxor.u32 %v2863, 2147483648
  %v2865 = vmul.f32 %v2864, 1.442695
  %v2866 = vpow.pop %v2865
  %v2867 = vadd.f32 %v2866, 1.0
  %v2868 = vrcp.pop %v2867
  %v2869 = vmul.f32 1.0, %v2868
  %v2870 = vtanh.pop %v2863
  %v2871 = vmul.f32 %v2869, %v2711
  %2873 = vrot.lane.b32.xlu0 %v2870, 96
  %v2874 = vpop.permute.xlu0 %2873
  %v2876 = vmul.f32 %v2869, %v2874
  %2878 = vrot.lane.b32.xlu0 %v2876, 16
  %v2879 = vpop.permute.xlu0 %2878
  %v2881 = vadd.f32 %v2871, %v2879
  %v2882 = vtanh.pop %v2881
  %2884 = vrot.lane.b32.xlu0 %v2882, 32
  %v2885 = vpop.permute.xlu0 %2884
  %v2887 = vmul.f32 %v2869, %v2885
  %2888 = vmatprep.subr.mxu0 0.0
  %2889 = vmatpush1.msra.mxu0 %v89
  %2890 = vmatprep.subr.mxu0 0.0
  %2891 = vmatpush1.msra.mxu0 %v90
  %2892 = vmatprep.subr.mxu0 0.0
  %2893 = vmatpush1.msra.mxu0 0.0
  %2894 = vmatprep.subr.mxu0 0.0
  %2895 = vmatpush1.msra.mxu0 0.0
  %2896 = vmatprep.subr.mxu0 0.0
  %2897 = vmatpush1.msra.mxu0 0.0
  %2898 = vmatprep.subr.mxu0 0.0
  %2899 = vmatpush1.msra.mxu0 0.0
  %2900 = vmatprep.subr.mxu0 0.0
  %2901 = vmatpush1.msra.mxu0 0.0
  %2902 = vmatprep.subr.mxu0 0.0
  %2903 = vmatpush1.msra.mxu0 0.0
  %2904 = vmatprep.subr.mxu0 0.0
  %2905 = vmatpush1.msra.mxu0 0.0
  %2906 = vmatprep.subr.mxu0 0.0
  %2907 = vmatpush1.msra.mxu0 0.0
  %2908 = vmatprep.subr.mxu0 0.0
  %2909 = vmatpush1.msra.mxu0 0.0
  %2910 = vmatprep.subr.mxu0 0.0
  %2911 = vmatpush1.msra.mxu0 0.0
  %2912 = vmatprep.subr.mxu0 0.0
  %2913 = vmatpush1.msra.mxu0 0.0
  %2914 = vmatprep.subr.mxu0 0.0
  %2915 = vmatpush1.msra.mxu0 0.0
  %2916 = vmatprep.subr.mxu0 0.0
  %2917 = vmatpush1.msra.mxu0 0.0
  %2918 = vmatprep.subr.mxu0 0.0
  %2919 = vmatpush1.msra.mxu0 0.0
  %2920 = vmatprep.subr.mxu0 0.0
  %2921 = vmatpush1.msra.mxu0 0.0
  %2922 = vmatprep.subr.mxu0 0.0
  %2923 = vmatpush1.msra.mxu0 0.0
  %2924 = vmatprep.subr.mxu0 0.0
  %2925 = vmatpush1.msra.mxu0 0.0
  %2926 = vmatprep.subr.mxu0 0.0
  %2927 = vmatpush1.msra.mxu0 0.0
  %2928 = vmatprep.subr.mxu0 0.0
  %2929 = vmatpush1.msra.mxu0 0.0
  %2930 = vmatprep.subr.mxu0 0.0
  %2931 = vmatpush1.msra.mxu0 0.0
  %2932 = vmatprep.subr.mxu0 0.0
  %2933 = vmatpush1.msra.mxu0 0.0
  %2934 = vmatprep.subr.mxu0 0.0
  %2935 = vmatpush1.msra.mxu0 0.0
  %2936 = vmatprep.subr.mxu0 0.0
  %2937 = vmatpush1.msra.mxu0 0.0
  %2938 = vmatprep.subr.mxu0 0.0
  %2939 = vmatpush1.msra.mxu0 0.0
  %2940 = vmatprep.subr.mxu0 0.0
  %2941 = vmatpush1.msra.mxu0 0.0
  %2942 = vmatprep.subr.mxu0 0.0
  %2943 = vmatpush1.msra.mxu0 0.0
  %2944 = vmatprep.subr.mxu0 0.0
  %2945 = vmatpush1.msra.mxu0 0.0
  %2946 = vmatprep.subr.mxu0 0.0
  %2947 = vmatpush1.msra.mxu0 0.0
  %2948 = vmatprep.subr.mxu0 0.0
  %2949 = vmatpush1.msra.mxu0 0.0
  %2950 = vmatprep.subr.mxu0 0.0
  %2951 = vmatpush1.msra.mxu0 0.0
  %2952 = vmatprep.mubr.f32.mxu0 0.0
  %2953 = vmatmul.mubr.f32.gmra.mrb[0].mxu0 %v1680
  %v2954 = vpop.f32.mrb[0].mxu0
  %v2955 = vadd.f32 %v2211, %v2954
  %v2956 = vpop.f32.mrb[0].mxu0
  %2957 = vdwg.mxu0
  %2959 = vrot.lane.b32.xlu0 %v2887, 80
  %v2960 = vpop.permute.xlu0 %2959
  %v2961 = vsel %vm1155, %v2960, 0
  %2963 = vmatprep.subr.mxu0 0.0
  %2964 = vmatpush1.msra.mxu0 %v91
  %2965 = vmatprep.subr.mxu0 0.0
  %2966 = vmatpush1.msra.mxu0 %v92
  %2967 = vmatprep.subr.mxu0 0.0
  %2968 = vmatpush1.msra.mxu0 0.0
  %2969 = vmatprep.subr.mxu0 0.0
  %2970 = vmatpush1.msra.mxu0 0.0
  %2971 = vmatprep.subr.mxu0 0.0
  %2972 = vmatpush1.msra.mxu0 0.0
  %2973 = vmatprep.subr.mxu0 0.0
  %2974 = vmatpush1.msra.mxu0 0.0
  %2975 = vmatprep.subr.mxu0 0.0
  %2976 = vmatpush1.msra.mxu0 0.0
  %2977 = vmatprep.subr.mxu0 0.0
  %2978 = vmatpush1.msra.mxu0 0.0
  %2979 = vmatprep.subr.mxu0 0.0
  %2980 = vmatpush1.msra.mxu0 0.0
  %2981 = vmatprep.subr.mxu0 0.0
  %2982 = vmatpush1.msra.mxu0 0.0
  %2983 = vmatprep.subr.mxu0 0.0
  %2984 = vmatpush1.msra.mxu0 0.0
  %2985 = vmatprep.subr.mxu0 0.0
  %2986 = vmatpush1.msra.mxu0 0.0
  %2987 = vmatprep.subr.mxu0 0.0
  %2988 = vmatpush1.msra.mxu0 0.0
  %2989 = vmatprep.subr.mxu0 0.0
  %2990 = vmatpush1.msra.mxu0 0.0
  %2991 = vmatprep.subr.mxu0 0.0
  %2992 = vmatpush1.msra.mxu0 0.0
  %2993 = vmatprep.subr.mxu0 0.0
  %2994 = vmatpush1.msra.mxu0 0.0
  %2995 = vmatprep.subr.mxu0 0.0
  %2996 = vmatpush1.msra.mxu0 0.0
  %2997 = vmatprep.subr.mxu0 0.0
  %2998 = vmatpush1.msra.mxu0 0.0
  %2999 = vmatprep.subr.mxu0 0.0
  %3000 = vmatpush1.msra.mxu0 0.0
  %3001 = vmatprep.subr.mxu0 0.0
  %3002 = vmatpush1.msra.mxu0 0.0
  %3003 = vmatprep.subr.mxu0 0.0
  %3004 = vmatpush1.msra.mxu0 0.0
  %3005 = vmatprep.subr.mxu0 0.0
  %3006 = vmatpush1.msra.mxu0 0.0
  %3007 = vmatprep.subr.mxu0 0.0
  %3008 = vmatpush1.msra.mxu0 0.0
  %3009 = vmatprep.subr.mxu0 0.0
  %3010 = vmatpush1.msra.mxu0 0.0
  %3011 = vmatprep.subr.mxu0 0.0
  %3012 = vmatpush1.msra.mxu0 0.0
  %3013 = vmatprep.subr.mxu0 0.0
  %3014 = vmatpush1.msra.mxu0 0.0
  %3015 = vmatprep.subr.mxu0 0.0
  %3016 = vmatpush1.msra.mxu0 0.0
  %3017 = vmatprep.subr.mxu0 0.0
  %3018 = vmatpush1.msra.mxu0 0.0
  %3019 = vmatprep.subr.mxu0 0.0
  %3020 = vmatpush1.msra.mxu0 0.0
  %3021 = vmatprep.subr.mxu0 0.0
  %3022 = vmatpush1.msra.mxu0 0.0
  %3023 = vmatprep.subr.mxu0 0.0
  %3024 = vmatpush1.msra.mxu0 0.0
  %3025 = vmatprep.subr.mxu0 0.0
  %3026 = vmatpush1.msra.mxu0 0.0
  %3027 = vmatprep.mubr.f32.mxu0 0.0
  %3028 = vmatmul.mubr.f32.gmra.mrb[0].mxu0 %v2961
  %v3029 = vpop.f32.mrb[0].mxu0
  %v3030 = vadd.f32 0.0, %v3029
  %v3031 = vpop.f32.mrb[0].mxu0
  %3032 = vdwg.mxu0
  %v3033 = vadd.f32 %v2955, %v3030
  %v3034 = vxor.u32 %v3033, 2147483648
  %v3035 = vmul.f32 %v3034, 1.442695
  %v3036 = vpow.pop %v3035
  %v3037 = vadd.f32 %v3036, 1.0
  %v3038 = vrcp.pop %v3037
  %v3039 = vmul.f32 1.0, %v3038
  %v3040 = vtanh.pop %v3033
  %v3041 = vmul.f32 %v3039, %v2881
  %3043 = vrot.lane.b32.xlu0 %v3040, 96
  %v3044 = vpop.permute.xlu0 %3043
  %v3046 = vmul.f32 %v3039, %v3044
  %3048 = vrot.lane.b32.xlu0 %v3046, 16
  %v3049 = vpop.permute.xlu0 %3048
  %v3051 = vadd.f32 %v3041, %v3049
  %v3052 = vtanh.pop %v3051
  %3054 = vrot.lane.b32.xlu0 %v3052, 32
  %v3055 = vpop.permute.xlu0 %3054
  %v3057 = vmul.f32 %v3039, %v3055
  %3058 = vmatprep.subr.mxu0 0.0
  %3059 = vmatpush1.msra.mxu0 %v89
  %3060 = vmatprep.subr.mxu0 0.0
  %3061 = vmatpush1.msra.mxu0 %v90
  %3062 = vmatprep.subr.mxu0 0.0
  %3063 = vmatpush1.msra.mxu0 0.0
  %3064 = vmatprep.subr.mxu0 0.0
  %3065 = vmatpush1.msra.mxu0 0.0
  %3066 = vmatprep.subr.mxu0 0.0
  %3067 = vmatpush1.msra.mxu0 0.0
  %3068 = vmatprep.subr.mxu0 0.0
  %3069 = vmatpush1.msra.mxu0 0.0
  %3070 = vmatprep.subr.mxu0 0.0
  %3071 = vmatpush1.msra.mxu0 0.0
  %3072 = vmatprep.subr.mxu0 0.0
  %3073 = vmatpush1.msra.mxu0 0.0
  %3074 = vmatprep.subr.mxu0 0.0
  %3075 = vmatpush1.msra.mxu0 0.0
  %3076 = vmatprep.subr.mxu0 0.0
  %3077 = vmatpush1.msra.mxu0 0.0
  %3078 = vmatprep.subr.mxu0 0.0
  %3079 = vmatpush1.msra.mxu0 0.0
  %3080 = vmatprep.subr.mxu0 0.0
  %3081 = vmatpush1.msra.mxu0 0.0
  %3082 = vmatprep.subr.mxu0 0.0
  %3083 = vmatpush1.msra.mxu0 0.0
  %3084 = vmatprep.subr.mxu0 0.0
  %3085 = vmatpush1.msra.mxu0 0.0
  %3086 = vmatprep.subr.mxu0 0.0
  %3087 = vmatpush1.msra.mxu0 0.0
  %3088 = vmatprep.subr.mxu0 0.0
  %3089 = vmatpush1.msra.mxu0 0.0
  %3090 = vmatprep.subr.mxu0 0.0
  %3091 = vmatpush1.msra.mxu0 0.0
  %3092 = vmatprep.subr.mxu0 0.0
  %3093 = vmatpush1.msra.mxu0 0.0
  %3094 = vmatprep.subr.mxu0 0.0
  %3095 = vmatpush1.msra.mxu0 0.0
  %3096 = vmatprep.subr.mxu0 0.0
  %3097 = vmatpush1.msra.mxu0 0.0
  %3098 = vmatprep.subr.mxu0 0.0
  %3099 = vmatpush1.msra.mxu0 0.0
  %3100 = vmatprep.subr.mxu0 0.0
  %3101 = vmatpush1.msra.mxu0 0.0
  %3102 = vmatprep.subr.mxu0 0.0
  %3103 = vmatpush1.msra.mxu0 0.0
  %3104 = vmatprep.subr.mxu0 0.0
  %3105 = vmatpush1.msra.mxu0 0.0
  %3106 = vmatprep.subr.mxu0 0.0
  %3107 = vmatpush1.msra.mxu0 0.0
  %3108 = vmatprep.subr.mxu0 0.0
  %3109 = vmatpush1.msra.mxu0 0.0
  %3110 = vmatprep.subr.mxu0 0.0
  %3111 = vmatpush1.msra.mxu0 0.0
  %3112 = vmatprep.subr.mxu0 0.0
  %3113 = vmatpush1.msra.mxu0 0.0
  %3114 = vmatprep.subr.mxu0 0.0
  %3115 = vmatpush1.msra.mxu0 0.0
  %3116 = vmatprep.subr.mxu0 0.0
  %3117 = vmatpush1.msra.mxu0 0.0
  %3118 = vmatprep.subr.mxu0 0.0
  %3119 = vmatpush1.msra.mxu0 0.0
  %3120 = vmatprep.subr.mxu0 0.0
  %3121 = vmatpush1.msra.mxu0 0.0
  %3122 = vmatprep.mubr.f32.mxu0 0.0
  %3123 = vmatmul.mubr.f32.gmra.mrb[0].mxu0 %v1787
  %v3124 = vpop.f32.mrb[0].mxu0
  %v3125 = vadd.f32 %v2211, %v3124
  %v3126 = vpop.f32.mrb[0].mxu0
  %3127 = vdwg.mxu0
  %3129 = vrot.lane.b32.xlu0 %v3057, 80
  %v3130 = vpop.permute.xlu0 %3129
  %v3131 = vsel %vm1155, %v3130, 0
  %3133 = vmatprep.subr.mxu0 0.0
  %3134 = vmatpush1.msra.mxu0 %v91
  %3135 = vmatprep.subr.mxu0 0.0
  %3136 = vmatpush1.msra.mxu0 %v92
  %3137 = vmatprep.subr.mxu0 0.0
  %3138 = vmatpush1.msra.mxu0 0.0
  %3139 = vmatprep.subr.mxu0 0.0
  %3140 = vmatpush1.msra.mxu0 0.0
  %3141 = vmatprep.subr.mxu0 0.0
  %3142 = vmatpush1.msra.mxu0 0.0
  %3143 = vmatprep.subr.mxu0 0.0
  %3144 = vmatpush1.msra.mxu0 0.0
  %3145 = vmatprep.subr.mxu0 0.0
  %3146 = vmatpush1.msra.mxu0 0.0
  %3147 = vmatprep.subr.mxu0 0.0
  %3148 = vmatpush1.msra.mxu0 0.0
  %3149 = vmatprep.subr.mxu0 0.0
  %3150 = vmatpush1.msra.mxu0 0.0
  %3151 = vmatprep.subr.mxu0 0.0
  %3152 = vmatpush1.msra.mxu0 0.0
  %3153 = vmatprep.subr.mxu0 0.0
  %3154 = vmatpush1.msra.mxu0 0.0
  %3155 = vmatprep.subr.mxu0 0.0
  %3156 = vmatpush1.msra.mxu0 0.0
  %3157 = vmatprep.subr.mxu0 0.0
  %3158 = vmatpush1.msra.mxu0 0.0
  %3159 = vmatprep.subr.mxu0 0.0
  %3160 = vmatpush1.msra.mxu0 0.0
  %3161 = vmatprep.subr.mxu0 0.0
  %3162 = vmatpush1.msra.mxu0 0.0
  %3163 = vmatprep.subr.mxu0 0.0
  %3164 = vmatpush1.msra.mxu0 0.0
  %3165 = vmatprep.subr.mxu0 0.0
  %3166 = vmatpush1.msra.mxu0 0.0
  %3167 = vmatprep.subr.mxu0 0.0
  %3168 = vmatpush1.msra.mxu0 0.0
  %3169 = vmatprep.subr.mxu0 0.0
  %3170 = vmatpush1.msra.mxu0 0.0
  %3171 = vmatprep.subr.mxu0 0.0
  %3172 = vmatpush1.msra.mxu0 0.0
  %3173 = vmatprep.subr.mxu0 0.0
  %3174 = vmatpush1.msra.mxu0 0.0
  %3175 = vmatprep.subr.mxu0 0.0
  %3176 = vmatpush1.msra.mxu0 0.0
  %3177 = vmatprep.subr.mxu0 0.0
  %3178 = vmatpush1.msra.mxu0 0.0
  %3179 = vmatprep.subr.mxu0 0.0
  %3180 = vmatpush1.msra.mxu0 0.0
  %3181 = vmatprep.subr.mxu0 0.0
  %3182 = vmatpush1.msra.mxu0 0.0
  %3183 = vmatprep.subr.mxu0 0.0
  %3184 = vmatpush1.msra.mxu0 0.0
  %3185 = vmatprep.subr.mxu0 0.0
  %3186 = vmatpush1.msra.mxu0 0.0
  %3187 = vmatprep.subr.mxu0 0.0
  %3188 = vmatpush1.msra.mxu0 0.0
  %3189 = vmatprep.subr.mxu0 0.0
  %3190 = vmatpush1.msra.mxu0 0.0
  %3191 = vmatprep.subr.mxu0 0.0
  %3192 = vmatpush1.msra.mxu0 0.0
  %3193 = vmatprep.subr.mxu0 0.0
  %3194 = vmatpush1.msra.mxu0 0.0
  %3195 = vmatprep.subr.mxu0 0.0
  %3196 = vmatpush1.msra.mxu0 0.0
  %3197 = vmatprep.mubr.f32.mxu0 0.0
  %3198 = vmatmul.mubr.f32.gmra.mrb[0].mxu0 %v3131
  %v3199 = vpop.f32.mrb[0].mxu0
  %v3200 = vadd.f32 0.0, %v3199
  %v3201 = vpop.f32.mrb[0].mxu0
  %3202 = vdwg.mxu0
  %v3203 = vadd.f32 %v3125, %v3200
  %v3204 = vxor.u32 %v3203, 2147483648
  %v3205 = vmul.f32 %v3204, 1.442695
  %v3206 = vpow.pop %v3205
  %v3207 = vadd.f32 %v3206, 1.0
  %v3208 = vrcp.pop %v3207
  %v3209 = vmul.f32 1.0, %v3208
  %v3210 = vtanh.pop %v3203
  %v3211 = vmul.f32 %v3209, %v3051
  %3213 = vrot.lane.b32.xlu0 %v3210, 96
  %v3214 = vpop.permute.xlu0 %3213
  %v3216 = vmul.f32 %v3209, %v3214
  %3218 = vrot.lane.b32.xlu0 %v3216, 16
  %v3219 = vpop.permute.xlu0 %3218
  %v3221 = vadd.f32 %v3211, %v3219
  %v3222 = vtanh.pop %v3221
  %3224 = vrot.lane.b32.xlu0 %v3222, 32
  %v3225 = vpop.permute.xlu0 %3224
  %v3227 = vmul.f32 %v3209, %v3225
  %3228 = vmatprep.subr.mxu0 0.0
  %3229 = vmatpush1.msra.mxu0 %v89
  %3230 = vmatprep.subr.mxu0 0.0
  %3231 = vmatpush1.msra.mxu0 %v90
  %3232 = vmatprep.subr.mxu0 0.0
  %3233 = vmatpush1.msra.mxu0 0.0
  %3234 = vmatprep.subr.mxu0 0.0
  %3235 = vmatpush1.msra.mxu0 0.0
  %3236 = vmatprep.subr.mxu0 0.0
  %3237 = vmatpush1.msra.mxu0 0.0
  %3238 = vmatprep.subr.mxu0 0.0
  %3239 = vmatpush1.msra.mxu0 0.0
  %3240 = vmatprep.subr.mxu0 0.0
  %3241 = vmatpush1.msra.mxu0 0.0
  %3242 = vmatprep.subr.mxu0 0.0
  %3243 = vmatpush1.msra.mxu0 0.0
  %3244 = vmatprep.subr.mxu0 0.0
  %3245 = vmatpush1.msra.mxu0 0.0
  %3246 = vmatprep.subr.mxu0 0.0
  %3247 = vmatpush1.msra.mxu0 0.0
  %3248 = vmatprep.subr.mxu0 0.0
  %3249 = vmatpush1.msra.mxu0 0.0
  %3250 = vmatprep.subr.mxu0 0.0
  %3251 = vmatpush1.msra.mxu0 0.0
  %3252 = vmatprep.subr.mxu0 0.0
  %3253 = vmatpush1.msra.mxu0 0.0
  %3254 = vmatprep.subr.mxu0 0.0
  %3255 = vmatpush1.msra.mxu0 0.0
  %3256 = vmatprep.subr.mxu0 0.0
  %3257 = vmatpush1.msra.mxu0 0.0
  %3258 = vmatprep.subr.mxu0 0.0
  %3259 = vmatpush1.msra.mxu0 0.0
  %3260 = vmatprep.subr.mxu0 0.0
  %3261 = vmatpush1.msra.mxu0 0.0
  %3262 = vmatprep.subr.mxu0 0.0
  %3263 = vmatpush1.msra.mxu0 0.0
  %3264 = vmatprep.subr.mxu0 0.0
  %3265 = vmatpush1.msra.mxu0 0.0
  %3266 = vmatprep.subr.mxu0 0.0
  %3267 = vmatpush1.msra.mxu0 0.0
  %3268 = vmatprep.subr.mxu0 0.0
  %3269 = vmatpush1.msra.mxu0 0.0
  %3270 = vmatprep.subr.mxu0 0.0
  %3271 = vmatpush1.msra.mxu0 0.0
  %3272 = vmatprep.subr.mxu0 0.0
  %3273 = vmatpush1.msra.mxu0 0.0
  %3274 = vmatprep.subr.mxu0 0.0
  %3275 = vmatpush1.msra.mxu0 0.0
  %3276 = vmatprep.subr.mxu0 0.0
  %3277 = vmatpush1.msra.mxu0 0.0
  %3278 = vmatprep.subr.mxu0 0.0
  %3279 = vmatpush1.msra.mxu0 0.0
  %3280 = vmatprep.subr.mxu0 0.0
  %3281 = vmatpush1.msra.mxu0 0.0
  %3282 = vmatprep.subr.mxu0 0.0
  %3283 = vmatpush1.msra.mxu0 0.0
  %3284 = vmatprep.subr.mxu0 0.0
  %3285 = vmatpush1.msra.mxu0 0.0
  %3286 = vmatprep.subr.mxu0 0.0
  %3287 = vmatpush1.msra.mxu0 0.0
  %3288 = vmatprep.subr.mxu0 0.0
  %3289 = vmatpush1.msra.mxu0 0.0
  %3290 = vmatprep.subr.mxu0 0.0
  %3291 = vmatpush1.msra.mxu0 0.0
  %3292 = vmatprep.mubr.f32.mxu0 0.0
  %3293 = vmatmul.mubr.f32.gmra.mrb[0].mxu0 %v1894
  %v3294 = vpop.f32.mrb[0].mxu0
  %v3295 = vadd.f32 %v2211, %v3294
  %v3296 = vpop.f32.mrb[0].mxu0
  %3297 = vdwg.mxu0
  %3299 = vrot.lane.b32.xlu0 %v3227, 80
  %v3300 = vpop.permute.xlu0 %3299
  %v3301 = vsel %vm1155, %v3300, 0
  %3303 = vmatprep.subr.mxu0 0.0
  %3304 = vmatpush1.msra.mxu0 %v91
  %3305 = vmatprep.subr.mxu0 0.0
  %3306 = vmatpush1.msra.mxu0 %v92
  %3307 = vmatprep.subr.mxu0 0.0
  %3308 = vmatpush1.msra.mxu0 0.0
  %3309 = vmatprep.subr.mxu0 0.0
  %3310 = vmatpush1.msra.mxu0 0.0
  %3311 = vmatprep.subr.mxu0 0.0
  %3312 = vmatpush1.msra.mxu0 0.0
  %3313 = vmatprep.subr.mxu0 0.0
  %3314 = vmatpush1.msra.mxu0 0.0
  %3315 = vmatprep.subr.mxu0 0.0
  %3316 = vmatpush1.msra.mxu0 0.0
  %3317 = vmatprep.subr.mxu0 0.0
  %3318 = vmatpush1.msra.mxu0 0.0
  %3319 = vmatprep.subr.mxu0 0.0
  %3320 = vmatpush1.msra.mxu0 0.0
  %3321 = vmatprep.subr.mxu0 0.0
  %3322 = vmatpush1.msra.mxu0 0.0
  %3323 = vmatprep.subr.mxu0 0.0
  %3324 = vmatpush1.msra.mxu0 0.0
  %3325 = vmatprep.subr.mxu0 0.0
  %3326 = vmatpush1.msra.mxu0 0.0
  %3327 = vmatprep.subr.mxu0 0.0
  %3328 = vmatpush1.msra.mxu0 0.0
  %3329 = vmatprep.subr.mxu0 0.0
  %3330 = vmatpush1.msra.mxu0 0.0
  %3331 = vmatprep.subr.mxu0 0.0
  %3332 = vmatpush1.msra.mxu0 0.0
  %3333 = vmatprep.subr.mxu0 0.0
  %3334 = vmatpush1.msra.mxu0 0.0
  %3335 = vmatprep.subr.mxu0 0.0
  %3336 = vmatpush1.msra.mxu0 0.0
  %3337 = vmatprep.subr.mxu0 0.0
  %3338 = vmatpush1.msra.mxu0 0.0
  %3339 = vmatprep.subr.mxu0 0.0
  %3340 = vmatpush1.msra.mxu0 0.0
  %3341 = vmatprep.subr.mxu0 0.0
  %3342 = vmatpush1.msra.mxu0 0.0
  %3343 = vmatprep.subr.mxu0 0.0
  %3344 = vmatpush1.msra.mxu0 0.0
  %3345 = vmatprep.subr.mxu0 0.0
  %3346 = vmatpush1.msra.mxu0 0.0
  %3347 = vmatprep.subr.mxu0 0.0
  %3348 = vmatpush1.msra.mxu0 0.0
  %3349 = vmatprep.subr.mxu0 0.0
  %3350 = vmatpush1.msra.mxu0 0.0
  %3351 = vmatprep.subr.mxu0 0.0
  %3352 = vmatpush1.msra.mxu0 0.0
  %3353 = vmatprep.subr.mxu0 0.0
  %3354 = vmatpush1.msra.mxu0 0.0
  %3355 = vmatprep.subr.mxu0 0.0
  %3356 = vmatpush1.msra.mxu0 0.0
  %3357 = vmatprep.subr.mxu0 0.0
  %3358 = vmatpush1.msra.mxu0 0.0
  %3359 = vmatprep.subr.mxu0 0.0
  %3360 = vmatpush1.msra.mxu0 0.0
  %3361 = vmatprep.subr.mxu0 0.0
  %3362 = vmatpush1.msra.mxu0 0.0
  %3363 = vmatprep.subr.mxu0 0.0
  %3364 = vmatpush1.msra.mxu0 0.0
  %3365 = vmatprep.subr.mxu0 0.0
  %3366 = vmatpush1.msra.mxu0 0.0
  %3367 = vmatprep.mubr.f32.mxu0 0.0
  %3368 = vmatmul.mubr.f32.gmra.mrb[0].mxu0 %v3301
  %v3369 = vpop.f32.mrb[0].mxu0
  %v3370 = vadd.f32 0.0, %v3369
  %v3371 = vpop.f32.mrb[0].mxu0
  %3372 = vdwg.mxu0
  %v3373 = vadd.f32 %v3295, %v3370
  %v3374 = vxor.u32 %v3373, 2147483648
  %v3375 = vmul.f32 %v3374, 1.442695
  %v3376 = vpow.pop %v3375
  %v3377 = vadd.f32 %v3376, 1.0
  %v3378 = vrcp.pop %v3377
  %v3379 = vmul.f32 1.0, %v3378
  %v3380 = vtanh.pop %v3373
  %v3381 = vmul.f32 %v3379, %v3221
  %3383 = vrot.lane.b32.xlu0 %v3380, 96
  %v3384 = vpop.permute.xlu0 %3383
  %v3386 = vmul.f32 %v3379, %v3384
  %3388 = vrot.lane.b32.xlu0 %v3386, 16
  %v3389 = vpop.permute.xlu0 %3388
  %v3391 = vadd.f32 %v3381, %v3389
  %v3392 = vtanh.pop %v3391
  %3394 = vrot.lane.b32.xlu0 %v3392, 32
  %v3395 = vpop.permute.xlu0 %3394
  %v3397 = vmul.f32 %v3379, %v3395
  %3398 = vmatprep.subr.mxu0 0.0
  %3399 = vmatpush1.msra.mxu0 %v89
  %3400 = vmatprep.subr.mxu0 0.0
  %3401 = vmatpush1.msra.mxu0 %v90
  %3402 = vmatprep.subr.mxu0 0.0
  %3403 = vmatpush1.msra.mxu0 0.0
  %3404 = vmatprep.subr.mxu0 0.0
  %3405 = vmatpush1.msra.mxu0 0.0
  %3406 = vmatprep.subr.mxu0 0.0
  %3407 = vmatpush1.msra.mxu0 0.0
  %3408 = vmatprep.subr.mxu0 0.0
  %3409 = vmatpush1.msra.mxu0 0.0
  %3410 = vmatprep.subr.mxu0 0.0
  %3411 = vmatpush1.msra.mxu0 0.0
  %3412 = vmatprep.subr.mxu0 0.0
  %3413 = vmatpush1.msra.mxu0 0.0
  %3414 = vmatprep.subr.mxu0 0.0
  %3415 = vmatpush1.msra.mxu0 0.0
  %3416 = vmatprep.subr.mxu0 0.0
  %3417 = vmatpush1.msra.mxu0 0.0
  %3418 = vmatprep.subr.mxu0 0.0
  %3419 = vmatpush1.msra.mxu0 0.0
  %3420 = vmatprep.subr.mxu0 0.0
  %3421 = vmatpush1.msra.mxu0 0.0
  %3422 = vmatprep.subr.mxu0 0.0
  %3423 = vmatpush1.msra.mxu0 0.0
  %3424 = vmatprep.subr.mxu0 0.0
  %3425 = vmatpush1.msra.mxu0 0.0
  %3426 = vmatprep.subr.mxu0 0.0
  %3427 = vmatpush1.msra.mxu0 0.0
  %3428 = vmatprep.subr.mxu0 0.0
  %3429 = vmatpush1.msra.mxu0 0.0
  %3430 = vmatprep.subr.mxu0 0.0
  %3431 = vmatpush1.msra.mxu0 0.0
  %3432 = vmatprep.subr.mxu0 0.0
  %3433 = vmatpush1.msra.mxu0 0.0
  %3434 = vmatprep.subr.mxu0 0.0
  %3435 = vmatpush1.msra.mxu0 0.0
  %3436 = vmatprep.subr.mxu0 0.0
  %3437 = vmatpush1.msra.mxu0 0.0
  %3438 = vmatprep.subr.mxu0 0.0
  %3439 = vmatpush1.msra.mxu0 0.0
  %3440 = vmatprep.subr.mxu0 0.0
  %3441 = vmatpush1.msra.mxu0 0.0
  %3442 = vmatprep.subr.mxu0 0.0
  %3443 = vmatpush1.msra.mxu0 0.0
  %3444 = vmatprep.subr.mxu0 0.0
  %3445 = vmatpush1.msra.mxu0 0.0
  %3446 = vmatprep.subr.mxu0 0.0
  %3447 = vmatpush1.msra.mxu0 0.0
  %3448 = vmatprep.subr.mxu0 0.0
  %3449 = vmatpush1.msra.mxu0 0.0
  %3450 = vmatprep.subr.mxu0 0.0
  %3451 = vmatpush1.msra.mxu0 0.0
  %3452 = vmatprep.subr.mxu0 0.0
  %3453 = vmatpush1.msra.mxu0 0.0
  %3454 = vmatprep.subr.mxu0 0.0
  %3455 = vmatpush1.msra.mxu0 0.0
  %3456 = vmatprep.subr.mxu0 0.0
  %3457 = vmatpush1.msra.mxu0 0.0
  %3458 = vmatprep.subr.mxu0 0.0
  %3459 = vmatpush1.msra.mxu0 0.0
  %3460 = vmatprep.subr.mxu0 0.0
  %3461 = vmatpush1.msra.mxu0 0.0
  %3462 = vmatprep.mubr.f32.mxu0 0.0
  %3463 = vmatmul.mubr.f32.gmra.mrb[0].mxu0 %v2001
  %v3464 = vpop.f32.mrb[0].mxu0
  %v3465 = vadd.f32 %v2211, %v3464
  %v3466 = vpop.f32.mrb[0].mxu0
  %3467 = vdwg.mxu0
  %3469 = vrot.lane.b32.xlu0 %v3397, 80
  %v3470 = vpop.permute.xlu0 %3469
  %v3471 = vsel %vm1155, %v3470, 0
  %3473 = vmatprep.subr.mxu0 0.0
  %3474 = vmatpush1.msra.mxu0 %v91
  %3475 = vmatprep.subr.mxu0 0.0
  %3476 = vmatpush1.msra.mxu0 %v92
  %3477 = vmatprep.subr.mxu0 0.0
  %3478 = vmatpush1.msra.mxu0 0.0
  %3479 = vmatprep.subr.mxu0 0.0
  %3480 = vmatpush1.msra.mxu0 0.0
  %3481 = vmatprep.subr.mxu0 0.0
  %3482 = vmatpush1.msra.mxu0 0.0
  %3483 = vmatprep.subr.mxu0 0.0
  %3484 = vmatpush1.msra.mxu0 0.0
  %3485 = vmatprep.subr.mxu0 0.0
  %3486 = vmatpush1.msra.mxu0 0.0
  %3487 = vmatprep.subr.mxu0 0.0
  %3488 = vmatpush1.msra.mxu0 0.0
  %3489 = vmatprep.subr.mxu0 0.0
  %3490 = vmatpush1.msra.mxu0 0.0
  %3491 = vmatprep.subr.mxu0 0.0
  %3492 = vmatpush1.msra.mxu0 0.0
  %3493 = vmatprep.subr.mxu0 0.0
  %3494 = vmatpush1.msra.mxu0 0.0
  %3495 = vmatprep.subr.mxu0 0.0
  %3496 = vmatpush1.msra.mxu0 0.0
  %3497 = vmatprep.subr.mxu0 0.0
  %3498 = vmatpush1.msra.mxu0 0.0
  %3499 = vmatprep.subr.mxu0 0.0
  %3500 = vmatpush1.msra.mxu0 0.0
  %3501 = vmatprep.subr.mxu0 0.0
  %3502 = vmatpush1.msra.mxu0 0.0
  %3503 = vmatprep.subr.mxu0 0.0
  %3504 = vmatpush1.msra.mxu0 0.0
  %3505 = vmatprep.subr.mxu0 0.0
  %3506 = vmatpush1.msra.mxu0 0.0
  %3507 = vmatprep.subr.mxu0 0.0
  %3508 = vmatpush1.msra.mxu0 0.0
  %3509 = vmatprep.subr.mxu0 0.0
  %3510 = vmatpush1.msra.mxu0 0.0
  %3511 = vmatprep.subr.mxu0 0.0
  %3512 = vmatpush1.msra.mxu0 0.0
  %3513 = vmatprep.subr.mxu0 0.0
  %3514 = vmatpush1.msra.mxu0 0.0
  %3515 = vmatprep.subr.mxu0 0.0
  %3516 = vmatpush1.msra.mxu0 0.0
  %3517 = vmatprep.subr.mxu0 0.0
  %3518 = vmatpush1.msra.mxu0 0.0
  %3519 = vmatprep.subr.mxu0 0.0
  %3520 = vmatpush1.msra.mxu0 0.0
  %3521 = vmatprep.subr.mxu0 0.0
  %3522 = vmatpush1.msra.mxu0 0.0
  %3523 = vmatprep.subr.mxu0 0.0
  %3524 = vmatpush1.msra.mxu0 0.0
  %3525 = vmatprep.subr.mxu0 0.0
  %3526 = vmatpush1.msra.mxu0 0.0
  %3527 = vmatprep.subr.mxu0 0.0
  %3528 = vmatpush1.msra.mxu0 0.0
  %3529 = vmatprep.subr.mxu0 0.0
  %3530 = vmatpush1.msra.mxu0 0.0
  %3531 = vmatprep.subr.mxu0 0.0
  %3532 = vmatpush1.msra.mxu0 0.0
  %3533 = vmatprep.subr.mxu0 0.0
  %3534 = vmatpush1.msra.mxu0 0.0
  %3535 = vmatprep.subr.mxu0 0.0
  %3536 = vmatpush1.msra.mxu0 0.0
  %3537 = vmatprep.mubr.f32.mxu0 0.0
  %3538 = vmatmul.mubr.f32.gmra.mrb[0].mxu0 %v3471
  %v3539 = vpop.f32.mrb[0].mxu0
  %v3540 = vadd.f32 0.0, %v3539
  %v3541 = vpop.f32.mrb[0].mxu0
  %3542 = vdwg.mxu0
  %v3543 = vadd.f32 %v3465, %v3540
  %v3544 = vxor.u32 %v3543, 2147483648
  %v3545 = vmul.f32 %v3544, 1.442695
  %v3546 = vpow.pop %v3545
  %v3547 = vadd.f32 %v3546, 1.0
  %v3548 = vrcp.pop %v3547
  %v3549 = vmul.f32 1.0, %v3548
  %v3550 = vtanh.pop %v3543
  %v3551 = vmul.f32 %v3549, %v3391
  %3553 = vrot.lane.b32.xlu0 %v3550, 96
  %v3554 = vpop.permute.xlu0 %3553
  %v3556 = vmul.f32 %v3549, %v3554
  %3558 = vrot.lane.b32.xlu0 %v3556, 16
  %v3559 = vpop.permute.xlu0 %3558
  %v3561 = vadd.f32 %v3551, %v3559
  %v3562 = vtanh.pop %v3561
  %3564 = vrot.lane.b32.xlu0 %v3562, 32
  %v3565 = vpop.permute.xlu0 %3564
  %v3567 = vmul.f32 %v3549, %v3565
  %3568 = vmatprep.subr.mxu0 0.0
  %3569 = vmatpush1.msra.mxu0 %v89
  %3570 = vmatprep.subr.mxu0 0.0
  %3571 = vmatpush1.msra.mxu0 %v90
  %3572 = vmatprep.subr.mxu0 0.0
  %3573 = vmatpush1.msra.mxu0 0.0
  %3574 = vmatprep.subr.mxu0 0.0
  %3575 = vmatpush1.msra.mxu0 0.0
  %3576 = vmatprep.subr.mxu0 0.0
  %3577 = vmatpush1.msra.mxu0 0.0
  %3578 = vmatprep.subr.mxu0 0.0
  %3579 = vmatpush1.msra.mxu0 0.0
  %3580 = vmatprep.subr.mxu0 0.0
  %3581 = vmatpush1.msra.mxu0 0.0
  %3582 = vmatprep.subr.mxu0 0.0
  %3583 = vmatpush1.msra.mxu0 0.0
  %3584 = vmatprep.subr.mxu0 0.0
  %3585 = vmatpush1.msra.mxu0 0.0
  %3586 = vmatprep.subr.mxu0 0.0
  %3587 = vmatpush1.msra.mxu0 0.0
  %3588 = vmatprep.subr.mxu0 0.0
  %3589 = vmatpush1.msra.mxu0 0.0
  %3590 = vmatprep.subr.mxu0 0.0
  %3591 = vmatpush1.msra.mxu0 0.0
  %3592 = vmatprep.subr.mxu0 0.0
  %3593 = vmatpush1.msra.mxu0 0.0
  %3594 = vmatprep.subr.mxu0 0.0
  %3595 = vmatpush1.msra.mxu0 0.0
  %3596 = vmatprep.subr.mxu0 0.0
  %3597 = vmatpush1.msra.mxu0 0.0
  %3598 = vmatprep.subr.mxu0 0.0
  %3599 = vmatpush1.msra.mxu0 0.0
  %3600 = vmatprep.subr.mxu0 0.0
  %3601 = vmatpush1.msra.mxu0 0.0
  %3602 = vmatprep.subr.mxu0 0.0
  %3603 = vmatpush1.msra.mxu0 0.0
  %3604 = vmatprep.subr.mxu0 0.0
  %3605 = vmatpush1.msra.mxu0 0.0
  %3606 = vmatprep.subr.mxu0 0.0
  %3607 = vmatpush1.msra.mxu0 0.0
  %3608 = vmatprep.subr.mxu0 0.0
  %3609 = vmatpush1.msra.mxu0 0.0
  %3610 = vmatprep.subr.mxu0 0.0
  %3611 = vmatpush1.msra.mxu0 0.0
  %3612 = vmatprep.subr.mxu0 0.0
  %3613 = vmatpush1.msra.mxu0 0.0
  %3614 = vmatprep.subr.mxu0 0.0
  %3615 = vmatpush1.msra.mxu0 0.0
  %3616 = vmatprep.subr.mxu0 0.0
  %3617 = vmatpush1.msra.mxu0 0.0
  %3618 = vmatprep.subr.mxu0 0.0
  %3619 = vmatpush1.msra.mxu0 0.0
  %3620 = vmatprep.subr.mxu0 0.0
  %3621 = vmatpush1.msra.mxu0 0.0
  %3622 = vmatprep.subr.mxu0 0.0
  %3623 = vmatpush1.msra.mxu0 0.0
  %3624 = vmatprep.subr.mxu0 0.0
  %3625 = vmatpush1.msra.mxu0 0.0
  %3626 = vmatprep.subr.mxu0 0.0
  %3627 = vmatpush1.msra.mxu0 0.0
  %3628 = vmatprep.subr.mxu0 0.0
  %3629 = vmatpush1.msra.mxu0 0.0
  %3630 = vmatprep.subr.mxu0 0.0
  %3631 = vmatpush1.msra.mxu0 0.0
  %3632 = vmatprep.mubr.f32.mxu0 0.0
  %3633 = vmatmul.mubr.f32.gmra.mrb[0].mxu0 %v2104
  %v3634 = vpop.f32.mrb[0].mxu0
  %v3635 = vadd.f32 %v2211, %v3634
  %v3636 = vpop.f32.mrb[0].mxu0
  %3637 = vdwg.mxu0
  %3639 = vrot.lane.b32.xlu0 %v3567, 80
  %v3640 = vpop.permute.xlu0 %3639
  %v3641 = vsel %vm1155, %v3640, 0
  %3643 = vmatprep.subr.mxu0 0.0
  %3644 = vmatpush1.msra.mxu0 %v91
  %3645 = vmatprep.subr.mxu0 0.0
  %3646 = vmatpush1.msra.mxu0 %v92
  %3647 = vmatprep.subr.mxu0 0.0
  %3648 = vmatpush1.msra.mxu0 0.0
  %3649 = vmatprep.subr.mxu0 0.0
  %3650 = vmatpush1.msra.mxu0 0.0
  %3651 = vmatprep.subr.mxu0 0.0
  %3652 = vmatpush1.msra.mxu0 0.0
  %3653 = vmatprep.subr.mxu0 0.0
  %3654 = vmatpush1.msra.mxu0 0.0
  %3655 = vmatprep.subr.mxu0 0.0
  %3656 = vmatpush1.msra.mxu0 0.0
  %3657 = vmatprep.subr.mxu0 0.0
  %3658 = vmatpush1.msra.mxu0 0.0
  %3659 = vmatprep.subr.mxu0 0.0
  %3660 = vmatpush1.msra.mxu0 0.0
  %3661 = vmatprep.subr.mxu0 0.0
  %3662 = vmatpush1.msra.mxu0 0.0
  %3663 = vmatprep.subr.mxu0 0.0
  %3664 = vmatpush1.msra.mxu0 0.0
  %3665 = vmatprep.subr.mxu0 0.0
  %3666 = vmatpush1.msra.mxu0 0.0
  %3667 = vmatprep.subr.mxu0 0.0
  %3668 = vmatpush1.msra.mxu0 0.0
  %3669 = vmatprep.subr.mxu0 0.0
  %3670 = vmatpush1.msra.mxu0 0.0
  %3671 = vmatprep.subr.mxu0 0.0
  %3672 = vmatpush1.msra.mxu0 0.0
  %3673 = vmatprep.subr.mxu0 0.0
  %3674 = vmatpush1.msra.mxu0 0.0
  %3675 = vmatprep.subr.mxu0 0.0
  %3676 = vmatpush1.msra.mxu0 0.0
  %3677 = vmatprep.subr.mxu0 0.0
  %3678 = vmatpush1.msra.mxu0 0.0
  %3679 = vmatprep.subr.mxu0 0.0
  %3680 = vmatpush1.msra.mxu0 0.0
  %3681 = vmatprep.subr.mxu0 0.0
  %3682 = vmatpush1.msra.mxu0 0.0
  %3683 = vmatprep.subr.mxu0 0.0
  %3684 = vmatpush1.msra.mxu0 0.0
  %3685 = vmatprep.subr.mxu0 0.0
  %3686 = vmatpush1.msra.mxu0 0.0
  %3687 = vmatprep.subr.mxu0 0.0
  %3688 = vmatpush1.msra.mxu0 0.0
  %3689 = vmatprep.subr.mxu0 0.0
  %3690 = vmatpush1.msra.mxu0 0.0
  %3691 = vmatprep.subr.mxu0 0.0
  %3692 = vmatpush1.msra.mxu0 0.0
  %3693 = vmatprep.subr.mxu0 0.0
  %3694 = vmatpush1.msra.mxu0 0.0
  %3695 = vmatprep.subr.mxu0 0.0
  %3696 = vmatpush1.msra.mxu0 0.0
  %3697 = vmatprep.subr.mxu0 0.0
  %3698 = vmatpush1.msra.mxu0 0.0
  %3699 = vmatprep.subr.mxu0 0.0
  %3700 = vmatpush1.msra.mxu0 0.0
  %3701 = vmatprep.subr.mxu0 0.0
  %3702 = vmatpush1.msra.mxu0 0.0
  %3703 = vmatprep.subr.mxu0 0.0
  %3704 = vmatpush1.msra.mxu0 0.0
  %3705 = vmatprep.subr.mxu0 0.0
  %3706 = vmatpush1.msra.mxu0 0.0
  %3707 = vmatprep.mubr.f32.mxu0 0.0
  %3708 = vmatmul.mubr.f32.gmra.mrb[0].mxu0 %v3641
  %v3709 = vpop.f32.mrb[0].mxu0
  %v3710 = vadd.f32 0.0, %v3709
  %v3711 = vpop.f32.mrb[0].mxu0
  %3712 = vdwg.mxu0
  %v3713 = vadd.f32 %v3635, %v3710
  %v3714 = vxor.u32 %v3713, 2147483648
  %v3715 = vmul.f32 %v3714, 1.442695
  %v3716 = vpow.pop %v3715
  %v3717 = vadd.f32 %v3716, 1.0
  %v3718 = vrcp.pop %v3717
  %v3719 = vmul.f32 1.0, %v3718
  %v3720 = vtanh.pop %v3713
  %v3721 = vmul.f32 %v3719, %v3561
  %3723 = vrot.lane.b32.xlu0 %v3720, 96
  %v3724 = vpop.permute.xlu0 %3723
  %v3726 = vmul.f32 %v3719, %v3724
  %3728 = vrot.lane.b32.xlu0 %v3726, 16
  %v3729 = vpop.permute.xlu0 %3728
  %v3731 = vadd.f32 %v3721, %v3729
  %v3732 = vtanh.pop %v3731
  %3734 = vrot.lane.b32.xlu0 %v3732, 32
  %v3735 = vpop.permute.xlu0 %3734
  %v3737 = vmul.f32 %v3719, %v3735
  %v3739 = vrot.slane %v2206, 2
  %3740 = vrot.lane.b32.xlu0 %v3739, 80
  %v3741 = vpop.permute.xlu0 %3740
  %v3742 = vsel %vm1155, %v3741, 0
  %3744 = vmatprep.subr.mxu0 0.0
  %3745 = vmatpush1.msra.mxu0 %v89
  %3746 = vmatprep.subr.mxu0 0.0
  %3747 = vmatpush1.msra.mxu0 %v90
  %3748 = vmatprep.subr.mxu0 0.0
  %3749 = vmatpush1.msra.mxu0 0.0
  %3750 = vmatprep.subr.mxu0 0.0
  %3751 = vmatpush1.msra.mxu0 0.0
  %3752 = vmatprep.subr.mxu0 0.0
  %3753 = vmatpush1.msra.mxu0 0.0
  %3754 = vmatprep.subr.mxu0 0.0
  %3755 = vmatpush1.msra.mxu0 0.0
  %3756 = vmatprep.subr.mxu0 0.0
  %3757 = vmatpush1.msra.mxu0 0.0
  %3758 = vmatprep.subr.mxu0 0.0
  %3759 = vmatpush1.msra.mxu0 0.0
  %3760 = vmatprep.subr.mxu0 0.0
  %3761 = vmatpush1.msra.mxu0 0.0
  %3762 = vmatprep.subr.mxu0 0.0
  %3763 = vmatpush1.msra.mxu0 0.0
  %3764 = vmatprep.subr.mxu0 0.0
  %3765 = vmatpush1.msra.mxu0 0.0
  %3766 = vmatprep.subr.mxu0 0.0
  %3767 = vmatpush1.msra.mxu0 0.0
  %3768 = vmatprep.subr.mxu0 0.0
  %3769 = vmatpush1.msra.mxu0 0.0
  %3770 = vmatprep.subr.mxu0 0.0
  %3771 = vmatpush1.msra.mxu0 0.0
  %3772 = vmatprep.subr.mxu0 0.0
  %3773 = vmatpush1.msra.mxu0 0.0
  %3774 = vmatprep.subr.mxu0 0.0
  %3775 = vmatpush1.msra.mxu0 0.0
  %3776 = vmatprep.subr.mxu0 0.0
  %3777 = vmatpush1.msra.mxu0 0.0
  %3778 = vmatprep.subr.mxu0 0.0
  %3779 = vmatpush1.msra.mxu0 0.0
  %3780 = vmatprep.subr.mxu0 0.0
  %3781 = vmatpush1.msra.mxu0 0.0
  %3782 = vmatprep.subr.mxu0 0.0
  %3783 = vmatpush1.msra.mxu0 0.0
  %3784 = vmatprep.subr.mxu0 0.0
  %3785 = vmatpush1.msra.mxu0 0.0
  %3786 = vmatprep.subr.mxu0 0.0
  %3787 = vmatpush1.msra.mxu0 0.0
  %3788 = vmatprep.subr.mxu0 0.0
  %3789 = vmatpush1.msra.mxu0 0.0
  %3790 = vmatprep.subr.mxu0 0.0
  %3791 = vmatpush1.msra.mxu0 0.0
  %3792 = vmatprep.subr.mxu0 0.0
  %3793 = vmatpush1.msra.mxu0 0.0
  %3794 = vmatprep.subr.mxu0 0.0
  %3795 = vmatpush1.msra.mxu0 0.0
  %3796 = vmatprep.subr.mxu0 0.0
  %3797 = vmatpush1.msra.mxu0 0.0
  %3798 = vmatprep.subr.mxu0 0.0
  %3799 = vmatpush1.msra.mxu0 0.0
  %3800 = vmatprep.subr.mxu0 0.0
  %3801 = vmatpush1.msra.mxu0 0.0
  %3802 = vmatprep.subr.mxu0 0.0
  %3803 = vmatpush1.msra.mxu0 0.0
  %3804 = vmatprep.subr.mxu0 0.0
  %3805 = vmatpush1.msra.mxu0 0.0
  %3806 = vmatprep.subr.mxu0 0.0
  %3807 = vmatpush1.msra.mxu0 0.0
  %3808 = vmatprep.mubr.f32.mxu0 0.0
  %3809 = vmatmul.mubr.f32.gmra.mrb[0].mxu0 %v3742
  %v3810 = vpop.f32.mrb[0].mxu0
  %v3811 = vadd.f32 %v2211, %v3810
  %v3812 = vpop.f32.mrb[0].mxu0
  %3813 = vdwg.mxu0
  %3815 = vrot.lane.b32.xlu0 %v3737, 80
  %v3816 = vpop.permute.xlu0 %3815
  %v3817 = vsel %vm1155, %v3816, 0
  %3819 = vmatprep.subr.mxu0 0.0
  %3820 = vmatpush1.msra.mxu0 %v91
  %3821 = vmatprep.subr.mxu0 0.0
  %3822 = vmatpush1.msra.mxu0 %v92
  %3823 = vmatprep.subr.mxu0 0.0
  %3824 = vmatpush1.msra.mxu0 0.0
  %3825 = vmatprep.subr.mxu0 0.0
  %3826 = vmatpush1.msra.mxu0 0.0
  %3827 = vmatprep.subr.mxu0 0.0
  %3828 = vmatpush1.msra.mxu0 0.0
  %3829 = vmatprep.subr.mxu0 0.0
  %3830 = vmatpush1.msra.mxu0 0.0
  %3831 = vmatprep.subr.mxu0 0.0
  %3832 = vmatpush1.msra.mxu0 0.0
  %3833 = vmatprep.subr.mxu0 0.0
  %3834 = vmatpush1.msra.mxu0 0.0
  %3835 = vmatprep.subr.mxu0 0.0
  %3836 = vmatpush1.msra.mxu0 0.0
  %3837 = vmatprep.subr.mxu0 0.0
  %3838 = vmatpush1.msra.mxu0 0.0
  %3839 = vmatprep.subr.mxu0 0.0
  %3840 = vmatpush1.msra.mxu0 0.0
  %3841 = vmatprep.subr.mxu0 0.0
  %3842 = vmatpush1.msra.mxu0 0.0
  %3843 = vmatprep.subr.mxu0 0.0
  %3844 = vmatpush1.msra.mxu0 0.0
  %3845 = vmatprep.subr.mxu0 0.0
  %3846 = vmatpush1.msra.mxu0 0.0
  %3847 = vmatprep.subr.mxu0 0.0
  %3848 = vmatpush1.msra.mxu0 0.0
  %3849 = vmatprep.subr.mxu0 0.0
  %3850 = vmatpush1.msra.mxu0 0.0
  %3851 = vmatprep.subr.mxu0 0.0
  %3852 = vmatpush1.msra.mxu0 0.0
  %3853 = vmatprep.subr.mxu0 0.0
  %3854 = vmatpush1.msra.mxu0 0.0
  %3855 = vmatprep.subr.mxu0 0.0
  %3856 = vmatpush1.msra.mxu0 0.0
  %3857 = vmatprep.subr.mxu0 0.0
  %3858 = vmatpush1.msra.mxu0 0.0
  %3859 = vmatprep.subr.mxu0 0.0
  %3860 = vmatpush1.msra.mxu0 0.0
  %3861 = vmatprep.subr.mxu0 0.0
  %3862 = vmatpush1.msra.mxu0 0.0
  %3863 = vmatprep.subr.mxu0 0.0
  %3864 = vmatpush1.msra.mxu0 0.0
  %3865 = vmatprep.subr.mxu0 0.0
  %3866 = vmatpush1.msra.mxu0 0.0
  %3867 = vmatprep.subr.mxu0 0.0
  %3868 = vmatpush1.msra.mxu0 0.0
  %3869 = vmatprep.subr.mxu0 0.0
  %3870 = vmatpush1.msra.mxu0 0.0
  %3871 = vmatprep.subr.mxu0 0.0
  %3872 = vmatpush1.msra.mxu0 0.0
  %3873 = vmatprep.subr.mxu0 0.0
  %3874 = vmatpush1.msra.mxu0 0.0
  %3875 = vmatprep.subr.mxu0 0.0
  %3876 = vmatpush1.msra.mxu0 0.0
  %3877 = vmatprep.subr.mxu0 0.0
  %3878 = vmatpush1.msra.mxu0 0.0
  %3879 = vmatprep.subr.mxu0 0.0
  %3880 = vmatpush1.msra.mxu0 0.0
  %3881 = vmatprep.subr.mxu0 0.0
  %3882 = vmatpush1.msra.mxu0 0.0
  %3883 = vmatprep.mubr.f32.mxu0 0.0
  %3884 = vmatmul.mubr.f32.gmra.mrb[0].mxu0 %v3817
  %v3885 = vpop.f32.mrb[0].mxu0
  %v3886 = vadd.f32 0.0, %v3885
  %v3887 = vpop.f32.mrb[0].mxu0
  %3888 = vdwg.mxu0
  %v3889 = vadd.f32 %v3811, %v3886
  %v3890 = vxor.u32 %v3889, 2147483648
  %v3891 = vmul.f32 %v3890, 1.442695
  %v3892 = vpow.pop %v3891
  %v3893 = vadd.f32 %v3892, 1.0
  %v3894 = vrcp.pop %v3893
  %v3895 = vmul.f32 1.0, %v3894
  %v3896 = vtanh.pop %v3889
  %v3897 = vmul.f32 %v3895, %v3731
  %3899 = vrot.lane.b32.xlu0 %v3896, 96
  %v3900 = vpop.permute.xlu0 %3899
  %v3902 = vmul.f32 %v3895, %v3900
  %3904 = vrot.lane.b32.xlu0 %v3902, 16
  %v3905 = vpop.permute.xlu0 %3904
  %v3907 = vadd.f32 %v3897, %v3905
  %v3908 = vtanh.pop %v3907
  %3910 = vrot.lane.b32.xlu0 %v3908, 32
  %v3911 = vpop.permute.xlu0 %3910
  %v3913 = vmul.f32 %v3895, %v3911
  %v3915 = vlaneseq
  %v3916 = vshrl.u32 %v3915, 7
  %v3917 = vsub.s32 0, %v3916
  %v3918 = vrot.slane %v96, %v3917
  %vm3920 = vcmask 97280
  %v3922 = vsel %vm3920, %v78, 0
  %v3925 = vsel %vm133, %v95, 0
  %3927 = vmatprep.subr.mxu0 0.0
  %3928 = vmatpush1.msra.mxu0 %v94
  %3929 = vmatprep.subr.mxu0 0.0
  %3930 = vmatpush1.msra.mxu0 %v3925
  %3931 = vmatprep.subr.mxu0 0.0
  %3932 = vmatpush1.msra.mxu0 0.0
  %3933 = vmatprep.subr.mxu0 0.0
  %3934 = vmatpush1.msra.mxu0 0.0
  %3935 = vmatprep.subr.mxu0 0.0
  %3936 = vmatpush1.msra.mxu0 0.0
  %3937 = vmatprep.subr.mxu0 0.0
  %3938 = vmatpush1.msra.mxu0 0.0
  %3939 = vmatprep.subr.mxu0 0.0
  %3940 = vmatpush1.msra.mxu0 0.0
  %3941 = vmatprep.subr.mxu0 0.0
  %3942 = vmatpush1.msra.mxu0 0.0
  %3943 = vmatprep.subr.mxu0 0.0
  %3944 = vmatpush1.msra.mxu0 0.0
  %3945 = vmatprep.subr.mxu0 0.0
  %3946 = vmatpush1.msra.mxu0 0.0
  %3947 = vmatprep.subr.mxu0 0.0
  %3948 = vmatpush1.msra.mxu0 0.0
  %3949 = vmatprep.subr.mxu0 0.0
  %3950 = vmatpush1.msra.mxu0 0.0
  %3951 = vmatprep.subr.mxu0 0.0
  %3952 = vmatpush1.msra.mxu0 0.0
  %3953 = vmatprep.subr.mxu0 0.0
  %3954 = vmatpush1.msra.mxu0 0.0
  %3955 = vmatprep.subr.mxu0 0.0
  %3956 = vmatpush1.msra.mxu0 0.0
  %3957 = vmatprep.subr.mxu0 0.0
  %3958 = vmatpush1.msra.mxu0 0.0
  %3959 = vmatprep.subr.mxu0 0.0
  %3960 = vmatpush1.msra.mxu0 0.0
  %3961 = vmatprep.subr.mxu0 0.0
  %3962 = vmatpush1.msra.mxu0 0.0
  %3963 = vmatprep.subr.mxu0 0.0
  %3964 = vmatpush1.msra.mxu0 0.0
  %3965 = vmatprep.subr.mxu0 0.0
  %3966 = vmatpush1.msra.mxu0 0.0
  %3967 = vmatprep.subr.mxu0 0.0
  %3968 = vmatpush1.msra.mxu0 0.0
  %3969 = vmatprep.subr.mxu0 0.0
  %3970 = vmatpush1.msra.mxu0 0.0
  %3971 = vmatprep.subr.mxu0 0.0
  %3972 = vmatpush1.msra.mxu0 0.0
  %3973 = vmatprep.subr.mxu0 0.0
  %3974 = vmatpush1.msra.mxu0 0.0
  %3975 = vmatprep.subr.mxu0 0.0
  %3976 = vmatpush1.msra.mxu0 0.0
  %3977 = vmatprep.subr.mxu0 0.0
  %3978 = vmatpush1.msra.mxu0 0.0
  %3979 = vmatprep.subr.mxu0 0.0
  %3980 = vmatpush1.msra.mxu0 0.0
  %3981 = vmatprep.subr.mxu0 0.0
  %3982 = vmatpush1.msra.mxu0 0.0
  %3983 = vmatprep.subr.mxu0 0.0
  %3984 = vmatpush1.msra.mxu0 0.0
  %3985 = vmatprep.subr.mxu0 0.0
  %3986 = vmatpush1.msra.mxu0 0.0
  %3987 = vmatprep.subr.mxu0 0.0
  %3988 = vmatpush1.msra.mxu0 0.0
  %3989 = vmatprep.subr.mxu0 0.0
  %3990 = vmatpush1.msra.mxu0 0.0
  %3991 = vmatprep.mubr.f32.mxu0 0.0
  %3992 = vmatmul.mubr.f32.gmra.mrb[0].mxu0 %v3922
  %v3993 = vpop.f32.mrb[0].mxu0
  %v3994 = vadd.f32 %v3918, %v3993
  %v3995 = vpop.f32.mrb[0].mxu0
  %3996 = vdwg.mxu0
  %v3997 = vmax.f32 %v3994, 0.0
  %v3999 = vlaneseq
  %v4000 = vshrl.u32 %v3999, 7
  %v4001 = vsub.s32 0, %v4000
  %v4002 = vrot.slane %v101, %v4001
  %v4005 = vsel %vm212, %v3997, 0
  %4007 = vmatprep.subr.mxu0 0.0
  %4008 = vmatpush1.msra.mxu0 %v97
  %4009 = vmatprep.subr.mxu0 0.0
  %4010 = vmatpush1.msra.mxu0 %v98
  %4011 = vmatprep.subr.mxu0 0.0
  %4012 = vmatpush1.msra.mxu0 %v99
  %4013 = vmatprep.subr.mxu0 0.0
  %4014 = vmatpush1.msra.mxu0 %v100
  %4015 = vmatprep.subr.mxu0 0.0
  %4016 = vmatpush1.msra.mxu0 0.0
  %4017 = vmatprep.subr.mxu0 0.0
  %4018 = vmatpush1.msra.mxu0 0.0
  %4019 = vmatprep.subr.mxu0 0.0
  %4020 = vmatpush1.msra.mxu0 0.0
  %4021 = vmatprep.subr.mxu0 0.0
  %4022 = vmatpush1.msra.mxu0 0.0
  %4023 = vmatprep.subr.mxu0 0.0
  %4024 = vmatpush1.msra.mxu0 0.0
  %4025 = vmatprep.subr.mxu0 0.0
  %4026 = vmatpush1.msra.mxu0 0.0
  %4027 = vmatprep.subr.mxu0 0.0
  %4028 = vmatpush1.msra.mxu0 0.0
  %4029 = vmatprep.subr.mxu0 0.0
  %4030 = vmatpush1.msra.mxu0 0.0
  %4031 = vmatprep.subr.mxu0 0.0
  %4032 = vmatpush1.msra.mxu0 0.0
  %4033 = vmatprep.subr.mxu0 0.0
  %4034 = vmatpush1.msra.mxu0 0.0
  %4035 = vmatprep.subr.mxu0 0.0
  %4036 = vmatpush1.msra.mxu0 0.0
  %4037 = vmatprep.subr.mxu0 0.0
  %4038 = vmatpush1.msra.mxu0 0.0
  %4039 = vmatprep.subr.mxu0 0.0
  %4040 = vmatpush1.msra.mxu0 0.0
  %4041 = vmatprep.subr.mxu0 0.0
  %4042 = vmatpush1.msra.mxu0 0.0
  %4043 = vmatprep.subr.mxu0 0.0
  %4044 = vmatpush1.msra.mxu0 0.0
  %4045 = vmatprep.subr.mxu0 0.0
  %4046 = vmatpush1.msra.mxu0 0.0
  %4047 = vmatprep.subr.mxu0 0.0
  %4048 = vmatpush1.msra.mxu0 0.0
  %4049 = vmatprep.subr.mxu0 0.0
  %4050 = vmatpush1.msra.mxu0 0.0
  %4051 = vmatprep.subr.mxu0 0.0
  %4052 = vmatpush1.msra.mxu0 0.0
  %4053 = vmatprep.subr.mxu0 0.0
  %4054 = vmatpush1.msra.mxu0 0.0
  %4055 = vmatprep.subr.mxu0 0.0
  %4056 = vmatpush1.msra.mxu0 0.0
  %4057 = vmatprep.subr.mxu0 0.0
  %4058 = vmatpush1.msra.mxu0 0.0
  %4059 = vmatprep.subr.mxu0 0.0
  %4060 = vmatpush1.msra.mxu0 0.0
  %4061 = vmatprep.subr.mxu0 0.0
  %4062 = vmatpush1.msra.mxu0 0.0
  %4063 = vmatprep.subr.mxu0 0.0
  %4064 = vmatpush1.msra.mxu0 0.0
  %4065 = vmatprep.subr.mxu0 0.0
  %4066 = vmatpush1.msra.mxu0 0.0
  %4067 = vmatprep.subr.mxu0 0.0
  %4068 = vmatpush1.msra.mxu0 0.0
  %4069 = vmatprep.subr.mxu0 0.0
  %4070 = vmatpush1.msra.mxu0 0.0
  %4071 = vmatprep.mubr.f32.mxu0 0.0
  %4072 = vmatmul.mubr.f32.gmra.mrb[0].mxu0 %v4005
  %v4073 = vpop.f32.mrb[0].mxu0
  %v4074 = vadd.f32 %v4002, %v4073
  %v4075 = vpop.f32.mrb[0].mxu0
  %4076 = vdwg.mxu0
  %v4077 = vmax.f32 %v4074, 0.0
  %4079 = vrot.lane.b32.xlu0 %v3913, 80
  %v4080 = vpop.permute.xlu0 %4079
  %v4081 = vsel %vm1155, %v4080, 0
  %4083 = vmatprep.subr.mxu0 0.0
  %4084 = vmatpush1.msra.mxu0 %v106
  %4085 = vmatprep.subr.mxu0 0.0
  %4086 = vmatpush1.msra.mxu0 %v107
  %4087 = vmatprep.subr.mxu0 0.0
  %4088 = vmatpush1.msra.mxu0 0.0
  %4089 = vmatprep.subr.mxu0 0.0
  %4090 = vmatpush1.msra.mxu0 0.0
  %4091 = vmatprep.subr.mxu0 0.0
  %4092 = vmatpush1.msra.mxu0 0.0
  %4093 = vmatprep.subr.mxu0 0.0
  %4094 = vmatpush1.msra.mxu0 0.0
  %4095 = vmatprep.subr.mxu0 0.0
  %4096 = vmatpush1.msra.mxu0 0.0
  %4097 = vmatprep.subr.mxu0 0.0
  %4098 = vmatpush1.msra.mxu0 0.0
  %4099 = vmatprep.subr.mxu0 0.0
  %4100 = vmatpush1.msra.mxu0 0.0
  %4101 = vmatprep.subr.mxu0 0.0
  %4102 = vmatpush1.msra.mxu0 0.0
  %4103 = vmatprep.subr.mxu0 0.0
  %4104 = vmatpush1.msra.mxu0 0.0
  %4105 = vmatprep.subr.mxu0 0.0
  %4106 = vmatpush1.msra.mxu0 0.0
  %4107 = vmatprep.subr.mxu0 0.0
  %4108 = vmatpush1.msra.mxu0 0.0
  %4109 = vmatprep.subr.mxu0 0.0
  %4110 = vmatpush1.msra.mxu0 0.0
  %4111 = vmatprep.subr.mxu0 0.0
  %4112 = vmatpush1.msra.mxu0 0.0
  %4113 = vmatprep.subr.mxu0 0.0
  %4114 = vmatpush1.msra.mxu0 0.0
  %4115 = vmatprep.subr.mxu0 0.0
  %4116 = vmatpush1.msra.mxu0 0.0
  %4117 = vmatprep.subr.mxu0 0.0
  %4118 = vmatpush1.msra.mxu0 0.0
  %4119 = vmatprep.subr.mxu0 0.0
  %4120 = vmatpush1.msra.mxu0 0.0
  %4121 = vmatprep.subr.mxu0 0.0
  %4122 = vmatpush1.msra.mxu0 0.0
  %4123 = vmatprep.subr.mxu0 0.0
  %4124 = vmatpush1.msra.mxu0 0.0
  %4125 = vmatprep.subr.mxu0 0.0
  %4126 = vmatpush1.msra.mxu0 0.0
  %4127 = vmatprep.subr.mxu0 0.0
  %4128 = vmatpush1.msra.mxu0 0.0
  %4129 = vmatprep.subr.mxu0 0.0
  %4130 = vmatpush1.msra.mxu0 0.0
  %4131 = vmatprep.subr.mxu0 0.0
  %4132 = vmatpush1.msra.mxu0 0.0
  %4133 = vmatprep.subr.mxu0 0.0
  %4134 = vmatpush1.msra.mxu0 0.0
  %4135 = vmatprep.subr.mxu0 0.0
  %4136 = vmatpush1.msra.mxu0 0.0
  %4137 = vmatprep.subr.mxu0 0.0
  %4138 = vmatpush1.msra.mxu0 0.0
  %4139 = vmatprep.subr.mxu0 0.0
  %4140 = vmatpush1.msra.mxu0 0.0
  %4141 = vmatprep.subr.mxu0 0.0
  %4142 = vmatpush1.msra.mxu0 0.0
  %4143 = vmatprep.subr.mxu0 0.0
  %4144 = vmatpush1.msra.mxu0 0.0
  %4145 = vmatprep.subr.mxu0 0.0
  %4146 = vmatpush1.msra.mxu0 0.0
  %4147 = vmatprep.mubr.f32.mxu0 0.0
  %4148 = vmatmul.mubr.f32.gmra.mrb[0].mxu0 %v4081
  %v4149 = vpop.f32.mrb[0].mxu0
  %v4150 = vadd.f32 0.0, %v4149
  %v4151 = vpop.f32.mrb[0].mxu0
  %4152 = vdwg.mxu0
  %v4154 = vrot.slane %v1054, 6
  %4155 = vrot.lane.b32.xlu0 %v4154, 32
  %v4156 = vpop.permute.xlu0 %4155
  %v4157 = vsel %vm212, %v4156, 0
  %4159 = vmatprep.subr.mxu0 0.0
  %4160 = vmatpush1.msra.mxu0 %v102
  %4161 = vmatprep.subr.mxu0 0.0
  %4162 = vmatpush1.msra.mxu0 %v103
  %4163 = vmatprep.subr.mxu0 0.0
  %4164 = vmatpush1.msra.mxu0 %v104
  %4165 = vmatprep.subr.mxu0 0.0
  %4166 = vmatpush1.msra.mxu0 %v105
  %4167 = vmatprep.subr.mxu0 0.0
  %4168 = vmatpush1.msra.mxu0 0.0
  %4169 = vmatprep.subr.mxu0 0.0
  %4170 = vmatpush1.msra.mxu0 0.0
  %4171 = vmatprep.subr.mxu0 0.0
  %4172 = vmatpush1.msra.mxu0 0.0
  %4173 = vmatprep.subr.mxu0 0.0
  %4174 = vmatpush1.msra.mxu0 0.0
  %4175 = vmatprep.subr.mxu0 0.0
  %4176 = vmatpush1.msra.mxu0 0.0
  %4177 = vmatprep.subr.mxu0 0.0
  %4178 = vmatpush1.msra.mxu0 0.0
  %4179 = vmatprep.subr.mxu0 0.0
  %4180 = vmatpush1.msra.mxu0 0.0
  %4181 = vmatprep.subr.mxu0 0.0
  %4182 = vmatpush1.msra.mxu0 0.0
  %4183 = vmatprep.subr.mxu0 0.0
  %4184 = vmatpush1.msra.mxu0 0.0
  %4185 = vmatprep.subr.mxu0 0.0
  %4186 = vmatpush1.msra.mxu0 0.0
  %4187 = vmatprep.subr.mxu0 0.0
  %4188 = vmatpush1.msra.mxu0 0.0
  %4189 = vmatprep.subr.mxu0 0.0
  %4190 = vmatpush1.msra.mxu0 0.0
  %4191 = vmatprep.subr.mxu0 0.0
  %4192 = vmatpush1.msra.mxu0 0.0
  %4193 = vmatprep.subr.mxu0 0.0
  %4194 = vmatpush1.msra.mxu0 0.0
  %4195 = vmatprep.subr.mxu0 0.0
  %4196 = vmatpush1.msra.mxu0 0.0
  %4197 = vmatprep.subr.mxu0 0.0
  %4198 = vmatpush1.msra.mxu0 0.0
  %4199 = vmatprep.subr.mxu0 0.0
  %4200 = vmatpush1.msra.mxu0 0.0
  %4201 = vmatprep.subr.mxu0 0.0
  %4202 = vmatpush1.msra.mxu0 0.0
  %4203 = vmatprep.subr.mxu0 0.0
  %4204 = vmatpush1.msra.mxu0 0.0
  %4205 = vmatprep.subr.mxu0 0.0
  %4206 = vmatpush1.msra.mxu0 0.0
  %4207 = vmatprep.subr.mxu0 0.0
  %4208 = vmatpush1.msra.mxu0 0.0
  %4209 = vmatprep.subr.mxu0 0.0
  %4210 = vmatpush1.msra.mxu0 0.0
  %4211 = vmatprep.subr.mxu0 0.0
  %4212 = vmatpush1.msra.mxu0 0.0
  %4213 = vmatprep.subr.mxu0 0.0
  %4214 = vmatpush1.msra.mxu0 0.0
  %4215 = vmatprep.subr.mxu0 0.0
  %4216 = vmatpush1.msra.mxu0 0.0
  %4217 = vmatprep.subr.mxu0 0.0
  %4218 = vmatpush1.msra.mxu0 0.0
  %4219 = vmatprep.subr.mxu0 0.0
  %4220 = vmatpush1.msra.mxu0 0.0
  %4221 = vmatprep.subr.mxu0 0.0
  %4222 = vmatpush1.msra.mxu0 0.0
  %4223 = vmatprep.mubr.f32.mxu0 0.0
  %4224 = vmatmul.mubr.f32.gmra.mrb[0].mxu0 %v4157
  %v4225 = vpop.f32.mrb[0].mxu0
  %v4226 = vadd.f32 %v4150, %v4225
  %v4227 = vpop.f32.mrb[0].mxu0
  %4228 = vdwg.mxu0
  %v4230 = vsel %vm1155, %v4077, 0
  %4232 = vmatprep.subr.mxu0 0.0
  %4233 = vmatpush1.msra.mxu0 %v108
  %4234 = vmatprep.subr.mxu0 0.0
  %4235 = vmatpush1.msra.mxu0 %v109
  %4236 = vmatprep.subr.mxu0 0.0
  %4237 = vmatpush1.msra.mxu0 0.0
  %4238 = vmatprep.subr.mxu0 0.0
  %4239 = vmatpush1.msra.mxu0 0.0
  %4240 = vmatprep.subr.mxu0 0.0
  %4241 = vmatpush1.msra.mxu0 0.0
  %4242 = vmatprep.subr.mxu0 0.0
  %4243 = vmatpush1.msra.mxu0 0.0
  %4244 = vmatprep.subr.mxu0 0.0
  %4245 = vmatpush1.msra.mxu0 0.0
  %4246 = vmatprep.subr.mxu0 0.0
  %4247 = vmatpush1.msra.mxu0 0.0
  %4248 = vmatprep.subr.mxu0 0.0
  %4249 = vmatpush1.msra.mxu0 0.0
  %4250 = vmatprep.subr.mxu0 0.0
  %4251 = vmatpush1.msra.mxu0 0.0
  %4252 = vmatprep.subr.mxu0 0.0
  %4253 = vmatpush1.msra.mxu0 0.0
  %4254 = vmatprep.subr.mxu0 0.0
  %4255 = vmatpush1.msra.mxu0 0.0
  %4256 = vmatprep.subr.mxu0 0.0
  %4257 = vmatpush1.msra.mxu0 0.0
  %4258 = vmatprep.subr.mxu0 0.0
  %4259 = vmatpush1.msra.mxu0 0.0
  %4260 = vmatprep.subr.mxu0 0.0
  %4261 = vmatpush1.msra.mxu0 0.0
  %4262 = vmatprep.subr.mxu0 0.0
  %4263 = vmatpush1.msra.mxu0 0.0
  %4264 = vmatprep.subr.mxu0 0.0
  %4265 = vmatpush1.msra.mxu0 0.0
  %4266 = vmatprep.subr.mxu0 0.0
  %4267 = vmatpush1.msra.mxu0 0.0
  %4268 = vmatprep.subr.mxu0 0.0
  %4269 = vmatpush1.msra.mxu0 0.0
  %4270 = vmatprep.subr.mxu0 0.0
  %4271 = vmatpush1.msra.mxu0 0.0
  %4272 = vmatprep.subr.mxu0 0.0
  %4273 = vmatpush1.msra.mxu0 0.0
  %4274 = vmatprep.subr.mxu0 0.0
  %4275 = vmatpush1.msra.mxu0 0.0
  %4276 = vmatprep.subr.mxu0 0.0
  %4277 = vmatpush1.msra.mxu0 0.0
  %4278 = vmatprep.subr.mxu0 0.0
  %4279 = vmatpush1.msra.mxu0 0.0
  %4280 = vmatprep.subr.mxu0 0.0
  %4281 = vmatpush1.msra.mxu0 0.0
  %4282 = vmatprep.subr.mxu0 0.0
  %4283 = vmatpush1.msra.mxu0 0.0
  %4284 = vmatprep.subr.mxu0 0.0
  %4285 = vmatpush1.msra.mxu0 0.0
  %4286 = vmatprep.subr.mxu0 0.0
  %4287 = vmatpush1.msra.mxu0 0.0
  %4288 = vmatprep.subr.mxu0 0.0
  %4289 = vmatpush1.msra.mxu0 0.0
  %4290 = vmatprep.subr.mxu0 0.0
  %4291 = vmatpush1.msra.mxu0 0.0
  %4292 = vmatprep.subr.mxu0 0.0
  %4293 = vmatpush1.msra.mxu0 0.0
  %4294 = vmatprep.subr.mxu0 0.0
  %4295 = vmatpush1.msra.mxu0 0.0
  %4296 = vmatprep.mubr.f32.mxu0 0.0
  %4297 = vmatmul.mubr.f32.gmra.mrb[0].mxu0 %v4230
  %v4298 = vpop.f32.mrb[0].mxu0
  %v4299 = vadd.f32 0.0, %v4298
  %v4300 = vpop.f32.mrb[0].mxu0
  %4301 = vdwg.mxu0
  %v4302 = vadd.f32 %v4226, %v4299
  %v4304 = vlaneseq
  %v4305 = vshrl.u32 %v4304, 7
  %v4306 = vsub.s32 0, %v4305
  %v4307 = vrot.slane %v110, %v4306
  %v4309 = vadd.f32 %v4302, %v4307
  %v4310 = vmax.f32 %v4309, 0.0
  %v4312 = vlaneseq
  %v4313 = vshrl.u32 %v4312, 7
  %v4314 = vsub.s32 0, %v4313
  %v4315 = vrot.slane %v119, %v4314
  %vm4317 = vcmask 523264
  %v4319 = vsel %vm4317, %v4310, 0
  %4321 = vmatprep.subr.mxu0 0.0
  %4322 = vmatpush1.msra.mxu0 %v111
  %4323 = vmatprep.subr.mxu0 0.0
  %4324 = vmatpush1.msra.mxu0 %v112
  %4325 = vmatprep.subr.mxu0 0.0
  %4326 = vmatpush1.msra.mxu0 %v113
  %4327 = vmatprep.subr.mxu0 0.0
  %4328 = vmatpush1.msra.mxu0 %v114
  %4329 = vmatprep.subr.mxu0 0.0
  %4330 = vmatpush1.msra.mxu0 %v115
  %4331 = vmatprep.subr.mxu0 0.0
  %4332 = vmatpush1.msra.mxu0 %v116
  %4333 = vmatprep.subr.mxu0 0.0
  %4334 = vmatpush1.msra.mxu0 %v117
  %4335 = vmatprep.subr.mxu0 0.0
  %4336 = vmatpush1.msra.mxu0 %v118
  %4337 = vmatprep.subr.mxu0 0.0
  %4338 = vmatpush1.msra.mxu0 0.0
  %4339 = vmatprep.subr.mxu0 0.0
  %4340 = vmatpush1.msra.mxu0 0.0
  %4341 = vmatprep.subr.mxu0 0.0
  %4342 = vmatpush1.msra.mxu0 0.0
  %4343 = vmatprep.subr.mxu0 0.0
  %4344 = vmatpush1.msra.mxu0 0.0
  %4345 = vmatprep.subr.mxu0 0.0
  %4346 = vmatpush1.msra.mxu0 0.0
  %4347 = vmatprep.subr.mxu0 0.0
  %4348 = vmatpush1.msra.mxu0 0.0
  %4349 = vmatprep.subr.mxu0 0.0
  %4350 = vmatpush1.msra.mxu0 0.0
  %4351 = vmatprep.subr.mxu0 0.0
  %4352 = vmatpush1.msra.mxu0 0.0
  %4353 = vmatprep.subr.mxu0 0.0
  %4354 = vmatpush1.msra.mxu0 0.0
  %4355 = vmatprep.subr.mxu0 0.0
  %4356 = vmatpush1.msra.mxu0 0.0
  %4357 = vmatprep.subr.mxu0 0.0
  %4358 = vmatpush1.msra.mxu0 0.0
  %4359 = vmatprep.subr.mxu0 0.0
  %4360 = vmatpush1.msra.mxu0 0.0
  %4361 = vmatprep.subr.mxu0 0.0
  %4362 = vmatpush1.msra.mxu0 0.0
  %4363 = vmatprep.subr.mxu0 0.0
  %4364 = vmatpush1.msra.mxu0 0.0
  %4365 = vmatprep.subr.mxu0 0.0
  %4366 = vmatpush1.msra.mxu0 0.0
  %4367 = vmatprep.subr.mxu0 0.0
  %4368 = vmatpush1.msra.mxu0 0.0
  %4369 = vmatprep.subr.mxu0 0.0
  %4370 = vmatpush1.msra.mxu0 0.0
  %4371 = vmatprep.subr.mxu0 0.0
  %4372 = vmatpush1.msra.mxu0 0.0
  %4373 = vmatprep.subr.mxu0 0.0
  %4374 = vmatpush1.msra.mxu0 0.0
  %4375 = vmatprep.subr.mxu0 0.0
  %4376 = vmatpush1.msra.mxu0 0.0
  %4377 = vmatprep.subr.mxu0 0.0
  %4378 = vmatpush1.msra.mxu0 0.0
  %4379 = vmatprep.subr.mxu0 0.0
  %4380 = vmatpush1.msra.mxu0 0.0
  %4381 = vmatprep.subr.mxu0 0.0
  %4382 = vmatpush1.msra.mxu0 0.0
  %4383 = vmatprep.subr.mxu0 0.0
  %4384 = vmatpush1.msra.mxu0 0.0
  %4385 = vmatprep.mubr.f32.mxu0 0.0
  %4386 = vmatmul.mubr.f32.gmra.mrb[0].mxu0 %v4319
  %v4387 = vpop.f32.mrb[0].mxu0
  %v4388 = vadd.f32 %v4315, %v4387
  %v4389 = vpop.f32.mrb[0].mxu0
  %4390 = vdwg.mxu0
  %vm4391 = vcmask 1024
  %4392 = vst.msk [vmem:[%s22] sm:$0x3] %vm4391, %v4388
  // Predicated region
  $region90: #{lstm_model_forward.1} parent=0 // pred_check
    _
  $region91: #{lstm_model_forward.1} parent=0 // pred_check_branch
    %4394 = sbr.rel (0) target = $region93
  $region92: #{lstm_model_forward.1} parent=0 // pred_region
    _
  $region93: #{lstm_model_forward.1} parent=0 // pred_fallthru
    _
  // Predicated region
  $region94: #{lstm_model_forward.1} parent=0 // pred_check
    _
  $region95: #{lstm_model_forward.1} parent=0 // pred_check_branch
    %4396 = sbr.rel (0) target = $region97
  $region96: #{lstm_model_forward.1} parent=0 // pred_region
    _
  $region97: #{lstm_model_forward.1} parent=0 // pred_fallthru
    _

</llo_original>
